<compile_context>
chip_gen: v7x
topology: tpu7x:2x2x1
jax: 0.10.0
libtpu: 0.0.40
codegen_flags: <defaults>
</compile_context>

<pallas_src>
import jax
import jax.numpy as jnp
from jax import lax
from jax.experimental import pallas as pl
from jax.experimental.pallas import tpu as pltpu


def _attn_kernel(x_ref, g_ref, wx_ref, wg_ref, wp_ref, bxg_ref, bp_ref, out_ref):
    """One (C, TILE_P) pixel tile of the attention gate.

    x_ref, g_ref : (C, TILE_P)  activations, channels on sublanes, pixels on lanes
    w*_ref       : (C, C)       1x1-conv weights, (out_ch, in_ch) -> y = W @ x
    bxg_ref      : (C, 1)       fused bias  bx + bg
    bp_ref       : (C, 1)       psi bias
    out_ref      : (C, TILE_P)
    """
    x = x_ref[...]
    g = g_ref[...]

    # Stage 1: relu(wx@x + wg@g + (bx + bg))   -- one fused bias add
    h = jnp.dot(wx_ref[...], x, preferred_element_type=jnp.float32,
                precision=lax.Precision.HIGHEST)
    h = h + jnp.dot(wg_ref[...], g, preferred_element_type=jnp.float32,
                    precision=lax.Precision.HIGHEST)
    h = jnp.maximum(h + bxg_ref[...], 0.0)                      # ReLU (VPU)

    # Stage 2: psi conv, then gate.  sigmoid(p) + 1 == 1.5 + 0.5*tanh(0.5*p):
    # a single EUP op, and the "+1" folds into the constant.
    p = jnp.dot(wp_ref[...], h, preferred_element_type=jnp.float32,
                precision=lax.Precision.HIGHEST) + bp_ref[...]
    gate = 1.5 + 0.5 * jnp.tanh(0.5 * p)

    out_ref[...] = (x.astype(jnp.float32) * gate).astype(out_ref.dtype)


def _vmem_capacity_bytes():
    """Per-core VMEM capacity; conservative v7x fallback if unavailable."""
    try:
        return int(pltpu.get_tpu_info().vmem_capacity_bytes)
    except Exception:
        return 64 * 1024 * 1024


def _pick_tile_p(P, c_pad, itemsize, *, act_budget_bytes, batch,
                 min_steps=4, max_tile=32768, target_tile_bytes=2 * 1024 * 1024):
    """Pick the lane-tile size.  P must be a multiple of 128.

    Targets ~1-2 MiB per activation-stream tile (scales with padded C),
    respects the double-buffered VMEM budget, and prefers tilings that leave
    at least `min_steps` total grid steps (megacore sharding + pipelining).
    """
    cap = min(
        max_tile,
        max(128, (target_tile_bytes // (c_pad * itemsize)) // 128 * 128),
        max(128, (act_budget_bytes // (3 * 2 * c_pad * itemsize)) // 128 * 128),
    )
    candidates = [t for t in range(128, P + 1, 128) if P % t == 0]
    good = [t for t in candidates if t <= cap and batch * (P // t) >= min_steps]
    if good:
        return max(good)
    ok = [t for t in candidates if t <= cap]
    if ok:
        return max(ok)
    return candidates[0]


def attn_forward(x, g, params, *, io_dtype=None):
    """x, g: (N, C, H, W) float32 (NCHW, like PyTorch).  Returns NCHW.

    io_dtype: optional (e.g. jnp.bfloat16) to halve activation HBM traffic;
    weights and accumulation stay f32, output is cast back to x.dtype.
    """
    N, C, H, W = x.shape
    assert g.shape == x.shape
    P = H * W
    orig_dtype = x.dtype

    # NCHW -> (N, C, H*W): free reshape, no transpose.
    x3 = x.reshape(N, C, P)
    g3 = g.reshape(N, C, P)
    if io_dtype is not None:
        x3 = x3.astype(io_dtype)
        g3 = g3.astype(io_dtype)
    act_dtype = x3.dtype
    itemsize = jnp.dtype(act_dtype).itemsize

    # Pad pixels to a multiple of 128 so every tile is a fixed lane-dense
    # block (padded pixels have x == 0 -> out == 0 there; sliced off after).
    P_pad = -(-P // 128) * 128
    if P_pad != P:
        x3 = jnp.pad(x3, ((0, 0), (0, 0), (0, P_pad - P)))
        g3 = jnp.pad(g3, ((0, 0), (0, 0), (0, P_pad - P)))

    # Generation-aware VMEM budgets (v7x: 64 MiB, v5e/v6e: 128 MiB per core).
    vmem_cap = _vmem_capacity_bytes()
    act_budget = max(8 << 20, int(0.25 * vmem_cap))      # ~16 MiB v7x, ~32 MiB v5e/v6e
    vmem_ceiling = min(48 << 20, int(0.75 * vmem_cap))   # leave compiler headroom

    # Physical padding of the VMEM tiles: sublanes to 8 (f32) / 16 (bf16),
    # weight lane dim to 128.
    sub = 8 * (4 // itemsize)
    c_pad = -(-C // sub) * sub
    c_lane = -(-C // 128) * 128

    tile_p = _pick_tile_p(P_pad, c_pad, itemsize,
                          act_budget_bytes=act_budget, batch=N)
    grid = (N, P_pad // tile_p)

    # Conv2d weight is (out_ch, in_ch, 1, 1); for y = W @ x keep (out, in).
    wx = params["wx_w"].reshape(C, C).astype(jnp.float32)
    wg = params["wg_w"].reshape(C, C).astype(jnp.float32)
    wp = params["psi_w"].reshape(C, C).astype(jnp.float32)
    bxg = (params["wx_b"] + params["wg_b"]).reshape(C, 1).astype(jnp.float32)
    bp = params["psi_b"].reshape(C, 1).astype(jnp.float32)

    act_spec = pl.BlockSpec((None, C, tile_p), lambda n, p: (n, 0, p))

    def const_spec(shape, single_buffer):
        # Weights/biases are grid-invariant; single-buffer them to reclaim
        # VMEM (matters at large C, e.g. ~3 MiB at C=512 on v7x).
        if single_buffer:
            return pl.BlockSpec(shape, lambda n, p: (0, 0),
                                pipeline_mode=pl.Buffered(1))
        return pl.BlockSpec(shape, lambda n, p: (0, 0))

    # VMEM accounting with padding: 3 double-buffered activation streams
    # (x, g, out) + single-buffered weights/biases, 2x headroom.
    act_bytes = 3 * 2 * c_pad * tile_p * itemsize
    wgt_bytes = (3 * c_pad * c_lane + 2 * c_pad * 128) * 4
    vmem_limit = int(min(vmem_ceiling, max(16 << 20, 2 * (act_bytes + wgt_bytes))))

    cost = pl.CostEstimate(
        flops=int(3 * 2 * N * P_pad * C * C),
        transcendentals=int(N * P_pad * C),               # one tanh per gate element
        bytes_accessed=int(3 * N * C * P_pad * itemsize + (3 * C * C + 2 * C) * 4),
    )

    def build(single_buffer_weights):
        return pl.pallas_call(
            _attn_kernel,
            out_shape=jax.ShapeDtypeStruct((N, C, P_pad), act_dtype),
            grid_spec=pltpu.PrefetchScalarGridSpec(
                num_scalar_prefetch=0,
                grid=grid,
                in_specs=[act_spec, act_spec,
                          const_spec((C, C), single_buffer_weights),
                          const_spec((C, C), single_buffer_weights),
                          const_spec((C, C), single_buffer_weights),
                          const_spec((C, 1), single_buffer_weights),
                          const_spec((C, 1), single_buffer_weights)],
                out_specs=act_spec,
            ),
            compiler_params=pltpu.CompilerParams(
                dimension_semantics=("parallel", "parallel"),
                vmem_limit_bytes=vmem_limit,
            ),
            cost_estimate=cost,
        )

    args = (x3, g3, wx, wg, wp, bxg, bp)
    try:
        out = build(True)(*args)
    except Exception:
        # TODO(synk): drop this fallback once pl.Buffered(1) single-buffering
        # of grid-invariant blocks is confirmed on all deployed jaxlib versions.
        out = build(False)(*args)

    out = out[:, :, :P].reshape(N, C, H, W)
    if io_dtype is not None:
        out = out.astype(orig_dtype)
    return out


def make_params(ch, key):
    """Deterministic parameter init (same shapes as the PyTorch module)."""
    ks = jax.random.split(key, 6)
    scale = 1.0 / jnp.sqrt(ch)
    return {
        "wx_w":  jax.random.uniform(ks[0], (ch, ch, 1, 1), jnp.float32, -scale, scale),
        "wx_b":  jax.random.uniform(ks[1], (ch,),          jnp.float32, -scale, scale),
        "wg_w":  jax.random.uniform(ks[2], (ch, ch, 1, 1), jnp.float32, -scale, scale),
        "wg_b":  jax.random.uniform(ks[3], (ch,),          jnp.float32, -scale, scale),
        "psi_w": jax.random.uniform(ks[4], (ch, ch, 1, 1), jnp.float32, -scale, scale),
        "psi_b": jax.random.uniform(ks[5], (ch,),          jnp.float32, -scale, scale),
    }


def attn_reference(x, g, params):
    """Pure-JAX reference of the PyTorch forward for a sanity check (NCHW)."""
    C = x.shape[1]
    wx = params["wx_w"].reshape(C, C)
    wg = params["wg_w"].reshape(C, C)
    wp = params["psi_w"].reshape(C, C)
    a = jnp.einsum("oc,nchw->nohw", wx, x) + params["wx_b"][None, :, None, None]
    b = jnp.einsum("oc,nchw->nohw", wg, g) + params["wg_b"][None, :, None, None]
    h = jax.nn.relu(a + b)
    p = jnp.einsum("oc,nchw->nohw", wp, h) + params["psi_b"][None, :, None, None]
    s = jax.nn.sigmoid(p)
    return x * (s + 1.0)


if __name__ == "__main__":
    key = jax.random.PRNGKey(0)
    k_x, k_g, k_p = jax.random.split(key, 3)

    N, C, H, W = 2, 4, 16, 16
    x = jax.random.normal(k_x, (N, C, H, W), jnp.float32)
    g = jax.random.normal(k_g, (N, C, H, W), jnp.float32)
    params = make_params(C, k_p)

    out = attn_forward(x, g, params)
    out = jax.block_until_ready(out)

    ref = attn_reference(x, g, params)
    assert out.shape == (N, C, H, W)
    assert jnp.allclose(out, ref, atol=1e-5, rtol=1e-5), "mismatch vs reference"

    print("KERNEL_OK")
</pallas_src>

<mosaic_0001>
module attributes {stable_mosaic.version = 11 : i64} {
  func.func @_attn_kernel(%arg0: i32, %arg1: i32, %arg2: memref<1x4x128xf32, #tpu.memory_space<vmem>>, %arg3: memref<1x4x128xf32, #tpu.memory_space<vmem>>, %arg4: memref<4x4xf32, #tpu.memory_space<vmem>>, %arg5: memref<4x4xf32, #tpu.memory_space<vmem>>, %arg6: memref<4x4xf32, #tpu.memory_space<vmem>>, %arg7: memref<4x1xf32, #tpu.memory_space<vmem>>, %arg8: memref<4x1xf32, #tpu.memory_space<vmem>>, %arg9: memref<1x4x128xf32, #tpu.memory_space<vmem>>) attributes {dimension_semantics = [#tpu.dimension_semantics<parallel>, #tpu.dimension_semantics<parallel>], iteration_bounds = array<i64: 2, 2>, scalar_prefetch = 0 : i64, scratch_operands = 0 : i64, tpu.core_type = #tpu.core_type<tc>, window_params = [{transform_indices = @transform_0, window_bounds = array<i64: 1, 4, 128>}, {transform_indices = @transform_1, window_bounds = array<i64: 1, 4, 128>}, {pipeline_mode = #tpu.pipeline_mode<synchronous>, transform_indices = @transform_2, window_bounds = array<i64: 4, 4>}, {pipeline_mode = #tpu.pipeline_mode<synchronous>, transform_indices = @transform_3, window_bounds = array<i64: 4, 4>}, {pipeline_mode = #tpu.pipeline_mode<synchronous>, transform_indices = @transform_4, window_bounds = array<i64: 4, 4>}, {pipeline_mode = #tpu.pipeline_mode<synchronous>, transform_indices = @transform_5, window_bounds = array<i64: 4, 1>}, {pipeline_mode = #tpu.pipeline_mode<synchronous>, transform_indices = @transform_6, window_bounds = array<i64: 4, 1>}, {transform_indices = @transform_7, window_bounds = array<i64: 1, 4, 128>}]} {
    %c0 = arith.constant 0 : index
    %c0_0 = arith.constant 0 : index
    %c0_1 = arith.constant 0 : index
    %0 = vector.load %arg2[%c0, %c0_0, %c0_1] : memref<1x4x128xf32, #tpu.memory_space<vmem>>, vector<1x4x128xf32>
    %1 = vector.shape_cast %0 : vector<1x4x128xf32> to vector<4x128xf32>
    %c0_2 = arith.constant 0 : index
    %c0_3 = arith.constant 0 : index
    %c0_4 = arith.constant 0 : index
    %2 = vector.load %arg3[%c0_2, %c0_3, %c0_4] : memref<1x4x128xf32, #tpu.memory_space<vmem>>, vector<1x4x128xf32>
    %3 = vector.shape_cast %2 : vector<1x4x128xf32> to vector<4x128xf32>
    %c0_5 = arith.constant 0 : index
    %c0_6 = arith.constant 0 : index
    %4 = vector.load %arg4[%c0_5, %c0_6] : memref<4x4xf32, #tpu.memory_space<vmem>>, vector<4x4xf32>
    %cst = arith.constant dense<0.000000e+00> : vector<4x128xf32>
    %5 = tpu.matmul %4, %1, %cst {dimension_numbers = #tpu.dot_dimension_numbers<[1], [0], [0], [1], [0, 0, 1, 1], [], []>, precision = #tpu.contract_precision<fp32>} : vector<4x4xf32>, vector<4x128xf32>, vector<4x128xf32> -> vector<4x128xf32>
    %c0_7 = arith.constant 0 : index
    %c0_8 = arith.constant 0 : index
    %6 = vector.load %arg5[%c0_7, %c0_8] : memref<4x4xf32, #tpu.memory_space<vmem>>, vector<4x4xf32>
    %cst_9 = arith.constant dense<0.000000e+00> : vector<4x128xf32>
    %7 = tpu.matmul %6, %3, %cst_9 {dimension_numbers = #tpu.dot_dimension_numbers<[1], [0], [0], [1], [0, 0, 1, 1], [], []>, precision = #tpu.contract_precision<fp32>} : vector<4x4xf32>, vector<4x128xf32>, vector<4x128xf32> -> vector<4x128xf32>
    %8 = arith.addf %5, %7 : vector<4x128xf32>
    %c0_10 = arith.constant 0 : index
    %c0_11 = arith.constant 0 : index
    %9 = vector.load %arg7[%c0_10, %c0_11] : memref<4x1xf32, #tpu.memory_space<vmem>>, vector<4x1xf32>
    %10 = vector.broadcast %9 : vector<4x1xf32> to vector<4x128xf32>
    %11 = arith.addf %8, %10 : vector<4x128xf32>
    %cst_12 = arith.constant 0.000000e+00 : f32
    %12 = vector.broadcast %cst_12 : f32 to vector<4x128xf32>
    %13 = arith.maximumf %11, %12 : vector<4x128xf32>
    %c0_13 = arith.constant 0 : index
    %c0_14 = arith.constant 0 : index
    %14 = vector.load %arg6[%c0_13, %c0_14] : memref<4x4xf32, #tpu.memory_space<vmem>>, vector<4x4xf32>
    %cst_15 = arith.constant dense<0.000000e+00> : vector<4x128xf32>
    %15 = tpu.matmul %14, %13, %cst_15 {dimension_numbers = #tpu.dot_dimension_numbers<[1], [0], [0], [1], [0, 0, 1, 1], [], []>, precision = #tpu.contract_precision<fp32>} : vector<4x4xf32>, vector<4x128xf32>, vector<4x128xf32> -> vector<4x128xf32>
    %c0_16 = arith.constant 0 : index
    %c0_17 = arith.constant 0 : index
    %16 = vector.load %arg8[%c0_16, %c0_17] : memref<4x1xf32, #tpu.memory_space<vmem>>, vector<4x1xf32>
    %17 = vector.broadcast %16 : vector<4x1xf32> to vector<4x128xf32>
    %18 = arith.addf %15, %17 : vector<4x128xf32>
    %cst_18 = arith.constant 5.000000e-01 : f32
    %19 = vector.broadcast %cst_18 : f32 to vector<4x128xf32>
    %20 = arith.mulf %19, %18 : vector<4x128xf32>
    %21 = math.tanh %20 : vector<4x128xf32>
    %cst_19 = arith.constant 5.000000e-01 : f32
    %22 = vector.broadcast %cst_19 : f32 to vector<4x128xf32>
    %23 = arith.mulf %22, %21 : vector<4x128xf32>
    %cst_20 = arith.constant 1.500000e+00 : f32
    %24 = vector.broadcast %cst_20 : f32 to vector<4x128xf32>
    %25 = arith.addf %24, %23 : vector<4x128xf32>
    %26 = arith.mulf %1, %25 : vector<4x128xf32>
    %c0_21 = arith.constant 0 : index
    %c0_22 = arith.constant 0 : index
    %c0_23 = arith.constant 0 : index
    %27 = vector.load %arg9[%c0_21, %c0_22, %c0_23] : memref<1x4x128xf32, #tpu.memory_space<vmem>>, vector<1x4x128xf32>
    %28 = vector.shape_cast %27 : vector<1x4x128xf32> to vector<4x128xf32>
    %29 = vector.shape_cast %26 : vector<4x128xf32> to vector<1x4x128xf32>
    tpu.vector_store %arg9[%c0_21, %c0_22, %c0_23], %29 {strides = array<i32>} : memref<1x4x128xf32, #tpu.memory_space<vmem>>, vector<1x4x128xf32>,
    return
  }
  func.func @transform_0(%arg0: i32, %arg1: i32) -> (i32, i32, i32) {
    %c0_i32 = arith.constant 0 : i32
    %c0_i32_0 = arith.constant 0 : i32
    return %arg0, %c0_i32, %arg1 : i32, i32, i32
  }
  func.func @transform_1(%arg0: i32, %arg1: i32) -> (i32, i32, i32) {
    %c0_i32 = arith.constant 0 : i32
    %c0_i32_0 = arith.constant 0 : i32
    return %arg0, %c0_i32, %arg1 : i32, i32, i32
  }
  func.func @transform_2(%arg0: i32, %arg1: i32) -> (i32, i32) {
    %c0_i32 = arith.constant 0 : i32
    %c0_i32_0 = arith.constant 0 : i32
    %c0_i32_1 = arith.constant 0 : i32
    return %c0_i32, %c0_i32_0 : i32, i32
  }
  func.func @transform_3(%arg0: i32, %arg1: i32) -> (i32, i32) {
    %c0_i32 = arith.constant 0 : i32
    %c0_i32_0 = arith.constant 0 : i32
    %c0_i32_1 = arith.constant 0 : i32
    return %c0_i32, %c0_i32_0 : i32, i32
  }
  func.func @transform_4(%arg0: i32, %arg1: i32) -> (i32, i32) {
    %c0_i32 = arith.constant 0 : i32
    %c0_i32_0 = arith.constant 0 : i32
    %c0_i32_1 = arith.constant 0 : i32
    return %c0_i32, %c0_i32_0 : i32, i32
  }
  func.func @transform_5(%arg0: i32, %arg1: i32) -> (i32, i32) {
    %c0_i32 = arith.constant 0 : i32
    %c0_i32_0 = arith.constant 0 : i32
    %c0_i32_1 = arith.constant 0 : i32
    return %c0_i32, %c0_i32_0 : i32, i32
  }
  func.func @transform_6(%arg0: i32, %arg1: i32) -> (i32, i32) {
    %c0_i32 = arith.constant 0 : i32
    %c0_i32_0 = arith.constant 0 : i32
    %c0_i32_1 = arith.constant 0 : i32
    return %c0_i32, %c0_i32_0 : i32, i32
  }
  func.func @transform_7(%arg0: i32, %arg1: i32) -> (i32, i32, i32) {
    %c0_i32 = arith.constant 0 : i32
    %c0_i32_0 = arith.constant 0 : i32
    return %arg0, %c0_i32, %arg1 : i32, i32, i32
  }
}

module attributes {stable_mosaic.version = 11 : i64} {
  func.func @_attn_kernel(%arg0: i32, %arg1: i32, %arg2: memref<1x4x128xf32, #tpu.memory_space<vmem>>, %arg3: memref<1x4x128xf32, #tpu.memory_space<vmem>>, %arg4: memref<4x4xf32, #tpu.memory_space<vmem>>, %arg5: memref<4x4xf32, #tpu.memory_space<vmem>>, %arg6: memref<4x4xf32, #tpu.memory_space<vmem>>, %arg7: memref<4x1xf32, #tpu.memory_space<vmem>>, %arg8: memref<4x1xf32, #tpu.memory_space<vmem>>, %arg9: memref<1x4x128xf32, #tpu.memory_space<vmem>>) attributes {dimension_semantics = [#tpu.dimension_semantics<parallel>, #tpu.dimension_semantics<parallel>], iteration_bounds = array<i64: 2, 2>, scalar_prefetch = 0 : i64, scratch_operands = 0 : i64, tpu.core_type = #tpu.core_type<tc>, window_params = [{transform_indices = @transform_0, window_bounds = array<i64: 1, 4, 128>}, {transform_indices = @transform_1, window_bounds = array<i64: 1, 4, 128>}, {pipeline_mode = #tpu.pipeline_mode<synchronous>, transform_indices = @transform_2, window_bounds = array<i64: 4, 4>}, {pipeline_mode = #tpu.pipeline_mode<synchronous>, transform_indices = @transform_3, window_bounds = array<i64: 4, 4>}, {pipeline_mode = #tpu.pipeline_mode<synchronous>, transform_indices = @transform_4, window_bounds = array<i64: 4, 4>}, {pipeline_mode = #tpu.pipeline_mode<synchronous>, transform_indices = @transform_5, window_bounds = array<i64: 4, 1>}, {pipeline_mode = #tpu.pipeline_mode<synchronous>, transform_indices = @transform_6, window_bounds = array<i64: 4, 1>}, {transform_indices = @transform_7, window_bounds = array<i64: 1, 4, 128>}]} {
    %c0 = arith.constant 0 : index
    %c0_0 = arith.constant 0 : index
    %c0_1 = arith.constant 0 : index
    %0 = vector.load %arg2[%c0, %c0_0, %c0_1] : memref<1x4x128xf32, #tpu.memory_space<vmem>>, vector<1x4x128xf32>
    %1 = vector.shape_cast %0 : vector<1x4x128xf32> to vector<4x128xf32>
    %c0_2 = arith.constant 0 : index
    %c0_3 = arith.constant 0 : index
    %c0_4 = arith.constant 0 : index
    %2 = vector.load %arg3[%c0_2, %c0_3, %c0_4] : memref<1x4x128xf32, #tpu.memory_space<vmem>>, vector<1x4x128xf32>
    %3 = vector.shape_cast %2 : vector<1x4x128xf32> to vector<4x128xf32>
    %c0_5 = arith.constant 0 : index
    %c0_6 = arith.constant 0 : index
    %4 = vector.load %arg4[%c0_5, %c0_6] : memref<4x4xf32, #tpu.memory_space<vmem>>, vector<4x4xf32>
    %cst = arith.constant dense<0.000000e+00> : vector<4x128xf32>
    %5 = tpu.matmul %4, %1, %cst {dimension_numbers = #tpu.dot_dimension_numbers<[1], [0], [0], [1], [0, 0, 1, 1], [], []>, precision = #tpu.contract_precision<fp32>} : vector<4x4xf32>, vector<4x128xf32>, vector<4x128xf32> -> vector<4x128xf32>
    %c0_7 = arith.constant 0 : index
    %c0_8 = arith.constant 0 : index
    %6 = vector.load %arg5[%c0_7, %c0_8] : memref<4x4xf32, #tpu.memory_space<vmem>>, vector<4x4xf32>
    %cst_9 = arith.constant dense<0.000000e+00> : vector<4x128xf32>
    %7 = tpu.matmul %6, %3, %cst_9 {dimension_numbers = #tpu.dot_dimension_numbers<[1], [0], [0], [1], [0, 0, 1, 1], [], []>, precision = #tpu.contract_precision<fp32>} : vector<4x4xf32>, vector<4x128xf32>, vector<4x128xf32> -> vector<4x128xf32>
    %8 = arith.addf %5, %7 : vector<4x128xf32>
    %c0_10 = arith.constant 0 : index
    %c0_11 = arith.constant 0 : index
    %9 = vector.load %arg7[%c0_10, %c0_11] : memref<4x1xf32, #tpu.memory_space<vmem>>, vector<4x1xf32>
    %10 = vector.broadcast %9 : vector<4x1xf32> to vector<4x128xf32>
    %11 = arith.addf %8, %10 : vector<4x128xf32>
    %cst_12 = arith.constant 0.000000e+00 : f32
    %12 = vector.broadcast %cst_12 : f32 to vector<4x128xf32>
    %13 = arith.maximumf %11, %12 : vector<4x128xf32>
    %c0_13 = arith.constant 0 : index
    %c0_14 = arith.constant 0 : index
    %14 = vector.load %arg6[%c0_13, %c0_14] : memref<4x4xf32, #tpu.memory_space<vmem>>, vector<4x4xf32>
    %cst_15 = arith.constant dense<0.000000e+00> : vector<4x128xf32>
    %15 = tpu.matmul %14, %13, %cst_15 {dimension_numbers = #tpu.dot_dimension_numbers<[1], [0], [0], [1], [0, 0, 1, 1], [], []>, precision = #tpu.contract_precision<fp32>} : vector<4x4xf32>, vector<4x128xf32>, vector<4x128xf32> -> vector<4x128xf32>
    %c0_16 = arith.constant 0 : index
    %c0_17 = arith.constant 0 : index
    %16 = vector.load %arg8[%c0_16, %c0_17] : memref<4x1xf32, #tpu.memory_space<vmem>>, vector<4x1xf32>
    %17 = vector.broadcast %16 : vector<4x1xf32> to vector<4x128xf32>
    %18 = arith.addf %15, %17 : vector<4x128xf32>
    %cst_18 = arith.constant 5.000000e-01 : f32
    %19 = vector.broadcast %cst_18 : f32 to vector<4x128xf32>
    %20 = arith.mulf %19, %18 : vector<4x128xf32>
    %21 = math.tanh %20 : vector<4x128xf32>
    %cst_19 = arith.constant 5.000000e-01 : f32
    %22 = vector.broadcast %cst_19 : f32 to vector<4x128xf32>
    %23 = arith.mulf %22, %21 : vector<4x128xf32>
    %cst_20 = arith.constant 1.500000e+00 : f32
    %24 = vector.broadcast %cst_20 : f32 to vector<4x128xf32>
    %25 = arith.addf %24, %23 : vector<4x128xf32>
    %26 = arith.mulf %1, %25 : vector<4x128xf32>
    %c0_21 = arith.constant 0 : index
    %c0_22 = arith.constant 0 : index
    %c0_23 = arith.constant 0 : index
    %27 = vector.load %arg9[%c0_21, %c0_22, %c0_23] : memref<1x4x128xf32, #tpu.memory_space<vmem>>, vector<1x4x128xf32>
    %28 = vector.shape_cast %27 : vector<1x4x128xf32> to vector<4x128xf32>
    %29 = vector.shape_cast %26 : vector<4x128xf32> to vector<1x4x128xf32>
    tpu.vector_store %arg9[%c0_21, %c0_22, %c0_23], %29 {strides = array<i32>} : memref<1x4x128xf32, #tpu.memory_space<vmem>>, vector<1x4x128xf32>,
    return
  }
  func.func @transform_0(%arg0: i32, %arg1: i32) -> (i32, i32, i32) {
    %c0_i32 = arith.constant 0 : i32
    %c0_i32_0 = arith.constant 0 : i32
    return %arg0, %c0_i32, %arg1 : i32, i32, i32
  }
  func.func @transform_1(%arg0: i32, %arg1: i32) -> (i32, i32, i32) {
    %c0_i32 = arith.constant 0 : i32
    %c0_i32_0 = arith.constant 0 : i32
    return %arg0, %c0_i32, %arg1 : i32, i32, i32
  }
  func.func @transform_2(%arg0: i32, %arg1: i32) -> (i32, i32) {
    %c0_i32 = arith.constant 0 : i32
    %c0_i32_0 = arith.constant 0 : i32
    %c0_i32_1 = arith.constant 0 : i32
    return %c0_i32, %c0_i32_0 : i32, i32
  }
  func.func @transform_3(%arg0: i32, %arg1: i32) -> (i32, i32) {
    %c0_i32 = arith.constant 0 : i32
    %c0_i32_0 = arith.constant 0 : i32
    %c0_i32_1 = arith.constant 0 : i32
    return %c0_i32, %c0_i32_0 : i32, i32
  }
  func.func @transform_4(%arg0: i32, %arg1: i32) -> (i32, i32) {
    %c0_i32 = arith.constant 0 : i32
    %c0_i32_0 = arith.constant 0 : i32
    %c0_i32_1 = arith.constant 0 : i32
    return %c0_i32, %c0_i32_0 : i32, i32
  }
  func.func @transform_5(%arg0: i32, %arg1: i32) -> (i32, i32) {
    %c0_i32 = arith.constant 0 : i32
    %c0_i32_0 = arith.constant 0 : i32
    %c0_i32_1 = arith.constant 0 : i32
    return %c0_i32, %c0_i32_0 : i32, i32
  }
  func.func @transform_6(%arg0: i32, %arg1: i32) -> (i32, i32) {
    %c0_i32 = arith.constant 0 : i32
    %c0_i32_0 = arith.constant 0 : i32
    %c0_i32_1 = arith.constant 0 : i32
    return %c0_i32, %c0_i32_0 : i32, i32
  }
  func.func @transform_7(%arg0: i32, %arg1: i32) -> (i32, i32, i32) {
    %c0_i32 = arith.constant 0 : i32
    %c0_i32_0 = arith.constant 0 : i32
    return %arg0, %c0_i32, %arg1 : i32, i32, i32
  }
}

</mosaic_0001>

<llo_original>
// kernel: tpu_custom_call.1
$region0: #{tpu_custom_call.1}
  #allocation0 [shape = 'u32[]', space=smem, size = 0x4, offset = 0x4, fixed_abs, tag = 'smem constant byte address 0x4 - core index']
  #allocation1 [shape = 'u32[144,128]{1,0:T(1,128)}', space=vmem, size = 0x12000, scoped, tag = 'internal scratch']
  %s0 = inlined_call_operand.hbm [shape: f32[2,4,256], index: 0, kind: input, shape index: {}]
  %s1 = inlined_call_operand.hbm [shape: f32[2,4,256], index: 1, kind: input, shape index: {}]
  %s2 = inlined_call_operand.vmem [shape: f32[4,4], index: 2, kind: input, shape index: {}]
  %s3 = inlined_call_operand.vmem [shape: f32[4,4], index: 3, kind: input, shape index: {}]
  %s4 = inlined_call_operand.vmem [shape: f32[4,4], index: 4, kind: input, shape index: {}]
  %s5 = inlined_call_operand.vmem [shape: f32[4,1], index: 5, kind: input, shape index: {}]
  %s6 = inlined_call_operand.vmem [shape: f32[4,1], index: 6, kind: input, shape index: {}]
  %s7 = inlined_call_operand.hbm [shape: f32[2,4,256], index: 7, kind: output, shape index: {}]
  %s8 = sld [smem:[#allocation0]]
  $region69: #{tpu_custom_call.1} parent=0
    _
  %s10 = ssub.s32 1, %s8
  %s11 = scalar_select 0, %s10, %s8
  $region1: #{tpu_custom_call.1} parent=0
    #allocation2 [shape = 'u8[4096]{0}', space=vmem, size = 0x1000, scoped, tag = 'input window, operand 0']
    #allocation3 [shape = 's32[2]{0}', space=sflag, size = 0x8, scoped, tag = 'scoped memory for tpu_custom_call.1']
    #allocation4 [shape = 's32[2]{0}', space=sflag, size = 0x8, scoped, tag = 'scoped memory for tpu_custom_call.1']
    #allocation5 [shape = 'u8[4096]{0}', space=vmem, size = 0x1000, scoped, tag = 'input window, operand 1']
    #allocation6 [shape = 's32[2]{0}', space=sflag, size = 0x8, scoped, tag = 'scoped memory for tpu_custom_call.1']
    #allocation7 [shape = 'u8[4096]{0}', space=vmem, size = 0x1000, scoped, tag = 'output window, operand 0']
    %12 = vsyncpa [#allocation3], 0
    %s13 = scalar_lea.sflag [#allocation3], 1
    %14 = vsyncpa %s13, 0
    %15 = vsyncpa [#allocation6], 0
    %s16 = scalar_lea.sflag [#allocation6], 1
    %17 = vsyncpa %s16, 0
    %18 = vsyncpa [#allocation4], 0
    %s19 = scalar_lea.sflag [#allocation4], 1
    %20 = vsyncpa %s19, 0
    loop: start=0, step=1, limit=6
    $region2: #{tpu_custom_call.1} parent=1 // loop_pre_header
      _
    $region3: #{tpu_custom_call.1} parent=1 // loop_header
      %s22 = sphi 0, %s26
      %p23 = scmp.ge.s32.totalorder %s22, 6
      %s29 = sphi 0, %s41
      %s30 = sphi 0, %s37
      %s31 = sphi 0, %s29
      %s32 = sphi 0, %s30
      %s33 = sphi 0, %s31
      %s34 = sphi 0, %s32
      %s46 = sphi 0, %s48
      %s49 = sphi 0, %s46
      %s50 = sphi 0, %s49
      %s66 = sphi 0, %s50
      %s74 = sphi 0, %s76
      %s77 = sphi 0, %s74
      %s78 = sphi 0, %s77
      %s94 = sphi 0, %s78
      %s98 = sphi 0, %s98
      %s100 = sphi 0, %s98
      %s101 = sphi 0, %s100
      %s115 = sphi 0, %s101
      %s119 = sphi 0, %s119
      %s121 = sphi 0, %s119
      %s122 = sphi 0, %s121
      %s136 = sphi 0, %s122
      %s140 = sphi 0, %s140
      %s142 = sphi 0, %s140
      %s143 = sphi 0, %s142
      %s157 = sphi 0, %s143
      %s161 = sphi 0, %s161
      %s163 = sphi 0, %s161
      %s164 = sphi 0, %s163
      %s178 = sphi 0, %s164
      %s182 = sphi 0, %s182
      %s184 = sphi 0, %s182
      %s185 = sphi 0, %s184
      %s199 = sphi 0, %s185
      %s207 = sphi 0, %s209
      %s210 = sphi 0, %s207
      %s211 = sphi 0, %s210
      %s227 = sphi 0, %s211
    $region4: #{tpu_custom_call.1} parent=1 // loop_header_branch
      %25 = sbr.rel (%p23) target = $region8
    $region5: #{tpu_custom_call.1} parent=1 // loop_body
      %s27 = ssub.s32 %s22, 1
      %s28 = ssub.s32 %s22, 2
      %s35 = sadd.s32 1, %s30
      %p36 = scmp.ge.s32.totalorder %s35, 2
      %s37 = scalar_select %p36, 0, %s35
      %s38 = sadd.s32 1, %s29
      %s39 = scalar_select %p36, %s38, %s29
      %p40 = scmp.ge.s32.totalorder %s39, 2
      %s41 = scalar_select %p40, 0, %s39
      %s42 = ssub.s32 %s29, %s41
      %s43 = ssub.s32 %s30, %s37
      %s44 = sor.u32 %s42, %s43
      %p45 = scmp.eq.s32.totalorder %s44, 0
      %s47 = sadd.s32 %s46, 1
      %s48 = scalar_select %p45, %s46, %s47
      %p51 = pneg %p45
      %p52 = scmp.eq.s32.totalorder %s22, 3
      %p53 = por %p51, %p52
      %p54 = scmp.ne.s32.totalorder %s46, %s49
      %p55 = scmp.eq.s32.totalorder %s22, 0
      %p56 = por %p54, %p55
      %p57 = scmp.ne.s32.totalorder %s46, %s49
      %p58 = scmp.eq.s32.totalorder %s27, 3
      %p59 = por %p57, %p58
      %p60 = scmp.ne.s32.totalorder %s49, %s50
      %p61 = scmp.eq.s32.totalorder %s27, 0
      %p62 = por %p60, %p61
      %p63 = scmp.ne.s32.totalorder %s49, %s50
      %p64 = scmp.eq.s32.totalorder %s28, 3
      %p65 = por %p63, %p64
      %p67 = scmp.ne.s32.totalorder %s50, %s66
      %p68 = scmp.eq.s32.totalorder %s28, 0
      %p69 = por %p67, %p68
      %s70 = ssub.s32 %s29, %s41
      %s71 = ssub.s32 %s30, %s37
      %s72 = sor.u32 %s70, %s71
      %p73 = scmp.eq.s32.totalorder %s72, 0
      %s75 = sadd.s32 %s74, 1
      %s76 = scalar_select %p73, %s74, %s75
      %p79 = pneg %p73
      %p80 = scmp.eq.s32.totalorder %s22, 3
      %p81 = por %p79, %p80
      %p82 = scmp.ne.s32.totalorder %s74, %s77
      %p83 = scmp.eq.s32.totalorder %s22, 0
      %p84 = por %p82, %p83
      %p85 = scmp.ne.s32.totalorder %s74, %s77
      %p86 = scmp.eq.s32.totalorder %s27, 3
      %p87 = por %p85, %p86
      %p88 = scmp.ne.s32.totalorder %s77, %s78
      %p89 = scmp.eq.s32.totalorder %s27, 0
      %p90 = por %p88, %p89
      %p91 = scmp.ne.s32.totalorder %s77, %s78
      %p92 = scmp.eq.s32.totalorder %s28, 3
      %p93 = por %p91, %p92
      %p95 = scmp.ne.s32.totalorder %s78, %s94
      %p96 = scmp.eq.s32.totalorder %s28, 0
      %p97 = por %p95, %p96
      %s99 = sadd.s32 %s98, 1
      %p102 = scmp.eq.s32.totalorder %s22, 3
      %p103 = scmp.ne.s32.totalorder %s98, %s100
      %p104 = scmp.eq.s32.totalorder %s22, 0
      %p105 = por %p103, %p104
      %p106 = scmp.ne.s32.totalorder %s98, %s100
      %p107 = scmp.eq.s32.totalorder %s27, 3
      %p108 = por %p106, %p107
      %p109 = scmp.ne.s32.totalorder %s100, %s101
      %p110 = scmp.eq.s32.totalorder %s27, 0
      %p111 = por %p109, %p110
      %p112 = scmp.ne.s32.totalorder %s100, %s101
      %p113 = scmp.eq.s32.totalorder %s28, 3
      %p114 = por %p112, %p113
      %p116 = scmp.ne.s32.totalorder %s101, %s115
      %p117 = scmp.eq.s32.totalorder %s28, 0
      %p118 = por %p116, %p117
      %s120 = sadd.s32 %s119, 1
      %p123 = scmp.eq.s32.totalorder %s22, 3
      %p124 = scmp.ne.s32.totalorder %s119, %s121
      %p125 = scmp.eq.s32.totalorder %s22, 0
      %p126 = por %p124, %p125
      %p127 = scmp.ne.s32.totalorder %s119, %s121
      %p128 = scmp.eq.s32.totalorder %s27, 3
      %p129 = por %p127, %p128
      %p130 = scmp.ne.s32.totalorder %s121, %s122
      %p131 = scmp.eq.s32.totalorder %s27, 0
      %p132 = por %p130, %p131
      %p133 = scmp.ne.s32.totalorder %s121, %s122
      %p134 = scmp.eq.s32.totalorder %s28, 3
      %p135 = por %p133, %p134
      %p137 = scmp.ne.s32.totalorder %s122, %s136
      %p138 = scmp.eq.s32.totalorder %s28, 0
      %p139 = por %p137, %p138
      %s141 = sadd.s32 %s140, 1
      %p144 = scmp.eq.s32.totalorder %s22, 3
      %p145 = scmp.ne.s32.totalorder %s140, %s142
      %p146 = scmp.eq.s32.totalorder %s22, 0
      %p147 = por %p145, %p146
      %p148 = scmp.ne.s32.totalorder %s140, %s142
      %p149 = scmp.eq.s32.totalorder %s27, 3
      %p150 = por %p148, %p149
      %p151 = scmp.ne.s32.totalorder %s142, %s143
      %p152 = scmp.eq.s32.totalorder %s27, 0
      %p153 = por %p151, %p152
      %p154 = scmp.ne.s32.totalorder %s142, %s143
      %p155 = scmp.eq.s32.totalorder %s28, 3
      %p156 = por %p154, %p155
      %p158 = scmp.ne.s32.totalorder %s143, %s157
      %p159 = scmp.eq.s32.totalorder %s28, 0
      %p160 = por %p158, %p159
      %s162 = sadd.s32 %s161, 1
      %p165 = scmp.eq.s32.totalorder %s22, 3
      %p166 = scmp.ne.s32.totalorder %s161, %s163
      %p167 = scmp.eq.s32.totalorder %s22, 0
      %p168 = por %p166, %p167
      %p169 = scmp.ne.s32.totalorder %s161, %s163
      %p170 = scmp.eq.s32.totalorder %s27, 3
      %p171 = por %p169, %p170
      %p172 = scmp.ne.s32.totalorder %s163, %s164
      %p173 = scmp.eq.s32.totalorder %s27, 0
      %p174 = por %p172, %p173
      %p175 = scmp.ne.s32.totalorder %s163, %s164
      %p176 = scmp.eq.s32.totalorder %s28, 3
      %p177 = por %p175, %p176
      %p179 = scmp.ne.s32.totalorder %s164, %s178
      %p180 = scmp.eq.s32.totalorder %s28, 0
      %p181 = por %p179, %p180
      %s183 = sadd.s32 %s182, 1
      %p186 = scmp.eq.s32.totalorder %s22, 3
      %p187 = scmp.ne.s32.totalorder %s182, %s184
      %p188 = scmp.eq.s32.totalorder %s22, 0
      %p189 = por %p187, %p188
      %p190 = scmp.ne.s32.totalorder %s182, %s184
      %p191 = scmp.eq.s32.totalorder %s27, 3
      %p192 = por %p190, %p191
      %p193 = scmp.ne.s32.totalorder %s184, %s185
      %p194 = scmp.eq.s32.totalorder %s27, 0
      %p195 = por %p193, %p194
      %p196 = scmp.ne.s32.totalorder %s184, %s185
      %p197 = scmp.eq.s32.totalorder %s28, 3
      %p198 = por %p196, %p197
      %p200 = scmp.ne.s32.totalorder %s185, %s199
      %p201 = scmp.eq.s32.totalorder %s28, 0
      %p202 = por %p200, %p201
      %s203 = ssub.s32 %s29, %s41
      %s204 = ssub.s32 %s30, %s37
      %s205 = sor.u32 %s203, %s204
      %p206 = scmp.eq.s32.totalorder %s205, 0
      %s208 = sadd.s32 %s207, 1
      %s209 = scalar_select %p206, %s207, %s208
      %p212 = pneg %p206
      %p213 = scmp.eq.s32.totalorder %s22, 3
      %p214 = por %p212, %p213
      %p215 = scmp.ne.s32.totalorder %s207, %s210
      %p216 = scmp.eq.s32.totalorder %s22, 0
      %p217 = por %p215, %p216
      %p218 = scmp.ne.s32.totalorder %s207, %s210
      %p219 = scmp.eq.s32.totalorder %s27, 3
      %p220 = por %p218, %p219
      %p221 = scmp.ne.s32.totalorder %s210, %s211
      %p222 = scmp.eq.s32.totalorder %s27, 0
      %p223 = por %p221, %p222
      %p224 = scmp.ne.s32.totalorder %s210, %s211
      %p225 = scmp.eq.s32.totalorder %s28, 3
      %p226 = por %p224, %p225
      %p228 = scmp.ne.s32.totalorder %s211, %s227
      %p229 = scmp.eq.s32.totalorder %s28, 0
      %p230 = por %p228, %p229
      %p231 = scmp.le.s32.totalorder 1, %s22
      %p232 = scmp.lt.s32.totalorder %s22, 5
      %p233 = pnand %p231, %p232
      %p234 = pneg %p233
      // Predicated region
      $region9: #{tpu_custom_call.1} parent=5 // pred_check
        _
      $region10: #{tpu_custom_call.1} parent=5 // pred_check_branch
        %236 = sbr.rel (%p233) target = $region12
      $region11: #{tpu_custom_call.1} parent=5 // pred_region
        %s237 = ssub.s32 %s22, 1
        // Predicated region
        $region13: #{tpu_custom_call.1} parent=11 // pred_check
          %p238 = pneg %p111
        $region14: #{tpu_custom_call.1} parent=11 // pred_check_branch
          %240 = sbr.rel (%p238) target = $region16
        $region15: #{tpu_custom_call.1} parent=11 // pred_region
          _
        $region16: #{tpu_custom_call.1} parent=11 // pred_fallthru
          _
        // Predicated region
        $region17: #{tpu_custom_call.1} parent=11 // pred_check
          %p241 = pneg %p132
        $region18: #{tpu_custom_call.1} parent=11 // pred_check_branch
          %243 = sbr.rel (%p241) target = $region20
        $region19: #{tpu_custom_call.1} parent=11 // pred_region
          _
        $region20: #{tpu_custom_call.1} parent=11 // pred_fallthru
          _
        // Predicated region
        $region21: #{tpu_custom_call.1} parent=11 // pred_check
          %p244 = pneg %p153
        $region22: #{tpu_custom_call.1} parent=11 // pred_check_branch
          %246 = sbr.rel (%p244) target = $region24
        $region23: #{tpu_custom_call.1} parent=11 // pred_region
          _
        $region24: #{tpu_custom_call.1} parent=11 // pred_fallthru
          _
        // Predicated region
        $region25: #{tpu_custom_call.1} parent=11 // pred_check
          %p247 = pneg %p174
        $region26: #{tpu_custom_call.1} parent=11 // pred_check_branch
          %249 = sbr.rel (%p247) target = $region28
        $region27: #{tpu_custom_call.1} parent=11 // pred_region
          _
        $region28: #{tpu_custom_call.1} parent=11 // pred_fallthru
          _
        // Predicated region
        $region29: #{tpu_custom_call.1} parent=11 // pred_check
          %p250 = pneg %p195
        $region30: #{tpu_custom_call.1} parent=11 // pred_check_branch
          %252 = sbr.rel (%p250) target = $region32
        $region31: #{tpu_custom_call.1} parent=11 // pred_region
          _
        $region32: #{tpu_custom_call.1} parent=11 // pred_fallthru
          _
      $region12: #{tpu_custom_call.1} parent=5 // pred_fallthru
        _
      %p253 = scmp.lt.s32.totalorder %s22, 4
      // Predicated region
      $region33: #{tpu_custom_call.1} parent=5 // pred_check
        %p254 = pneg %p253
      $region34: #{tpu_custom_call.1} parent=5 // pred_check_branch
        %256 = sbr.rel (%p254) target = $region36
      $region35: #{tpu_custom_call.1} parent=5 // pred_region
        // Predicated region
        $region37: #{tpu_custom_call.1} parent=35 // pred_check
          %p257 = pneg %p56
        $region38: #{tpu_custom_call.1} parent=35 // pred_check_branch
          %259 = sbr.rel (%p257) target = $region40
        $region39: #{tpu_custom_call.1} parent=35 // pred_region
          %s260 = sand.u32 %s46, 1
          %s261 = scalar_lea.sflag [#allocation3], %s260
          %s262 = sand.u32 %s46, 1
          %s263 = smul.addr %s262, 4
          %s264 = scalar_lea.vmem [#allocation2], %s263
          %s266 = ssub.s32 64, 64
          %267 = vsyncadd %s261, %s266
          %s268 = smul.addr %s29, 2
          %s269 = sadd.s32 %s30, %s268
          %s270 = smul.addr %s269, 64
          %s271 = scalar_lea.hbm %s0, %s270
          %s273 = sshll.u32 %s264, 4
          %s274 = int_to_ptr.vmem [resolvable:$true] %s273
          %276 = dma.hbm_to_vmem [thread:$0]  %s271, 64, %s274, %s261
        $region40: #{tpu_custom_call.1} parent=35 // pred_fallthru
          _
        // Predicated region
        $region41: #{tpu_custom_call.1} parent=35 // pred_check
          %p277 = pneg %p84
        $region42: #{tpu_custom_call.1} parent=35 // pred_check_branch
          %279 = sbr.rel (%p277) target = $region44
        $region43: #{tpu_custom_call.1} parent=35 // pred_region
          %s280 = sand.u32 %s74, 1
          %s281 = scalar_lea.sflag [#allocation6], %s280
          %s282 = sand.u32 %s74, 1
          %s283 = smul.addr %s282, 4
          %s284 = scalar_lea.vmem [#allocation5], %s283
          %s286 = ssub.s32 64, 64
          %287 = vsyncadd %s281, %s286
          %s288 = smul.addr %s29, 2
          %s289 = sadd.s32 %s30, %s288
          %s290 = smul.addr %s289, 64
          %s291 = scalar_lea.hbm %s1, %s290
          %s293 = sshll.u32 %s284, 4
          %s294 = int_to_ptr.vmem [resolvable:$true] %s293
          %296 = dma.hbm_to_vmem [thread:$0]  %s291, 64, %s294, %s281
        $region44: #{tpu_custom_call.1} parent=35 // pred_fallthru
          _
      $region36: #{tpu_custom_call.1} parent=5 // pred_fallthru
        _
      %p297 = scmp.le.s32.totalorder 1, %s22
      %p298 = scmp.lt.s32.totalorder %s22, 5
      %p299 = pnand %p297, %p298
      %p300 = pneg %p299
      // Predicated region
      $region45: #{tpu_custom_call.1} parent=5 // pred_check
        _
      $region46: #{tpu_custom_call.1} parent=5 // pred_check_branch
        %302 = sbr.rel (%p299) target = $region48
      $region47: #{tpu_custom_call.1} parent=5 // pred_region
        %s303 = ssub.s32 %s22, 1
        %s304 = sand.u32 %s49, 1
        %s305 = scalar_lea.sflag [#allocation3], %s304
        %s306 = sand.u32 %s49, 1
        %s307 = smul.addr %s306, 4
        %s308 = scalar_lea.vmem [#allocation2], %s307
        // Predicated region
        $region49: #{tpu_custom_call.1} parent=47 // pred_check
          %p309 = pneg %p62
        $region50: #{tpu_custom_call.1} parent=47 // pred_check_branch
          %311 = sbr.rel (%p309) target = $region52
        $region51: #{tpu_custom_call.1} parent=47 // pred_region
          %312 = dma.done %s305, 64
        $region52: #{tpu_custom_call.1} parent=47 // pred_fallthru
          _
        %s313 = sand.u32 %s77, 1
        %s314 = scalar_lea.sflag [#allocation6], %s313
        %s315 = sand.u32 %s77, 1
        %s316 = smul.addr %s315, 4
        %s317 = scalar_lea.vmem [#allocation5], %s316
        // Predicated region
        $region53: #{tpu_custom_call.1} parent=47 // pred_check
          %p318 = pneg %p90
        $region54: #{tpu_custom_call.1} parent=47 // pred_check_branch
          %320 = sbr.rel (%p318) target = $region56
        $region55: #{tpu_custom_call.1} parent=47 // pred_region
          %321 = dma.done %s314, 64
        $region56: #{tpu_custom_call.1} parent=47 // pred_fallthru
          _
        %s322 = sand.u32 %s49, 1
        %s323 = scalar_lea.sflag [#allocation3], %s322
        %s324 = sand.u32 %s49, 1
        %s325 = smul.addr %s324, 4
        %s326 = scalar_lea.vmem [#allocation2], %s325
        %p327 = pneg %p62
        %p328 = pneg %p59
        %s329 = sand.u32 %s77, 1
        %s330 = scalar_lea.sflag [#allocation6], %s329
        %s331 = sand.u32 %s77, 1
        %s332 = smul.addr %s331, 4
        %s333 = scalar_lea.vmem [#allocation5], %s332
        %p334 = pneg %p90
        %p335 = pneg %p87
        %p336 = pneg %p111
        %p337 = pneg %p108
        %p338 = pneg %p132
        %p339 = pneg %p129
        %p340 = pneg %p153
        %p341 = pneg %p150
        %p342 = pneg %p174
        %p343 = pneg %p171
        %p344 = pneg %p195
        %p345 = pneg %p192
        %p346 = pneg %p223
        %p347 = pneg %p220
        %s348 = sand.u32 %s210, 1
        %s349 = scalar_lea.sflag [#allocation4], %s348
        %s350 = sand.u32 %s210, 1
        %s351 = smul.addr %s350, 4
        %s352 = scalar_lea.vmem [#allocation7], %s351
        %v353 = vld [vmem:[%s308] sm:$0xf]
        %v354 = vld [vmem:[%s317] sm:$0xf]
        %v355 = vld [vmem:[%s2] sm:$0xf]
        %v356 = vld [vmem:[%s3] sm:$0xf]
        %vm357 = vcmask 31744
        %v359 = vsel %vm357, %v356, 0
        %vm361 = vcmask 1043456
        %v363 = vsel %vm361, %v354, 0
        %365 = vmatprep.subr.mxu0 0.0
        %v366 = vand.u32 %v363, 4294901760
        %367 = vmatpush1.msra.mxu0 %v366
        %368 = vmatprep.subr.mxu0 0.0
        %369 = vmatpush1.msra.mxu0 0.0
        %370 = vmatprep.subr.mxu0 0.0
        %371 = vmatpush1.msra.mxu0 0.0
        %372 = vmatprep.subr.mxu0 0.0
        %373 = vmatpush1.msra.mxu0 0.0
        %374 = vmatprep.subr.mxu0 0.0
        %375 = vmatpush1.msra.mxu0 0.0
        %376 = vmatprep.subr.mxu0 0.0
        %377 = vmatpush1.msra.mxu0 0.0
        %378 = vmatprep.subr.mxu0 0.0
        %379 = vmatpush1.msra.mxu0 0.0
        %380 = vmatprep.subr.mxu0 0.0
        %381 = vmatpush1.msra.mxu0 0.0
        %382 = vmatprep.subr.mxu0 0.0
        %383 = vmatpush1.msra.mxu0 0.0
        %384 = vmatprep.subr.mxu0 0.0
        %385 = vmatpush1.msra.mxu0 0.0
        %386 = vmatprep.subr.mxu0 0.0
        %387 = vmatpush1.msra.mxu0 0.0
        %388 = vmatprep.subr.mxu0 0.0
        %389 = vmatpush1.msra.mxu0 0.0
        %390 = vmatprep.subr.mxu0 0.0
        %391 = vmatpush1.msra.mxu0 0.0
        %392 = vmatprep.subr.mxu0 0.0
        %393 = vmatpush1.msra.mxu0 0.0
        %394 = vmatprep.subr.mxu0 0.0
        %395 = vmatpush1.msra.mxu0 0.0
        %396 = vmatprep.subr.mxu0 0.0
        %397 = vmatpush1.msra.mxu0 0.0
        %398 = vmatprep.subr.mxu0 0.0
        %399 = vmatpush1.msra.mxu0 0.0
        %400 = vmatprep.subr.mxu0 0.0
        %401 = vmatpush1.msra.mxu0 0.0
        %402 = vmatprep.subr.mxu0 0.0
        %403 = vmatpush1.msra.mxu0 0.0
        %404 = vmatprep.subr.mxu0 0.0
        %405 = vmatpush1.msra.mxu0 0.0
        %406 = vmatprep.subr.mxu0 0.0
        %407 = vmatpush1.msra.mxu0 0.0
        %408 = vmatprep.subr.mxu0 0.0
        %409 = vmatpush1.msra.mxu0 0.0
        %410 = vmatprep.subr.mxu0 0.0
        %411 = vmatpush1.msra.mxu0 0.0
        %412 = vmatprep.subr.mxu0 0.0
        %413 = vmatpush1.msra.mxu0 0.0
        %414 = vmatprep.subr.mxu0 0.0
        %415 = vmatpush1.msra.mxu0 0.0
        %416 = vmatprep.subr.mxu0 0.0
        %417 = vmatpush1.msra.mxu0 0.0
        %418 = vmatprep.subr.mxu0 0.0
        %419 = vmatpush1.msra.mxu0 0.0
        %420 = vmatprep.subr.mxu0 0.0
        %421 = vmatpush1.msra.mxu0 0.0
        %422 = vmatprep.subr.mxu0 0.0
        %423 = vmatpush1.msra.mxu0 0.0
        %424 = vmatprep.subr.mxu0 0.0
        %425 = vmatpush1.msra.mxu0 0.0
        %426 = vmatprep.subr.mxu0 0.0
        %427 = vmatpush1.msra.mxu0 0.0
        %428 = vmatprep.subr.mxu0 0.0
        %429 = vmatpush1.msra.mxu0 0.0
        %430 = vmatprep.mubr.f32.mxu0 0.0
        %v431 = vand.u32 %v359, 4294901760
        %v432 = vsub.f32 %v359, %v431
        %v433 = vand.u32 %v432, 4294901760
        %v434 = vsub.f32 %v432, %v433
        %v435 = vand.u32 %v434, 4294901760
        %436 = vmatmul.mubr.f32.gmra.mrb[0].mxu0 %v435
        %v437 = vpop.f32.mrb[0].mxu0
        %v438 = vadd.f32 0.0, %v437
        %v439 = vpop.f32.mrb[0].mxu0
        %440 = vdwg.mxu0
        %441 = vmatprep.subr.mxu0 0.0
        %v442 = vand.u32 %v363, 4294901760
        %v443 = vsub.f32 %v363, %v442
        %v444 = vand.u32 %v443, 4294901760
        %v445 = vsub.f32 %v443, %v444
        %v446 = vand.u32 %v445, 4294901760
        %447 = vmatpush1.msra.mxu0 %v446
        %448 = vmatprep.subr.mxu0 0.0
        %449 = vmatpush1.msra.mxu0 0.0
        %450 = vmatprep.subr.mxu0 0.0
        %451 = vmatpush1.msra.mxu0 0.0
        %452 = vmatprep.subr.mxu0 0.0
        %453 = vmatpush1.msra.mxu0 0.0
        %454 = vmatprep.subr.mxu0 0.0
        %455 = vmatpush1.msra.mxu0 0.0
        %456 = vmatprep.subr.mxu0 0.0
        %457 = vmatpush1.msra.mxu0 0.0
        %458 = vmatprep.subr.mxu0 0.0
        %459 = vmatpush1.msra.mxu0 0.0
        %460 = vmatprep.subr.mxu0 0.0
        %461 = vmatpush1.msra.mxu0 0.0
        %462 = vmatprep.subr.mxu0 0.0
        %463 = vmatpush1.msra.mxu0 0.0
        %464 = vmatprep.subr.mxu0 0.0
        %465 = vmatpush1.msra.mxu0 0.0
        %466 = vmatprep.subr.mxu0 0.0
        %467 = vmatpush1.msra.mxu0 0.0
        %468 = vmatprep.subr.mxu0 0.0
        %469 = vmatpush1.msra.mxu0 0.0
        %470 = vmatprep.subr.mxu0 0.0
        %471 = vmatpush1.msra.mxu0 0.0
        %472 = vmatprep.subr.mxu0 0.0
        %473 = vmatpush1.msra.mxu0 0.0
        %474 = vmatprep.subr.mxu0 0.0
        %475 = vmatpush1.msra.mxu0 0.0
        %476 = vmatprep.subr.mxu0 0.0
        %477 = vmatpush1.msra.mxu0 0.0
        %478 = vmatprep.subr.mxu0 0.0
        %479 = vmatpush1.msra.mxu0 0.0
        %480 = vmatprep.subr.mxu0 0.0
        %481 = vmatpush1.msra.mxu0 0.0
        %482 = vmatprep.subr.mxu0 0.0
        %483 = vmatpush1.msra.mxu0 0.0
        %484 = vmatprep.subr.mxu0 0.0
        %485 = vmatpush1.msra.mxu0 0.0
        %486 = vmatprep.subr.mxu0 0.0
        %487 = vmatpush1.msra.mxu0 0.0
        %488 = vmatprep.subr.mxu0 0.0
        %489 = vmatpush1.msra.mxu0 0.0
        %490 = vmatprep.subr.mxu0 0.0
        %491 = vmatpush1.msra.mxu0 0.0
        %492 = vmatprep.subr.mxu0 0.0
        %493 = vmatpush1.msra.mxu0 0.0
        %494 = vmatprep.subr.mxu0 0.0
        %495 = vmatpush1.msra.mxu0 0.0
        %496 = vmatprep.subr.mxu0 0.0
        %497 = vmatpush1.msra.mxu0 0.0
        %498 = vmatprep.subr.mxu0 0.0
        %499 = vmatpush1.msra.mxu0 0.0
        %500 = vmatprep.subr.mxu0 0.0
        %501 = vmatpush1.msra.mxu0 0.0
        %502 = vmatprep.subr.mxu0 0.0
        %503 = vmatpush1.msra.mxu0 0.0
        %504 = vmatprep.subr.mxu0 0.0
        %505 = vmatpush1.msra.mxu0 0.0
        %506 = vmatprep.subr.mxu0 0.0
        %507 = vmatpush1.msra.mxu0 0.0
        %508 = vmatprep.subr.mxu0 0.0
        %509 = vmatpush1.msra.mxu0 0.0
        %510 = vmatprep.mubr.f32.mxu0 0.0
        %v511 = vand.u32 %v359, 4294901760
        %512 = vmatmul.mubr.f32.gmra.mrb[0].mxu0 %v511
        %v513 = vpop.f32.mrb[0].mxu0
        %v514 = vadd.f32 %v438, %v513
        %v515 = vpop.f32.mrb[0].mxu0
        %516 = vdwg.mxu0
        %517 = vmatprep.subr.mxu0 0.0
        %v518 = vand.u32 %v363, 4294901760
        %v519 = vsub.f32 %v363, %v518
        %520 = vmatpush1.msra.mxu0 %v519
        %521 = vmatprep.subr.mxu0 0.0
        %522 = vmatpush1.msra.mxu0 0.0
        %523 = vmatprep.subr.mxu0 0.0
        %524 = vmatpush1.msra.mxu0 0.0
        %525 = vmatprep.subr.mxu0 0.0
        %526 = vmatpush1.msra.mxu0 0.0
        %527 = vmatprep.subr.mxu0 0.0
        %528 = vmatpush1.msra.mxu0 0.0
        %529 = vmatprep.subr.mxu0 0.0
        %530 = vmatpush1.msra.mxu0 0.0
        %531 = vmatprep.subr.mxu0 0.0
        %532 = vmatpush1.msra.mxu0 0.0
        %533 = vmatprep.subr.mxu0 0.0
        %534 = vmatpush1.msra.mxu0 0.0
        %535 = vmatprep.subr.mxu0 0.0
        %536 = vmatpush1.msra.mxu0 0.0
        %537 = vmatprep.subr.mxu0 0.0
        %538 = vmatpush1.msra.mxu0 0.0
        %539 = vmatprep.subr.mxu0 0.0
        %540 = vmatpush1.msra.mxu0 0.0
        %541 = vmatprep.subr.mxu0 0.0
        %542 = vmatpush1.msra.mxu0 0.0
        %543 = vmatprep.subr.mxu0 0.0
        %544 = vmatpush1.msra.mxu0 0.0
        %545 = vmatprep.subr.mxu0 0.0
        %546 = vmatpush1.msra.mxu0 0.0
        %547 = vmatprep.subr.mxu0 0.0
        %548 = vmatpush1.msra.mxu0 0.0
        %549 = vmatprep.subr.mxu0 0.0
        %550 = vmatpush1.msra.mxu0 0.0
        %551 = vmatprep.subr.mxu0 0.0
        %552 = vmatpush1.msra.mxu0 0.0
        %553 = vmatprep.subr.mxu0 0.0
        %554 = vmatpush1.msra.mxu0 0.0
        %555 = vmatprep.subr.mxu0 0.0
        %556 = vmatpush1.msra.mxu0 0.0
        %557 = vmatprep.subr.mxu0 0.0
        %558 = vmatpush1.msra.mxu0 0.0
        %559 = vmatprep.subr.mxu0 0.0
        %560 = vmatpush1.msra.mxu0 0.0
        %561 = vmatprep.subr.mxu0 0.0
        %562 = vmatpush1.msra.mxu0 0.0
        %563 = vmatprep.subr.mxu0 0.0
        %564 = vmatpush1.msra.mxu0 0.0
        %565 = vmatprep.subr.mxu0 0.0
        %566 = vmatpush1.msra.mxu0 0.0
        %567 = vmatprep.subr.mxu0 0.0
        %568 = vmatpush1.msra.mxu0 0.0
        %569 = vmatprep.subr.mxu0 0.0
        %570 = vmatpush1.msra.mxu0 0.0
        %571 = vmatprep.subr.mxu0 0.0
        %572 = vmatpush1.msra.mxu0 0.0
        %573 = vmatprep.subr.mxu0 0.0
        %574 = vmatpush1.msra.mxu0 0.0
        %575 = vmatprep.subr.mxu0 0.0
        %576 = vmatpush1.msra.mxu0 0.0
        %577 = vmatprep.subr.mxu0 0.0
        %578 = vmatpush1.msra.mxu0 0.0
        %579 = vmatprep.subr.mxu0 0.0
        %580 = vmatpush1.msra.mxu0 0.0
        %581 = vmatprep.subr.mxu0 0.0
        %582 = vmatpush1.msra.mxu0 0.0
        %583 = vmatprep.mubr.f32.mxu0 0.0
        %v584 = vand.u32 %v359, 4294901760
        %v585 = vsub.f32 %v359, %v584
        %586 = vmatmul.mubr.f32.gmra.mrb[0].mxu0 %v585
        %v587 = vpop.f32.mrb[0].mxu0
        %v588 = vadd.f32 %v514, %v587
        %v589 = vpop.f32.mrb[0].mxu0
        %590 = vdwg.mxu0
        %591 = vmatprep.subr.mxu0 0.0
        %v592 = vand.u32 %v363, 4294901760
        %593 = vmatpush1.msra.mxu0 %v592
        %594 = vmatprep.subr.mxu0 0.0
        %595 = vmatpush1.msra.mxu0 0.0
        %596 = vmatprep.subr.mxu0 0.0
        %597 = vmatpush1.msra.mxu0 0.0
        %598 = vmatprep.subr.mxu0 0.0
        %599 = vmatpush1.msra.mxu0 0.0
        %600 = vmatprep.subr.mxu0 0.0
        %601 = vmatpush1.msra.mxu0 0.0
        %602 = vmatprep.subr.mxu0 0.0
        %603 = vmatpush1.msra.mxu0 0.0
        %604 = vmatprep.subr.mxu0 0.0
        %605 = vmatpush1.msra.mxu0 0.0
        %606 = vmatprep.subr.mxu0 0.0
        %607 = vmatpush1.msra.mxu0 0.0
        %608 = vmatprep.subr.mxu0 0.0
        %609 = vmatpush1.msra.mxu0 0.0
        %610 = vmatprep.subr.mxu0 0.0
        %611 = vmatpush1.msra.mxu0 0.0
        %612 = vmatprep.subr.mxu0 0.0
        %613 = vmatpush1.msra.mxu0 0.0
        %614 = vmatprep.subr.mxu0 0.0
        %615 = vmatpush1.msra.mxu0 0.0
        %616 = vmatprep.subr.mxu0 0.0
        %617 = vmatpush1.msra.mxu0 0.0
        %618 = vmatprep.subr.mxu0 0.0
        %619 = vmatpush1.msra.mxu0 0.0
        %620 = vmatprep.subr.mxu0 0.0
        %621 = vmatpush1.msra.mxu0 0.0
        %622 = vmatprep.subr.mxu0 0.0
        %623 = vmatpush1.msra.mxu0 0.0
        %624 = vmatprep.subr.mxu0 0.0
        %625 = vmatpush1.msra.mxu0 0.0
        %626 = vmatprep.subr.mxu0 0.0
        %627 = vmatpush1.msra.mxu0 0.0
        %628 = vmatprep.subr.mxu0 0.0
        %629 = vmatpush1.msra.mxu0 0.0
        %630 = vmatprep.subr.mxu0 0.0
        %631 = vmatpush1.msra.mxu0 0.0
        %632 = vmatprep.subr.mxu0 0.0
        %633 = vmatpush1.msra.mxu0 0.0
        %634 = vmatprep.subr.mxu0 0.0
        %635 = vmatpush1.msra.mxu0 0.0
        %636 = vmatprep.subr.mxu0 0.0
        %637 = vmatpush1.msra.mxu0 0.0
        %638 = vmatprep.subr.mxu0 0.0
        %639 = vmatpush1.msra.mxu0 0.0
        %640 = vmatprep.subr.mxu0 0.0
        %641 = vmatpush1.msra.mxu0 0.0
        %642 = vmatprep.subr.mxu0 0.0
        %643 = vmatpush1.msra.mxu0 0.0
        %644 = vmatprep.subr.mxu0 0.0
        %645 = vmatpush1.msra.mxu0 0.0
        %646 = vmatprep.subr.mxu0 0.0
        %647 = vmatpush1.msra.mxu0 0.0
        %648 = vmatprep.subr.mxu0 0.0
        %649 = vmatpush1.msra.mxu0 0.0
        %650 = vmatprep.subr.mxu0 0.0
        %651 = vmatpush1.msra.mxu0 0.0
        %652 = vmatprep.subr.mxu0 0.0
        %653 = vmatpush1.msra.mxu0 0.0
        %654 = vmatprep.subr.mxu0 0.0
        %655 = vmatpush1.msra.mxu0 0.0
        %656 = vmatprep.mubr.f32.mxu0 0.0
        %v657 = vand.u32 %v359, 4294901760
        %v658 = vsub.f32 %v359, %v657
        %v659 = vand.u32 %v658, 4294901760
        %660 = vmatmul.mubr.f32.gmra.mrb[0].mxu0 %v659
        %v661 = vpop.f32.mrb[0].mxu0
        %v662 = vadd.f32 %v588, %v661
        %v663 = vpop.f32.mrb[0].mxu0
        %664 = vdwg.mxu0
        %665 = vmatprep.subr.mxu0 0.0
        %v666 = vand.u32 %v363, 4294901760
        %v667 = vsub.f32 %v363, %v666
        %v668 = vand.u32 %v667, 4294901760
        %669 = vmatpush1.msra.mxu0 %v668
        %670 = vmatprep.subr.mxu0 0.0
        %671 = vmatpush1.msra.mxu0 0.0
        %672 = vmatprep.subr.mxu0 0.0
        %673 = vmatpush1.msra.mxu0 0.0
        %674 = vmatprep.subr.mxu0 0.0
        %675 = vmatpush1.msra.mxu0 0.0
        %676 = vmatprep.subr.mxu0 0.0
        %677 = vmatpush1.msra.mxu0 0.0
        %678 = vmatprep.subr.mxu0 0.0
        %679 = vmatpush1.msra.mxu0 0.0
        %680 = vmatprep.subr.mxu0 0.0
        %681 = vmatpush1.msra.mxu0 0.0
        %682 = vmatprep.subr.mxu0 0.0
        %683 = vmatpush1.msra.mxu0 0.0
        %684 = vmatprep.subr.mxu0 0.0
        %685 = vmatpush1.msra.mxu0 0.0
        %686 = vmatprep.subr.mxu0 0.0
        %687 = vmatpush1.msra.mxu0 0.0
        %688 = vmatprep.subr.mxu0 0.0
        %689 = vmatpush1.msra.mxu0 0.0
        %690 = vmatprep.subr.mxu0 0.0
        %691 = vmatpush1.msra.mxu0 0.0
        %692 = vmatprep.subr.mxu0 0.0
        %693 = vmatpush1.msra.mxu0 0.0
        %694 = vmatprep.subr.mxu0 0.0
        %695 = vmatpush1.msra.mxu0 0.0
        %696 = vmatprep.subr.mxu0 0.0
        %697 = vmatpush1.msra.mxu0 0.0
        %698 = vmatprep.subr.mxu0 0.0
        %699 = vmatpush1.msra.mxu0 0.0
        %700 = vmatprep.subr.mxu0 0.0
        %701 = vmatpush1.msra.mxu0 0.0
        %702 = vmatprep.subr.mxu0 0.0
        %703 = vmatpush1.msra.mxu0 0.0
        %704 = vmatprep.subr.mxu0 0.0
        %705 = vmatpush1.msra.mxu0 0.0
        %706 = vmatprep.subr.mxu0 0.0
        %707 = vmatpush1.msra.mxu0 0.0
        %708 = vmatprep.subr.mxu0 0.0
        %709 = vmatpush1.msra.mxu0 0.0
        %710 = vmatprep.subr.mxu0 0.0
        %711 = vmatpush1.msra.mxu0 0.0
        %712 = vmatprep.subr.mxu0 0.0
        %713 = vmatpush1.msra.mxu0 0.0
        %714 = vmatprep.subr.mxu0 0.0
        %715 = vmatpush1.msra.mxu0 0.0
        %716 = vmatprep.subr.mxu0 0.0
        %717 = vmatpush1.msra.mxu0 0.0
        %718 = vmatprep.subr.mxu0 0.0
        %719 = vmatpush1.msra.mxu0 0.0
        %720 = vmatprep.subr.mxu0 0.0
        %721 = vmatpush1.msra.mxu0 0.0
        %722 = vmatprep.subr.mxu0 0.0
        %723 = vmatpush1.msra.mxu0 0.0
        %724 = vmatprep.subr.mxu0 0.0
        %725 = vmatpush1.msra.mxu0 0.0
        %726 = vmatprep.subr.mxu0 0.0
        %727 = vmatpush1.msra.mxu0 0.0
        %728 = vmatprep.subr.mxu0 0.0
        %729 = vmatpush1.msra.mxu0 0.0
        %730 = vmatprep.subr.mxu0 0.0
        %731 = vmatpush1.msra.mxu0 0.0
        %732 = vmatprep.mubr.f32.mxu0 0.0
        %v733 = vand.u32 %v359, 4294901760
        %734 = vmatmul.mubr.f32.gmra.mrb[0].mxu0 %v733
        %v735 = vpop.f32.mrb[0].mxu0
        %v736 = vadd.f32 %v662, %v735
        %v737 = vpop.f32.mrb[0].mxu0
        %738 = vdwg.mxu0
        %739 = vmatprep.subr.mxu0 0.0
        %v740 = vand.u32 %v363, 4294901760
        %741 = vmatpush1.msra.mxu0 %v740
        %742 = vmatprep.subr.mxu0 0.0
        %743 = vmatpush1.msra.mxu0 0.0
        %744 = vmatprep.subr.mxu0 0.0
        %745 = vmatpush1.msra.mxu0 0.0
        %746 = vmatprep.subr.mxu0 0.0
        %747 = vmatpush1.msra.mxu0 0.0
        %748 = vmatprep.subr.mxu0 0.0
        %749 = vmatpush1.msra.mxu0 0.0
        %750 = vmatprep.subr.mxu0 0.0
        %751 = vmatpush1.msra.mxu0 0.0
        %752 = vmatprep.subr.mxu0 0.0
        %753 = vmatpush1.msra.mxu0 0.0
        %754 = vmatprep.subr.mxu0 0.0
        %755 = vmatpush1.msra.mxu0 0.0
        %756 = vmatprep.subr.mxu0 0.0
        %757 = vmatpush1.msra.mxu0 0.0
        %758 = vmatprep.subr.mxu0 0.0
        %759 = vmatpush1.msra.mxu0 0.0
        %760 = vmatprep.subr.mxu0 0.0
        %761 = vmatpush1.msra.mxu0 0.0
        %762 = vmatprep.subr.mxu0 0.0
        %763 = vmatpush1.msra.mxu0 0.0
        %764 = vmatprep.subr.mxu0 0.0
        %765 = vmatpush1.msra.mxu0 0.0
        %766 = vmatprep.subr.mxu0 0.0
        %767 = vmatpush1.msra.mxu0 0.0
        %768 = vmatprep.subr.mxu0 0.0
        %769 = vmatpush1.msra.mxu0 0.0
        %770 = vmatprep.subr.mxu0 0.0
        %771 = vmatpush1.msra.mxu0 0.0
        %772 = vmatprep.subr.mxu0 0.0
        %773 = vmatpush1.msra.mxu0 0.0
        %774 = vmatprep.subr.mxu0 0.0
        %775 = vmatpush1.msra.mxu0 0.0
        %776 = vmatprep.subr.mxu0 0.0
        %777 = vmatpush1.msra.mxu0 0.0
        %778 = vmatprep.subr.mxu0 0.0
        %779 = vmatpush1.msra.mxu0 0.0
        %780 = vmatprep.subr.mxu0 0.0
        %781 = vmatpush1.msra.mxu0 0.0
        %782 = vmatprep.subr.mxu0 0.0
        %783 = vmatpush1.msra.mxu0 0.0
        %784 = vmatprep.subr.mxu0 0.0
        %785 = vmatpush1.msra.mxu0 0.0
        %786 = vmatprep.subr.mxu0 0.0
        %787 = vmatpush1.msra.mxu0 0.0
        %788 = vmatprep.subr.mxu0 0.0
        %789 = vmatpush1.msra.mxu0 0.0
        %790 = vmatprep.subr.mxu0 0.0
        %791 = vmatpush1.msra.mxu0 0.0
        %792 = vmatprep.subr.mxu0 0.0
        %793 = vmatpush1.msra.mxu0 0.0
        %794 = vmatprep.subr.mxu0 0.0
        %795 = vmatpush1.msra.mxu0 0.0
        %796 = vmatprep.subr.mxu0 0.0
        %797 = vmatpush1.msra.mxu0 0.0
        %798 = vmatprep.subr.mxu0 0.0
        %799 = vmatpush1.msra.mxu0 0.0
        %800 = vmatprep.subr.mxu0 0.0
        %801 = vmatpush1.msra.mxu0 0.0
        %802 = vmatprep.subr.mxu0 0.0
        %803 = vmatpush1.msra.mxu0 0.0
        %804 = vmatprep.mubr.f32.mxu0 0.0
        %v805 = vand.u32 %v359, 4294901760
        %806 = vmatmul.mubr.f32.gmra.mrb[0].mxu0 %v805
        %v807 = vpop.f32.mrb[0].mxu0
        %v808 = vadd.f32 %v736, %v807
        %v809 = vpop.f32.mrb[0].mxu0
        %810 = vdwg.mxu0
        %v812 = vsel %vm357, %v355, 0
        %v815 = vsel %vm361, %v353, 0
        %817 = vmatprep.subr.mxu0 0.0
        %v818 = vand.u32 %v815, 4294901760
        %819 = vmatpush1.msra.mxu0 %v818
        %820 = vmatprep.subr.mxu0 0.0
        %821 = vmatpush1.msra.mxu0 0.0
        %822 = vmatprep.subr.mxu0 0.0
        %823 = vmatpush1.msra.mxu0 0.0
        %824 = vmatprep.subr.mxu0 0.0
        %825 = vmatpush1.msra.mxu0 0.0
        %826 = vmatprep.subr.mxu0 0.0
        %827 = vmatpush1.msra.mxu0 0.0
        %828 = vmatprep.subr.mxu0 0.0
        %829 = vmatpush1.msra.mxu0 0.0
        %830 = vmatprep.subr.mxu0 0.0
        %831 = vmatpush1.msra.mxu0 0.0
        %832 = vmatprep.subr.mxu0 0.0
        %833 = vmatpush1.msra.mxu0 0.0
        %834 = vmatprep.subr.mxu0 0.0
        %835 = vmatpush1.msra.mxu0 0.0
        %836 = vmatprep.subr.mxu0 0.0
        %837 = vmatpush1.msra.mxu0 0.0
        %838 = vmatprep.subr.mxu0 0.0
        %839 = vmatpush1.msra.mxu0 0.0
        %840 = vmatprep.subr.mxu0 0.0
        %841 = vmatpush1.msra.mxu0 0.0
        %842 = vmatprep.subr.mxu0 0.0
        %843 = vmatpush1.msra.mxu0 0.0
        %844 = vmatprep.subr.mxu0 0.0
        %845 = vmatpush1.msra.mxu0 0.0
        %846 = vmatprep.subr.mxu0 0.0
        %847 = vmatpush1.msra.mxu0 0.0
        %848 = vmatprep.subr.mxu0 0.0
        %849 = vmatpush1.msra.mxu0 0.0
        %850 = vmatprep.subr.mxu0 0.0
        %851 = vmatpush1.msra.mxu0 0.0
        %852 = vmatprep.subr.mxu0 0.0
        %853 = vmatpush1.msra.mxu0 0.0
        %854 = vmatprep.subr.mxu0 0.0
        %855 = vmatpush1.msra.mxu0 0.0
        %856 = vmatprep.subr.mxu0 0.0
        %857 = vmatpush1.msra.mxu0 0.0
        %858 = vmatprep.subr.mxu0 0.0
        %859 = vmatpush1.msra.mxu0 0.0
        %860 = vmatprep.subr.mxu0 0.0
        %861 = vmatpush1.msra.mxu0 0.0
        %862 = vmatprep.subr.mxu0 0.0
        %863 = vmatpush1.msra.mxu0 0.0
        %864 = vmatprep.subr.mxu0 0.0
        %865 = vmatpush1.msra.mxu0 0.0
        %866 = vmatprep.subr.mxu0 0.0
        %867 = vmatpush1.msra.mxu0 0.0
        %868 = vmatprep.subr.mxu0 0.0
        %869 = vmatpush1.msra.mxu0 0.0
        %870 = vmatprep.subr.mxu0 0.0
        %871 = vmatpush1.msra.mxu0 0.0
        %872 = vmatprep.subr.mxu0 0.0
        %873 = vmatpush1.msra.mxu0 0.0
        %874 = vmatprep.subr.mxu0 0.0
        %875 = vmatpush1.msra.mxu0 0.0
        %876 = vmatprep.subr.mxu0 0.0
        %877 = vmatpush1.msra.mxu0 0.0
        %878 = vmatprep.subr.mxu0 0.0
        %879 = vmatpush1.msra.mxu0 0.0
        %880 = vmatprep.subr.mxu0 0.0
        %881 = vmatpush1.msra.mxu0 0.0
        %882 = vmatprep.mubr.f32.mxu0 0.0
        %v883 = vand.u32 %v812, 4294901760
        %v884 = vsub.f32 %v812, %v883
        %v885 = vand.u32 %v884, 4294901760
        %v886 = vsub.f32 %v884, %v885
        %v887 = vand.u32 %v886, 4294901760
        %888 = vmatmul.mubr.f32.gmra.mrb[0].mxu0 %v887
        %v889 = vpop.f32.mrb[0].mxu0
        %v890 = vadd.f32 %v808, %v889
        %v891 = vpop.f32.mrb[0].mxu0
        %892 = vdwg.mxu0
        %893 = vmatprep.subr.mxu0 0.0
        %v894 = vand.u32 %v815, 4294901760
        %v895 = vsub.f32 %v815, %v894
        %v896 = vand.u32 %v895, 4294901760
        %v897 = vsub.f32 %v895, %v896
        %v898 = vand.u32 %v897, 4294901760
        %899 = vmatpush1.msra.mxu0 %v898
        %900 = vmatprep.subr.mxu0 0.0
        %901 = vmatpush1.msra.mxu0 0.0
        %902 = vmatprep.subr.mxu0 0.0
        %903 = vmatpush1.msra.mxu0 0.0
        %904 = vmatprep.subr.mxu0 0.0
        %905 = vmatpush1.msra.mxu0 0.0
        %906 = vmatprep.subr.mxu0 0.0
        %907 = vmatpush1.msra.mxu0 0.0
        %908 = vmatprep.subr.mxu0 0.0
        %909 = vmatpush1.msra.mxu0 0.0
        %910 = vmatprep.subr.mxu0 0.0
        %911 = vmatpush1.msra.mxu0 0.0
        %912 = vmatprep.subr.mxu0 0.0
        %913 = vmatpush1.msra.mxu0 0.0
        %914 = vmatprep.subr.mxu0 0.0
        %915 = vmatpush1.msra.mxu0 0.0
        %916 = vmatprep.subr.mxu0 0.0
        %917 = vmatpush1.msra.mxu0 0.0
        %918 = vmatprep.subr.mxu0 0.0
        %919 = vmatpush1.msra.mxu0 0.0
        %920 = vmatprep.subr.mxu0 0.0
        %921 = vmatpush1.msra.mxu0 0.0
        %922 = vmatprep.subr.mxu0 0.0
        %923 = vmatpush1.msra.mxu0 0.0
        %924 = vmatprep.subr.mxu0 0.0
        %925 = vmatpush1.msra.mxu0 0.0
        %926 = vmatprep.subr.mxu0 0.0
        %927 = vmatpush1.msra.mxu0 0.0
        %928 = vmatprep.subr.mxu0 0.0
        %929 = vmatpush1.msra.mxu0 0.0
        %930 = vmatprep.subr.mxu0 0.0
        %931 = vmatpush1.msra.mxu0 0.0
        %932 = vmatprep.subr.mxu0 0.0
        %933 = vmatpush1.msra.mxu0 0.0
        %934 = vmatprep.subr.mxu0 0.0
        %935 = vmatpush1.msra.mxu0 0.0
        %936 = vmatprep.subr.mxu0 0.0
        %937 = vmatpush1.msra.mxu0 0.0
        %938 = vmatprep.subr.mxu0 0.0
        %939 = vmatpush1.msra.mxu0 0.0
        %940 = vmatprep.subr.mxu0 0.0
        %941 = vmatpush1.msra.mxu0 0.0
        %942 = vmatprep.subr.mxu0 0.0
        %943 = vmatpush1.msra.mxu0 0.0
        %944 = vmatprep.subr.mxu0 0.0
        %945 = vmatpush1.msra.mxu0 0.0
        %946 = vmatprep.subr.mxu0 0.0
        %947 = vmatpush1.msra.mxu0 0.0
        %948 = vmatprep.subr.mxu0 0.0
        %949 = vmatpush1.msra.mxu0 0.0
        %950 = vmatprep.subr.mxu0 0.0
        %951 = vmatpush1.msra.mxu0 0.0
        %952 = vmatprep.subr.mxu0 0.0
        %953 = vmatpush1.msra.mxu0 0.0
        %954 = vmatprep.subr.mxu0 0.0
        %955 = vmatpush1.msra.mxu0 0.0
        %956 = vmatprep.subr.mxu0 0.0
        %957 = vmatpush1.msra.mxu0 0.0
        %958 = vmatprep.subr.mxu0 0.0
        %959 = vmatpush1.msra.mxu0 0.0
        %960 = vmatprep.subr.mxu0 0.0
        %961 = vmatpush1.msra.mxu0 0.0
        %962 = vmatprep.mubr.f32.mxu0 0.0
        %v963 = vand.u32 %v812, 4294901760
        %964 = vmatmul.mubr.f32.gmra.mrb[0].mxu0 %v963
        %v965 = vpop.f32.mrb[0].mxu0
        %v966 = vadd.f32 %v890, %v965
        %v967 = vpop.f32.mrb[0].mxu0
        %968 = vdwg.mxu0
        %969 = vmatprep.subr.mxu0 0.0
        %v970 = vand.u32 %v815, 4294901760
        %v971 = vsub.f32 %v815, %v970
        %972 = vmatpush1.msra.mxu0 %v971
        %973 = vmatprep.subr.mxu0 0.0
        %974 = vmatpush1.msra.mxu0 0.0
        %975 = vmatprep.subr.mxu0 0.0
        %976 = vmatpush1.msra.mxu0 0.0
        %977 = vmatprep.subr.mxu0 0.0
        %978 = vmatpush1.msra.mxu0 0.0
        %979 = vmatprep.subr.mxu0 0.0
        %980 = vmatpush1.msra.mxu0 0.0
        %981 = vmatprep.subr.mxu0 0.0
        %982 = vmatpush1.msra.mxu0 0.0
        %983 = vmatprep.subr.mxu0 0.0
        %984 = vmatpush1.msra.mxu0 0.0
        %985 = vmatprep.subr.mxu0 0.0
        %986 = vmatpush1.msra.mxu0 0.0
        %987 = vmatprep.subr.mxu0 0.0
        %988 = vmatpush1.msra.mxu0 0.0
        %989 = vmatprep.subr.mxu0 0.0
        %990 = vmatpush1.msra.mxu0 0.0
        %991 = vmatprep.subr.mxu0 0.0
        %992 = vmatpush1.msra.mxu0 0.0
        %993 = vmatprep.subr.mxu0 0.0
        %994 = vmatpush1.msra.mxu0 0.0
        %995 = vmatprep.subr.mxu0 0.0
        %996 = vmatpush1.msra.mxu0 0.0
        %997 = vmatprep.subr.mxu0 0.0
        %998 = vmatpush1.msra.mxu0 0.0
        %999 = vmatprep.subr.mxu0 0.0
        %1000 = vmatpush1.msra.mxu0 0.0
        %1001 = vmatprep.subr.mxu0 0.0
        %1002 = vmatpush1.msra.mxu0 0.0
        %1003 = vmatprep.subr.mxu0 0.0
        %1004 = vmatpush1.msra.mxu0 0.0
        %1005 = vmatprep.subr.mxu0 0.0
        %1006 = vmatpush1.msra.mxu0 0.0
        %1007 = vmatprep.subr.mxu0 0.0
        %1008 = vmatpush1.msra.mxu0 0.0
        %1009 = vmatprep.subr.mxu0 0.0
        %1010 = vmatpush1.msra.mxu0 0.0
        %1011 = vmatprep.subr.mxu0 0.0
        %1012 = vmatpush1.msra.mxu0 0.0
        %1013 = vmatprep.subr.mxu0 0.0
        %1014 = vmatpush1.msra.mxu0 0.0
        %1015 = vmatprep.subr.mxu0 0.0
        %1016 = vmatpush1.msra.mxu0 0.0
        %1017 = vmatprep.subr.mxu0 0.0
        %1018 = vmatpush1.msra.mxu0 0.0
        %1019 = vmatprep.subr.mxu0 0.0
        %1020 = vmatpush1.msra.mxu0 0.0
        %1021 = vmatprep.subr.mxu0 0.0
        %1022 = vmatpush1.msra.mxu0 0.0
        %1023 = vmatprep.subr.mxu0 0.0
        %1024 = vmatpush1.msra.mxu0 0.0
        %1025 = vmatprep.subr.mxu0 0.0
        %1026 = vmatpush1.msra.mxu0 0.0
        %1027 = vmatprep.subr.mxu0 0.0
        %1028 = vmatpush1.msra.mxu0 0.0
        %1029 = vmatprep.subr.mxu0 0.0
        %1030 = vmatpush1.msra.mxu0 0.0
        %1031 = vmatprep.subr.mxu0 0.0
        %1032 = vmatpush1.msra.mxu0 0.0
        %1033 = vmatprep.subr.mxu0 0.0
        %1034 = vmatpush1.msra.mxu0 0.0
        %1035 = vmatprep.mubr.f32.mxu0 0.0
        %v1036 = vand.u32 %v812, 4294901760
        %v1037 = vsub.f32 %v812, %v1036
        %1038 = vmatmul.mubr.f32.gmra.mrb[0].mxu0 %v1037
        %v1039 = vpop.f32.mrb[0].mxu0
        %v1040 = vadd.f32 %v966, %v1039
        %v1041 = vpop.f32.mrb[0].mxu0
        %1042 = vdwg.mxu0
        %1043 = vmatprep.subr.mxu0 0.0
        %v1044 = vand.u32 %v815, 4294901760
        %1045 = vmatpush1.msra.mxu0 %v1044
        %1046 = vmatprep.subr.mxu0 0.0
        %1047 = vmatpush1.msra.mxu0 0.0
        %1048 = vmatprep.subr.mxu0 0.0
        %1049 = vmatpush1.msra.mxu0 0.0
        %1050 = vmatprep.subr.mxu0 0.0
        %1051 = vmatpush1.msra.mxu0 0.0
        %1052 = vmatprep.subr.mxu0 0.0
        %1053 = vmatpush1.msra.mxu0 0.0
        %1054 = vmatprep.subr.mxu0 0.0
        %1055 = vmatpush1.msra.mxu0 0.0
        %1056 = vmatprep.subr.mxu0 0.0
        %1057 = vmatpush1.msra.mxu0 0.0
        %1058 = vmatprep.subr.mxu0 0.0
        %1059 = vmatpush1.msra.mxu0 0.0
        %1060 = vmatprep.subr.mxu0 0.0
        %1061 = vmatpush1.msra.mxu0 0.0
        %1062 = vmatprep.subr.mxu0 0.0
        %1063 = vmatpush1.msra.mxu0 0.0
        %1064 = vmatprep.subr.mxu0 0.0
        %1065 = vmatpush1.msra.mxu0 0.0
        %1066 = vmatprep.subr.mxu0 0.0
        %1067 = vmatpush1.msra.mxu0 0.0
        %1068 = vmatprep.subr.mxu0 0.0
        %1069 = vmatpush1.msra.mxu0 0.0
        %1070 = vmatprep.subr.mxu0 0.0
        %1071 = vmatpush1.msra.mxu0 0.0
        %1072 = vmatprep.subr.mxu0 0.0
        %1073 = vmatpush1.msra.mxu0 0.0
        %1074 = vmatprep.subr.mxu0 0.0
        %1075 = vmatpush1.msra.mxu0 0.0
        %1076 = vmatprep.subr.mxu0 0.0
        %1077 = vmatpush1.msra.mxu0 0.0
        %1078 = vmatprep.subr.mxu0 0.0
        %1079 = vmatpush1.msra.mxu0 0.0
        %1080 = vmatprep.subr.mxu0 0.0
        %1081 = vmatpush1.msra.mxu0 0.0
        %1082 = vmatprep.subr.mxu0 0.0
        %1083 = vmatpush1.msra.mxu0 0.0
        %1084 = vmatprep.subr.mxu0 0.0
        %1085 = vmatpush1.msra.mxu0 0.0
        %1086 = vmatprep.subr.mxu0 0.0
        %1087 = vmatpush1.msra.mxu0 0.0
        %1088 = vmatprep.subr.mxu0 0.0
        %1089 = vmatpush1.msra.mxu0 0.0
        %1090 = vmatprep.subr.mxu0 0.0
        %1091 = vmatpush1.msra.mxu0 0.0
        %1092 = vmatprep.subr.mxu0 0.0
        %1093 = vmatpush1.msra.mxu0 0.0
        %1094 = vmatprep.subr.mxu0 0.0
        %1095 = vmatpush1.msra.mxu0 0.0
        %1096 = vmatprep.subr.mxu0 0.0
        %1097 = vmatpush1.msra.mxu0 0.0
        %1098 = vmatprep.subr.mxu0 0.0
        %1099 = vmatpush1.msra.mxu0 0.0
        %1100 = vmatprep.subr.mxu0 0.0
        %1101 = vmatpush1.msra.mxu0 0.0
        %1102 = vmatprep.subr.mxu0 0.0
        %1103 = vmatpush1.msra.mxu0 0.0
        %1104 = vmatprep.subr.mxu0 0.0
        %1105 = vmatpush1.msra.mxu0 0.0
        %1106 = vmatprep.subr.mxu0 0.0
        %1107 = vmatpush1.msra.mxu0 0.0
        %1108 = vmatprep.mubr.f32.mxu0 0.0
        %v1109 = vand.u32 %v812, 4294901760
        %v1110 = vsub.f32 %v812, %v1109
        %v1111 = vand.u32 %v1110, 4294901760
        %1112 = vmatmul.mubr.f32.gmra.mrb[0].mxu0 %v1111
        %v1113 = vpop.f32.mrb[0].mxu0
        %v1114 = vadd.f32 %v1040, %v1113
        %v1115 = vpop.f32.mrb[0].mxu0
        %1116 = vdwg.mxu0
        %1117 = vmatprep.subr.mxu0 0.0
        %v1118 = vand.u32 %v815, 4294901760
        %v1119 = vsub.f32 %v815, %v1118
        %v1120 = vand.u32 %v1119, 4294901760
        %1121 = vmatpush1.msra.mxu0 %v1120
        %1122 = vmatprep.subr.mxu0 0.0
        %1123 = vmatpush1.msra.mxu0 0.0
        %1124 = vmatprep.subr.mxu0 0.0
        %1125 = vmatpush1.msra.mxu0 0.0
        %1126 = vmatprep.subr.mxu0 0.0
        %1127 = vmatpush1.msra.mxu0 0.0
        %1128 = vmatprep.subr.mxu0 0.0
        %1129 = vmatpush1.msra.mxu0 0.0
        %1130 = vmatprep.subr.mxu0 0.0
        %1131 = vmatpush1.msra.mxu0 0.0
        %1132 = vmatprep.subr.mxu0 0.0
        %1133 = vmatpush1.msra.mxu0 0.0
        %1134 = vmatprep.subr.mxu0 0.0
        %1135 = vmatpush1.msra.mxu0 0.0
        %1136 = vmatprep.subr.mxu0 0.0
        %1137 = vmatpush1.msra.mxu0 0.0
        %1138 = vmatprep.subr.mxu0 0.0
        %1139 = vmatpush1.msra.mxu0 0.0
        %1140 = vmatprep.subr.mxu0 0.0
        %1141 = vmatpush1.msra.mxu0 0.0
        %1142 = vmatprep.subr.mxu0 0.0
        %1143 = vmatpush1.msra.mxu0 0.0
        %1144 = vmatprep.subr.mxu0 0.0
        %1145 = vmatpush1.msra.mxu0 0.0
        %1146 = vmatprep.subr.mxu0 0.0
        %1147 = vmatpush1.msra.mxu0 0.0
        %1148 = vmatprep.subr.mxu0 0.0
        %1149 = vmatpush1.msra.mxu0 0.0
        %1150 = vmatprep.subr.mxu0 0.0
        %1151 = vmatpush1.msra.mxu0 0.0
        %1152 = vmatprep.subr.mxu0 0.0
        %1153 = vmatpush1.msra.mxu0 0.0
        %1154 = vmatprep.subr.mxu0 0.0
        %1155 = vmatpush1.msra.mxu0 0.0
        %1156 = vmatprep.subr.mxu0 0.0
        %1157 = vmatpush1.msra.mxu0 0.0
        %1158 = vmatprep.subr.mxu0 0.0
        %1159 = vmatpush1.msra.mxu0 0.0
        %1160 = vmatprep.subr.mxu0 0.0
        %1161 = vmatpush1.msra.mxu0 0.0
        %1162 = vmatprep.subr.mxu0 0.0
        %1163 = vmatpush1.msra.mxu0 0.0
        %1164 = vmatprep.subr.mxu0 0.0
        %1165 = vmatpush1.msra.mxu0 0.0
        %1166 = vmatprep.subr.mxu0 0.0
        %1167 = vmatpush1.msra.mxu0 0.0
        %1168 = vmatprep.subr.mxu0 0.0
        %1169 = vmatpush1.msra.mxu0 0.0
        %1170 = vmatprep.subr.mxu0 0.0
        %1171 = vmatpush1.msra.mxu0 0.0
        %1172 = vmatprep.subr.mxu0 0.0
        %1173 = vmatpush1.msra.mxu0 0.0
        %1174 = vmatprep.subr.mxu0 0.0
        %1175 = vmatpush1.msra.mxu0 0.0
        %1176 = vmatprep.subr.mxu0 0.0
        %1177 = vmatpush1.msra.mxu0 0.0
        %1178 = vmatprep.subr.mxu0 0.0
        %1179 = vmatpush1.msra.mxu0 0.0
        %1180 = vmatprep.subr.mxu0 0.0
        %1181 = vmatpush1.msra.mxu0 0.0
        %1182 = vmatprep.subr.mxu0 0.0
        %1183 = vmatpush1.msra.mxu0 0.0
        %1184 = vmatprep.mubr.f32.mxu0 0.0
        %v1185 = vand.u32 %v812, 4294901760
        %1186 = vmatmul.mubr.f32.gmra.mrb[0].mxu0 %v1185
        %v1187 = vpop.f32.mrb[0].mxu0
        %v1188 = vadd.f32 %v1114, %v1187
        %v1189 = vpop.f32.mrb[0].mxu0
        %1190 = vdwg.mxu0
        %1191 = vmatprep.subr.mxu0 0.0
        %v1192 = vand.u32 %v815, 4294901760
        %1193 = vmatpush1.msra.mxu0 %v1192
        %1194 = vmatprep.subr.mxu0 0.0
        %1195 = vmatpush1.msra.mxu0 0.0
        %1196 = vmatprep.subr.mxu0 0.0
        %1197 = vmatpush1.msra.mxu0 0.0
        %1198 = vmatprep.subr.mxu0 0.0
        %1199 = vmatpush1.msra.mxu0 0.0
        %1200 = vmatprep.subr.mxu0 0.0
        %1201 = vmatpush1.msra.mxu0 0.0
        %1202 = vmatprep.subr.mxu0 0.0
        %1203 = vmatpush1.msra.mxu0 0.0
        %1204 = vmatprep.subr.mxu0 0.0
        %1205 = vmatpush1.msra.mxu0 0.0
        %1206 = vmatprep.subr.mxu0 0.0
        %1207 = vmatpush1.msra.mxu0 0.0
        %1208 = vmatprep.subr.mxu0 0.0
        %1209 = vmatpush1.msra.mxu0 0.0
        %1210 = vmatprep.subr.mxu0 0.0
        %1211 = vmatpush1.msra.mxu0 0.0
        %1212 = vmatprep.subr.mxu0 0.0
        %1213 = vmatpush1.msra.mxu0 0.0
        %1214 = vmatprep.subr.mxu0 0.0
        %1215 = vmatpush1.msra.mxu0 0.0
        %1216 = vmatprep.subr.mxu0 0.0
        %1217 = vmatpush1.msra.mxu0 0.0
        %1218 = vmatprep.subr.mxu0 0.0
        %1219 = vmatpush1.msra.mxu0 0.0
        %1220 = vmatprep.subr.mxu0 0.0
        %1221 = vmatpush1.msra.mxu0 0.0
        %1222 = vmatprep.subr.mxu0 0.0
        %1223 = vmatpush1.msra.mxu0 0.0
        %1224 = vmatprep.subr.mxu0 0.0
        %1225 = vmatpush1.msra.mxu0 0.0
        %1226 = vmatprep.subr.mxu0 0.0
        %1227 = vmatpush1.msra.mxu0 0.0
        %1228 = vmatprep.subr.mxu0 0.0
        %1229 = vmatpush1.msra.mxu0 0.0
        %1230 = vmatprep.subr.mxu0 0.0
        %1231 = vmatpush1.msra.mxu0 0.0
        %1232 = vmatprep.subr.mxu0 0.0
        %1233 = vmatpush1.msra.mxu0 0.0
        %1234 = vmatprep.subr.mxu0 0.0
        %1235 = vmatpush1.msra.mxu0 0.0
        %1236 = vmatprep.subr.mxu0 0.0
        %1237 = vmatpush1.msra.mxu0 0.0
        %1238 = vmatprep.subr.mxu0 0.0
        %1239 = vmatpush1.msra.mxu0 0.0
        %1240 = vmatprep.subr.mxu0 0.0
        %1241 = vmatpush1.msra.mxu0 0.0
        %1242 = vmatprep.subr.mxu0 0.0
        %1243 = vmatpush1.msra.mxu0 0.0
        %1244 = vmatprep.subr.mxu0 0.0
        %1245 = vmatpush1.msra.mxu0 0.0
        %1246 = vmatprep.subr.mxu0 0.0
        %1247 = vmatpush1.msra.mxu0 0.0
        %1248 = vmatprep.subr.mxu0 0.0
        %1249 = vmatpush1.msra.mxu0 0.0
        %1250 = vmatprep.subr.mxu0 0.0
        %1251 = vmatpush1.msra.mxu0 0.0
        %1252 = vmatprep.subr.mxu0 0.0
        %1253 = vmatpush1.msra.mxu0 0.0
        %1254 = vmatprep.subr.mxu0 0.0
        %1255 = vmatpush1.msra.mxu0 0.0
        %1256 = vmatprep.mubr.f32.mxu0 0.0
        %v1257 = vand.u32 %v812, 4294901760
        %1258 = vmatmul.mubr.f32.gmra.mrb[0].mxu0 %v1257
        %v1259 = vpop.f32.mrb[0].mxu0
        %v1260 = vadd.f32 %v1188, %v1259
        %v1261 = vpop.f32.mrb[0].mxu0
        %1262 = vdwg.mxu0
        %v1263 = vld [vmem:[%s5] sm:$0xf]
        %1265 = vset.pattern.permute.xlu0 0
        %1266 = vperm.xlu0 %1265, %v1263
        %v1267 = vpop.permute.xlu0 %1266
        %v1269 = vadd.f32 %v1260, %v1267
        %v1270 = vmax.f32 %v1269, 0.0
        %v1271 = vld [vmem:[%s4] sm:$0xf]
        %v1272 = vld [vmem:[%s6] sm:$0xf]
        %1274 = vset.pattern.permute.xlu0 0
        %1275 = vperm.xlu0 %1274, %v1272
        %v1276 = vpop.permute.xlu0 %1275
        %v1279 = vsel %vm357, %v1271, 0
        %v1282 = vsel %vm361, %v1270, 0
        %1284 = vmatprep.subr.mxu0 0.0
        %v1285 = vand.u32 %v1282, 4294901760
        %1286 = vmatpush1.msra.mxu0 %v1285
        %1287 = vmatprep.subr.mxu0 0.0
        %1288 = vmatpush1.msra.mxu0 0.0
        %1289 = vmatprep.subr.mxu0 0.0
        %1290 = vmatpush1.msra.mxu0 0.0
        %1291 = vmatprep.subr.mxu0 0.0
        %1292 = vmatpush1.msra.mxu0 0.0
        %1293 = vmatprep.subr.mxu0 0.0
        %1294 = vmatpush1.msra.mxu0 0.0
        %1295 = vmatprep.subr.mxu0 0.0
        %1296 = vmatpush1.msra.mxu0 0.0
        %1297 = vmatprep.subr.mxu0 0.0
        %1298 = vmatpush1.msra.mxu0 0.0
        %1299 = vmatprep.subr.mxu0 0.0
        %1300 = vmatpush1.msra.mxu0 0.0
        %1301 = vmatprep.subr.mxu0 0.0
        %1302 = vmatpush1.msra.mxu0 0.0
        %1303 = vmatprep.subr.mxu0 0.0
        %1304 = vmatpush1.msra.mxu0 0.0
        %1305 = vmatprep.subr.mxu0 0.0
        %1306 = vmatpush1.msra.mxu0 0.0
        %1307 = vmatprep.subr.mxu0 0.0
        %1308 = vmatpush1.msra.mxu0 0.0
        %1309 = vmatprep.subr.mxu0 0.0
        %1310 = vmatpush1.msra.mxu0 0.0
        %1311 = vmatprep.subr.mxu0 0.0
        %1312 = vmatpush1.msra.mxu0 0.0
        %1313 = vmatprep.subr.mxu0 0.0
        %1314 = vmatpush1.msra.mxu0 0.0
        %1315 = vmatprep.subr.mxu0 0.0
        %1316 = vmatpush1.msra.mxu0 0.0
        %1317 = vmatprep.subr.mxu0 0.0
        %1318 = vmatpush1.msra.mxu0 0.0
        %1319 = vmatprep.subr.mxu0 0.0
        %1320 = vmatpush1.msra.mxu0 0.0
        %1321 = vmatprep.subr.mxu0 0.0
        %1322 = vmatpush1.msra.mxu0 0.0
        %1323 = vmatprep.subr.mxu0 0.0
        %1324 = vmatpush1.msra.mxu0 0.0
        %1325 = vmatprep.subr.mxu0 0.0
        %1326 = vmatpush1.msra.mxu0 0.0
        %1327 = vmatprep.subr.mxu0 0.0
        %1328 = vmatpush1.msra.mxu0 0.0
        %1329 = vmatprep.subr.mxu0 0.0
        %1330 = vmatpush1.msra.mxu0 0.0
        %1331 = vmatprep.subr.mxu0 0.0
        %1332 = vmatpush1.msra.mxu0 0.0
        %1333 = vmatprep.subr.mxu0 0.0
        %1334 = vmatpush1.msra.mxu0 0.0
        %1335 = vmatprep.subr.mxu0 0.0
        %1336 = vmatpush1.msra.mxu0 0.0
        %1337 = vmatprep.subr.mxu0 0.0
        %1338 = vmatpush1.msra.mxu0 0.0
        %1339 = vmatprep.subr.mxu0 0.0
        %1340 = vmatpush1.msra.mxu0 0.0
        %1341 = vmatprep.subr.mxu0 0.0
        %1342 = vmatpush1.msra.mxu0 0.0
        %1343 = vmatprep.subr.mxu0 0.0
        %1344 = vmatpush1.msra.mxu0 0.0
        %1345 = vmatprep.subr.mxu0 0.0
        %1346 = vmatpush1.msra.mxu0 0.0
        %1347 = vmatprep.subr.mxu0 0.0
        %1348 = vmatpush1.msra.mxu0 0.0
        %1349 = vmatprep.mubr.f32.mxu0 0.0
        %v1350 = vand.u32 %v1279, 4294901760
        %v1351 = vsub.f32 %v1279, %v1350
        %v1352 = vand.u32 %v1351, 4294901760
        %v1353 = vsub.f32 %v1351, %v1352
        %v1354 = vand.u32 %v1353, 4294901760
        %1355 = vmatmul.mubr.f32.gmra.mrb[0].mxu0 %v1354
        %v1356 = vpop.f32.mrb[0].mxu0
        %v1357 = vadd.f32 %v1276, %v1356
        %v1358 = vpop.f32.mrb[0].mxu0
        %1359 = vdwg.mxu0
        %1360 = vmatprep.subr.mxu0 0.0
        %v1361 = vand.u32 %v1282, 4294901760
        %v1362 = vsub.f32 %v1282, %v1361
        %v1363 = vand.u32 %v1362, 4294901760
        %v1364 = vsub.f32 %v1362, %v1363
        %v1365 = vand.u32 %v1364, 4294901760
        %1366 = vmatpush1.msra.mxu0 %v1365
        %1367 = vmatprep.subr.mxu0 0.0
        %1368 = vmatpush1.msra.mxu0 0.0
        %1369 = vmatprep.subr.mxu0 0.0
        %1370 = vmatpush1.msra.mxu0 0.0
        %1371 = vmatprep.subr.mxu0 0.0
        %1372 = vmatpush1.msra.mxu0 0.0
        %1373 = vmatprep.subr.mxu0 0.0
        %1374 = vmatpush1.msra.mxu0 0.0
        %1375 = vmatprep.subr.mxu0 0.0
        %1376 = vmatpush1.msra.mxu0 0.0
        %1377 = vmatprep.subr.mxu0 0.0
        %1378 = vmatpush1.msra.mxu0 0.0
        %1379 = vmatprep.subr.mxu0 0.0
        %1380 = vmatpush1.msra.mxu0 0.0
        %1381 = vmatprep.subr.mxu0 0.0
        %1382 = vmatpush1.msra.mxu0 0.0
        %1383 = vmatprep.subr.mxu0 0.0
        %1384 = vmatpush1.msra.mxu0 0.0
        %1385 = vmatprep.subr.mxu0 0.0
        %1386 = vmatpush1.msra.mxu0 0.0
        %1387 = vmatprep.subr.mxu0 0.0
        %1388 = vmatpush1.msra.mxu0 0.0
        %1389 = vmatprep.subr.mxu0 0.0
        %1390 = vmatpush1.msra.mxu0 0.0
        %1391 = vmatprep.subr.mxu0 0.0
        %1392 = vmatpush1.msra.mxu0 0.0
        %1393 = vmatprep.subr.mxu0 0.0
        %1394 = vmatpush1.msra.mxu0 0.0
        %1395 = vmatprep.subr.mxu0 0.0
        %1396 = vmatpush1.msra.mxu0 0.0
        %1397 = vmatprep.subr.mxu0 0.0
        %1398 = vmatpush1.msra.mxu0 0.0
        %1399 = vmatprep.subr.mxu0 0.0
        %1400 = vmatpush1.msra.mxu0 0.0
        %1401 = vmatprep.subr.mxu0 0.0
        %1402 = vmatpush1.msra.mxu0 0.0
        %1403 = vmatprep.subr.mxu0 0.0
        %1404 = vmatpush1.msra.mxu0 0.0
        %1405 = vmatprep.subr.mxu0 0.0
        %1406 = vmatpush1.msra.mxu0 0.0
        %1407 = vmatprep.subr.mxu0 0.0
        %1408 = vmatpush1.msra.mxu0 0.0
        %1409 = vmatprep.subr.mxu0 0.0
        %1410 = vmatpush1.msra.mxu0 0.0
        %1411 = vmatprep.subr.mxu0 0.0
        %1412 = vmatpush1.msra.mxu0 0.0
        %1413 = vmatprep.subr.mxu0 0.0
        %1414 = vmatpush1.msra.mxu0 0.0
        %1415 = vmatprep.subr.mxu0 0.0
        %1416 = vmatpush1.msra.mxu0 0.0
        %1417 = vmatprep.subr.mxu0 0.0
        %1418 = vmatpush1.msra.mxu0 0.0
        %1419 = vmatprep.subr.mxu0 0.0
        %1420 = vmatpush1.msra.mxu0 0.0
        %1421 = vmatprep.subr.mxu0 0.0
        %1422 = vmatpush1.msra.mxu0 0.0
        %1423 = vmatprep.subr.mxu0 0.0
        %1424 = vmatpush1.msra.mxu0 0.0
        %1425 = vmatprep.subr.mxu0 0.0
        %1426 = vmatpush1.msra.mxu0 0.0
        %1427 = vmatprep.subr.mxu0 0.0
        %1428 = vmatpush1.msra.mxu0 0.0
        %1429 = vmatprep.mubr.f32.mxu0 0.0
        %v1430 = vand.u32 %v1279, 4294901760
        %1431 = vmatmul.mubr.f32.gmra.mrb[0].mxu0 %v1430
        %v1432 = vpop.f32.mrb[0].mxu0
        %v1433 = vadd.f32 %v1357, %v1432
        %v1434 = vpop.f32.mrb[0].mxu0
        %1435 = vdwg.mxu0
        %1436 = vmatprep.subr.mxu0 0.0
        %v1437 = vand.u32 %v1282, 4294901760
        %v1438 = vsub.f32 %v1282, %v1437
        %1439 = vmatpush1.msra.mxu0 %v1438
        %1440 = vmatprep.subr.mxu0 0.0
        %1441 = vmatpush1.msra.mxu0 0.0
        %1442 = vmatprep.subr.mxu0 0.0
        %1443 = vmatpush1.msra.mxu0 0.0
        %1444 = vmatprep.subr.mxu0 0.0
        %1445 = vmatpush1.msra.mxu0 0.0
        %1446 = vmatprep.subr.mxu0 0.0
        %1447 = vmatpush1.msra.mxu0 0.0
        %1448 = vmatprep.subr.mxu0 0.0
        %1449 = vmatpush1.msra.mxu0 0.0
        %1450 = vmatprep.subr.mxu0 0.0
        %1451 = vmatpush1.msra.mxu0 0.0
        %1452 = vmatprep.subr.mxu0 0.0
        %1453 = vmatpush1.msra.mxu0 0.0
        %1454 = vmatprep.subr.mxu0 0.0
        %1455 = vmatpush1.msra.mxu0 0.0
        %1456 = vmatprep.subr.mxu0 0.0
        %1457 = vmatpush1.msra.mxu0 0.0
        %1458 = vmatprep.subr.mxu0 0.0
        %1459 = vmatpush1.msra.mxu0 0.0
        %1460 = vmatprep.subr.mxu0 0.0
        %1461 = vmatpush1.msra.mxu0 0.0
        %1462 = vmatprep.subr.mxu0 0.0
        %1463 = vmatpush1.msra.mxu0 0.0
        %1464 = vmatprep.subr.mxu0 0.0
        %1465 = vmatpush1.msra.mxu0 0.0
        %1466 = vmatprep.subr.mxu0 0.0
        %1467 = vmatpush1.msra.mxu0 0.0
        %1468 = vmatprep.subr.mxu0 0.0
        %1469 = vmatpush1.msra.mxu0 0.0
        %1470 = vmatprep.subr.mxu0 0.0
        %1471 = vmatpush1.msra.mxu0 0.0
        %1472 = vmatprep.subr.mxu0 0.0
        %1473 = vmatpush1.msra.mxu0 0.0
        %1474 = vmatprep.subr.mxu0 0.0
        %1475 = vmatpush1.msra.mxu0 0.0
        %1476 = vmatprep.subr.mxu0 0.0
        %1477 = vmatpush1.msra.mxu0 0.0
        %1478 = vmatprep.subr.mxu0 0.0
        %1479 = vmatpush1.msra.mxu0 0.0
        %1480 = vmatprep.subr.mxu0 0.0
        %1481 = vmatpush1.msra.mxu0 0.0
        %1482 = vmatprep.subr.mxu0 0.0
        %1483 = vmatpush1.msra.mxu0 0.0
        %1484 = vmatprep.subr.mxu0 0.0
        %1485 = vmatpush1.msra.mxu0 0.0
        %1486 = vmatprep.subr.mxu0 0.0
        %1487 = vmatpush1.msra.mxu0 0.0
        %1488 = vmatprep.subr.mxu0 0.0
        %1489 = vmatpush1.msra.mxu0 0.0
        %1490 = vmatprep.subr.mxu0 0.0
        %1491 = vmatpush1.msra.mxu0 0.0
        %1492 = vmatprep.subr.mxu0 0.0
        %1493 = vmatpush1.msra.mxu0 0.0
        %1494 = vmatprep.subr.mxu0 0.0
        %1495 = vmatpush1.msra.mxu0 0.0
        %1496 = vmatprep.subr.mxu0 0.0
        %1497 = vmatpush1.msra.mxu0 0.0
        %1498 = vmatprep.subr.mxu0 0.0
        %1499 = vmatpush1.msra.mxu0 0.0
        %1500 = vmatprep.subr.mxu0 0.0
        %1501 = vmatpush1.msra.mxu0 0.0
        %1502 = vmatprep.mubr.f32.mxu0 0.0
        %v1503 = vand.u32 %v1279, 4294901760
        %v1504 = vsub.f32 %v1279, %v1503
        %1505 = vmatmul.mubr.f32.gmra.mrb[0].mxu0 %v1504
        %v1506 = vpop.f32.mrb[0].mxu0
        %v1507 = vadd.f32 %v1433, %v1506
        %v1508 = vpop.f32.mrb[0].mxu0
        %1509 = vdwg.mxu0
        %1510 = vmatprep.subr.mxu0 0.0
        %v1511 = vand.u32 %v1282, 4294901760
        %1512 = vmatpush1.msra.mxu0 %v1511
        %1513 = vmatprep.subr.mxu0 0.0
        %1514 = vmatpush1.msra.mxu0 0.0
        %1515 = vmatprep.subr.mxu0 0.0
        %1516 = vmatpush1.msra.mxu0 0.0
        %1517 = vmatprep.subr.mxu0 0.0
        %1518 = vmatpush1.msra.mxu0 0.0
        %1519 = vmatprep.subr.mxu0 0.0
        %1520 = vmatpush1.msra.mxu0 0.0
        %1521 = vmatprep.subr.mxu0 0.0
        %1522 = vmatpush1.msra.mxu0 0.0
        %1523 = vmatprep.subr.mxu0 0.0
        %1524 = vmatpush1.msra.mxu0 0.0
        %1525 = vmatprep.subr.mxu0 0.0
        %1526 = vmatpush1.msra.mxu0 0.0
        %1527 = vmatprep.subr.mxu0 0.0
        %1528 = vmatpush1.msra.mxu0 0.0
        %1529 = vmatprep.subr.mxu0 0.0
        %1530 = vmatpush1.msra.mxu0 0.0
        %1531 = vmatprep.subr.mxu0 0.0
        %1532 = vmatpush1.msra.mxu0 0.0
        %1533 = vmatprep.subr.mxu0 0.0
        %1534 = vmatpush1.msra.mxu0 0.0
        %1535 = vmatprep.subr.mxu0 0.0
        %1536 = vmatpush1.msra.mxu0 0.0
        %1537 = vmatprep.subr.mxu0 0.0
        %1538 = vmatpush1.msra.mxu0 0.0
        %1539 = vmatprep.subr.mxu0 0.0
        %1540 = vmatpush1.msra.mxu0 0.0
        %1541 = vmatprep.subr.mxu0 0.0
        %1542 = vmatpush1.msra.mxu0 0.0
        %1543 = vmatprep.subr.mxu0 0.0
        %1544 = vmatpush1.msra.mxu0 0.0
        %1545 = vmatprep.subr.mxu0 0.0
        %1546 = vmatpush1.msra.mxu0 0.0
        %1547 = vmatprep.subr.mxu0 0.0
        %1548 = vmatpush1.msra.mxu0 0.0
        %1549 = vmatprep.subr.mxu0 0.0
        %1550 = vmatpush1.msra.mxu0 0.0
        %1551 = vmatprep.subr.mxu0 0.0
        %1552 = vmatpush1.msra.mxu0 0.0
        %1553 = vmatprep.subr.mxu0 0.0
        %1554 = vmatpush1.msra.mxu0 0.0
        %1555 = vmatprep.subr.mxu0 0.0
        %1556 = vmatpush1.msra.mxu0 0.0
        %1557 = vmatprep.subr.mxu0 0.0
        %1558 = vmatpush1.msra.mxu0 0.0
        %1559 = vmatprep.subr.mxu0 0.0
        %1560 = vmatpush1.msra.mxu0 0.0
        %1561 = vmatprep.subr.mxu0 0.0
        %1562 = vmatpush1.msra.mxu0 0.0
        %1563 = vmatprep.subr.mxu0 0.0
        %1564 = vmatpush1.msra.mxu0 0.0
        %1565 = vmatprep.subr.mxu0 0.0
        %1566 = vmatpush1.msra.mxu0 0.0
        %1567 = vmatprep.subr.mxu0 0.0
        %1568 = vmatpush1.msra.mxu0 0.0
        %1569 = vmatprep.subr.mxu0 0.0
        %1570 = vmatpush1.msra.mxu0 0.0
        %1571 = vmatprep.subr.mxu0 0.0
        %1572 = vmatpush1.msra.mxu0 0.0
        %1573 = vmatprep.subr.mxu0 0.0
        %1574 = vmatpush1.msra.mxu0 0.0
        %1575 = vmatprep.mubr.f32.mxu0 0.0
        %v1576 = vand.u32 %v1279, 4294901760
        %v1577 = vsub.f32 %v1279, %v1576
        %v1578 = vand.u32 %v1577, 4294901760
        %1579 = vmatmul.mubr.f32.gmra.mrb[0].mxu0 %v1578
        %v1580 = vpop.f32.mrb[0].mxu0
        %v1581 = vadd.f32 %v1507, %v1580
        %v1582 = vpop.f32.mrb[0].mxu0
        %1583 = vdwg.mxu0
        %1584 = vmatprep.subr.mxu0 0.0
        %v1585 = vand.u32 %v1282, 4294901760
        %v1586 = vsub.f32 %v1282, %v1585
        %v1587 = vand.u32 %v1586, 4294901760
        %1588 = vmatpush1.msra.mxu0 %v1587
        %1589 = vmatprep.subr.mxu0 0.0
        %1590 = vmatpush1.msra.mxu0 0.0
        %1591 = vmatprep.subr.mxu0 0.0
        %1592 = vmatpush1.msra.mxu0 0.0
        %1593 = vmatprep.subr.mxu0 0.0
        %1594 = vmatpush1.msra.mxu0 0.0
        %1595 = vmatprep.subr.mxu0 0.0
        %1596 = vmatpush1.msra.mxu0 0.0
        %1597 = vmatprep.subr.mxu0 0.0
        %1598 = vmatpush1.msra.mxu0 0.0
        %1599 = vmatprep.subr.mxu0 0.0
        %1600 = vmatpush1.msra.mxu0 0.0
        %1601 = vmatprep.subr.mxu0 0.0
        %1602 = vmatpush1.msra.mxu0 0.0
        %1603 = vmatprep.subr.mxu0 0.0
        %1604 = vmatpush1.msra.mxu0 0.0
        %1605 = vmatprep.subr.mxu0 0.0
        %1606 = vmatpush1.msra.mxu0 0.0
        %1607 = vmatprep.subr.mxu0 0.0
        %1608 = vmatpush1.msra.mxu0 0.0
        %1609 = vmatprep.subr.mxu0 0.0
        %1610 = vmatpush1.msra.mxu0 0.0
        %1611 = vmatprep.subr.mxu0 0.0
        %1612 = vmatpush1.msra.mxu0 0.0
        %1613 = vmatprep.subr.mxu0 0.0
        %1614 = vmatpush1.msra.mxu0 0.0
        %1615 = vmatprep.subr.mxu0 0.0
        %1616 = vmatpush1.msra.mxu0 0.0
        %1617 = vmatprep.subr.mxu0 0.0
        %1618 = vmatpush1.msra.mxu0 0.0
        %1619 = vmatprep.subr.mxu0 0.0
        %1620 = vmatpush1.msra.mxu0 0.0
        %1621 = vmatprep.subr.mxu0 0.0
        %1622 = vmatpush1.msra.mxu0 0.0
        %1623 = vmatprep.subr.mxu0 0.0
        %1624 = vmatpush1.msra.mxu0 0.0
        %1625 = vmatprep.subr.mxu0 0.0
        %1626 = vmatpush1.msra.mxu0 0.0
        %1627 = vmatprep.subr.mxu0 0.0
        %1628 = vmatpush1.msra.mxu0 0.0
        %1629 = vmatprep.subr.mxu0 0.0
        %1630 = vmatpush1.msra.mxu0 0.0
        %1631 = vmatprep.subr.mxu0 0.0
        %1632 = vmatpush1.msra.mxu0 0.0
        %1633 = vmatprep.subr.mxu0 0.0
        %1634 = vmatpush1.msra.mxu0 0.0
        %1635 = vmatprep.subr.mxu0 0.0
        %1636 = vmatpush1.msra.mxu0 0.0
        %1637 = vmatprep.subr.mxu0 0.0
        %1638 = vmatpush1.msra.mxu0 0.0
        %1639 = vmatprep.subr.mxu0 0.0
        %1640 = vmatpush1.msra.mxu0 0.0
        %1641 = vmatprep.subr.mxu0 0.0
        %1642 = vmatpush1.msra.mxu0 0.0
        %1643 = vmatprep.subr.mxu0 0.0
        %1644 = vmatpush1.msra.mxu0 0.0
        %1645 = vmatprep.subr.mxu0 0.0
        %1646 = vmatpush1.msra.mxu0 0.0
        %1647 = vmatprep.subr.mxu0 0.0
        %1648 = vmatpush1.msra.mxu0 0.0
        %1649 = vmatprep.subr.mxu0 0.0
        %1650 = vmatpush1.msra.mxu0 0.0
        %1651 = vmatprep.mubr.f32.mxu0 0.0
        %v1652 = vand.u32 %v1279, 4294901760
        %1653 = vmatmul.mubr.f32.gmra.mrb[0].mxu0 %v1652
        %v1654 = vpop.f32.mrb[0].mxu0
        %v1655 = vadd.f32 %v1581, %v1654
        %v1656 = vpop.f32.mrb[0].mxu0
        %1657 = vdwg.mxu0
        %1658 = vmatprep.subr.mxu0 0.0
        %v1659 = vand.u32 %v1282, 4294901760
        %1660 = vmatpush1.msra.mxu0 %v1659
        %1661 = vmatprep.subr.mxu0 0.0
        %1662 = vmatpush1.msra.mxu0 0.0
        %1663 = vmatprep.subr.mxu0 0.0
        %1664 = vmatpush1.msra.mxu0 0.0
        %1665 = vmatprep.subr.mxu0 0.0
        %1666 = vmatpush1.msra.mxu0 0.0
        %1667 = vmatprep.subr.mxu0 0.0
        %1668 = vmatpush1.msra.mxu0 0.0
        %1669 = vmatprep.subr.mxu0 0.0
        %1670 = vmatpush1.msra.mxu0 0.0
        %1671 = vmatprep.subr.mxu0 0.0
        %1672 = vmatpush1.msra.mxu0 0.0
        %1673 = vmatprep.subr.mxu0 0.0
        %1674 = vmatpush1.msra.mxu0 0.0
        %1675 = vmatprep.subr.mxu0 0.0
        %1676 = vmatpush1.msra.mxu0 0.0
        %1677 = vmatprep.subr.mxu0 0.0
        %1678 = vmatpush1.msra.mxu0 0.0
        %1679 = vmatprep.subr.mxu0 0.0
        %1680 = vmatpush1.msra.mxu0 0.0
        %1681 = vmatprep.subr.mxu0 0.0
        %1682 = vmatpush1.msra.mxu0 0.0
        %1683 = vmatprep.subr.mxu0 0.0
        %1684 = vmatpush1.msra.mxu0 0.0
        %1685 = vmatprep.subr.mxu0 0.0
        %1686 = vmatpush1.msra.mxu0 0.0
        %1687 = vmatprep.subr.mxu0 0.0
        %1688 = vmatpush1.msra.mxu0 0.0
        %1689 = vmatprep.subr.mxu0 0.0
        %1690 = vmatpush1.msra.mxu0 0.0
        %1691 = vmatprep.subr.mxu0 0.0
        %1692 = vmatpush1.msra.mxu0 0.0
        %1693 = vmatprep.subr.mxu0 0.0
        %1694 = vmatpush1.msra.mxu0 0.0
        %1695 = vmatprep.subr.mxu0 0.0
        %1696 = vmatpush1.msra.mxu0 0.0
        %1697 = vmatprep.subr.mxu0 0.0
        %1698 = vmatpush1.msra.mxu0 0.0
        %1699 = vmatprep.subr.mxu0 0.0
        %1700 = vmatpush1.msra.mxu0 0.0
        %1701 = vmatprep.subr.mxu0 0.0
        %1702 = vmatpush1.msra.mxu0 0.0
        %1703 = vmatprep.subr.mxu0 0.0
        %1704 = vmatpush1.msra.mxu0 0.0
        %1705 = vmatprep.subr.mxu0 0.0
        %1706 = vmatpush1.msra.mxu0 0.0
        %1707 = vmatprep.subr.mxu0 0.0
        %1708 = vmatpush1.msra.mxu0 0.0
        %1709 = vmatprep.subr.mxu0 0.0
        %1710 = vmatpush1.msra.mxu0 0.0
        %1711 = vmatprep.subr.mxu0 0.0
        %1712 = vmatpush1.msra.mxu0 0.0
        %1713 = vmatprep.subr.mxu0 0.0
        %1714 = vmatpush1.msra.mxu0 0.0
        %1715 = vmatprep.subr.mxu0 0.0
        %1716 = vmatpush1.msra.mxu0 0.0
        %1717 = vmatprep.subr.mxu0 0.0
        %1718 = vmatpush1.msra.mxu0 0.0
        %1719 = vmatprep.subr.mxu0 0.0
        %1720 = vmatpush1.msra.mxu0 0.0
        %1721 = vmatprep.subr.mxu0 0.0
        %1722 = vmatpush1.msra.mxu0 0.0
        %1723 = vmatprep.mubr.f32.mxu0 0.0
        %v1724 = vand.u32 %v1279, 4294901760
        %1725 = vmatmul.mubr.f32.gmra.mrb[0].mxu0 %v1724
        %v1726 = vpop.f32.mrb[0].mxu0
        %v1727 = vadd.f32 %v1655, %v1726
        %v1728 = vpop.f32.mrb[0].mxu0
        %1729 = vdwg.mxu0
        %v1730 = vmul.f32 %v1727, 0.5
        %v1731 = vtanh.pop %v1730
        %v1732 = vmul.f32 %v1731, 0.5
        %v1733 = vadd.f32 %v1732, 1.5
        %v1734 = vmul.f32 %v353, %v1733
        %1735 = vst [vmem:[%s352] sm:$0xf] %v1734
        %s1736 = sand.u32 %s210, 1
        %s1737 = scalar_lea.sflag [#allocation4], %s1736
        %s1738 = sand.u32 %s210, 1
        %s1739 = smul.addr %s1738, 4
        %s1740 = scalar_lea.vmem [#allocation7], %s1739
        // Predicated region
        $region57: #{tpu_custom_call.1} parent=47 // pred_check
          %p1741 = pneg %p220
        $region58: #{tpu_custom_call.1} parent=47 // pred_check_branch
          %1743 = sbr.rel (%p1741) target = $region60
        $region59: #{tpu_custom_call.1} parent=47 // pred_region
          %s1745 = ssub.s32 64, 64
          %1746 = vsyncadd %s1737, %s1745
          %s1747 = smul.addr %s31, 2
          %s1748 = sadd.s32 %s32, %s1747
          %s1749 = smul.addr %s1748, 64
          %s1750 = scalar_lea.hbm %s7, %s1749
          %s1752 = sshll.u32 %s1740, 4
          %s1753 = int_to_ptr.vmem [resolvable:$true] %s1752
          %1755 = dma.vmem_to_hbm [thread:$0]  %s1753, 64, %s1750, %s1737
        $region60: #{tpu_custom_call.1} parent=47 // pred_fallthru
          _
      $region48: #{tpu_custom_call.1} parent=5 // pred_fallthru
        _
      %p1756 = scmp.le.s32.totalorder 2, %s22
      // Predicated region
      $region61: #{tpu_custom_call.1} parent=5 // pred_check
        %p1757 = pneg %p1756
      $region62: #{tpu_custom_call.1} parent=5 // pred_check_branch
        %1759 = sbr.rel (%p1757) target = $region64
      $region63: #{tpu_custom_call.1} parent=5 // pred_region
        %s1760 = ssub.s32 %s22, 2
        // Predicated region
        $region65: #{tpu_custom_call.1} parent=63 // pred_check
          %p1761 = pneg %p226
        $region66: #{tpu_custom_call.1} parent=63 // pred_check_branch
          %1763 = sbr.rel (%p1761) target = $region68
        $region67: #{tpu_custom_call.1} parent=63 // pred_region
          %s1764 = sand.u32 %s211, 1
          %s1765 = scalar_lea.sflag [#allocation4], %s1764
          %s1766 = sand.u32 %s211, 1
          %s1767 = smul.addr %s1766, 4
          %s1768 = scalar_lea.vmem [#allocation7], %s1767
          %1769 = dma.done %s1765, 64
        $region68: #{tpu_custom_call.1} parent=63 // pred_fallthru
          _
      $region64: #{tpu_custom_call.1} parent=5 // pred_fallthru
        _
    $region6: #{tpu_custom_call.1} parent=1 // loop_footer
      %s26 = sadd.s32 1, %s22
    $region7: #{tpu_custom_call.1} parent=1 // loop_footer_branch
      %21 = sbr.rel target = $region3
    $region8: #{tpu_custom_call.1} parent=1 // loop_exit
      _
    %1770 = vsyncpa [#allocation3], 1
    %s1771 = scalar_lea.sflag [#allocation3], 1
    %1772 = vsyncpa %s1771, 1
    %1773 = vsyncpa [#allocation6], 1
    %s1774 = scalar_lea.sflag [#allocation6], 1
    %1775 = vsyncpa %s1774, 1
    %1776 = vsyncpa [#allocation4], 1
    %s1777 = scalar_lea.sflag [#allocation4], 1
    %1778 = vsyncpa %s1777, 1

// kernel: tpu_custom_call.1
$region0: #{tpu_custom_call.1}
  #allocation0 [shape = 'u32[]', space=smem, size = 0x4, offset = 0x4, fixed_abs, tag = 'smem constant byte address 0x4 - core index']
  #allocation1 [shape = 'u32[144,128]{1,0:T(1,128)}', space=vmem, size = 0x12000, scoped, tag = 'internal scratch']
  %s0 = inlined_call_operand.hbm [shape: f32[2,4,256], index: 0, kind: input, shape index: {}]
  %s1 = inlined_call_operand.hbm [shape: f32[2,4,256], index: 1, kind: input, shape index: {}]
  %s2 = inlined_call_operand.vmem [shape: f32[4,4], index: 2, kind: input, shape index: {}]
  %s3 = inlined_call_operand.vmem [shape: f32[4,4], index: 3, kind: input, shape index: {}]
  %s4 = inlined_call_operand.vmem [shape: f32[4,4], index: 4, kind: input, shape index: {}]
  %s5 = inlined_call_operand.vmem [shape: f32[4,1], index: 5, kind: input, shape index: {}]
  %s6 = inlined_call_operand.vmem [shape: f32[4,1], index: 6, kind: input, shape index: {}]
  %s7 = inlined_call_operand.hbm [shape: f32[2,4,256], index: 7, kind: output, shape index: {}]
  %s8 = sld [smem:[#allocation0]]
  $region69: #{tpu_custom_call.1} parent=0
    _
  %s10 = ssub.s32 1, %s8
  %s11 = scalar_select 0, %s10, %s8
  $region1: #{tpu_custom_call.1} parent=0
    #allocation2 [shape = 'u8[4096]{0}', space=vmem, size = 0x1000, scoped, tag = 'input window, operand 0']
    #allocation3 [shape = 's32[2]{0}', space=sflag, size = 0x8, scoped, tag = 'scoped memory for tpu_custom_call.1']
    #allocation4 [shape = 's32[2]{0}', space=sflag, size = 0x8, scoped, tag = 'scoped memory for tpu_custom_call.1']
    #allocation5 [shape = 'u8[4096]{0}', space=vmem, size = 0x1000, scoped, tag = 'input window, operand 1']
    #allocation6 [shape = 's32[2]{0}', space=sflag, size = 0x8, scoped, tag = 'scoped memory for tpu_custom_call.1']
    #allocation7 [shape = 'u8[4096]{0}', space=vmem, size = 0x1000, scoped, tag = 'output window, operand 0']
    %12 = vsyncpa [#allocation3], 0
    %s13 = scalar_lea.sflag [#allocation3], 1
    %14 = vsyncpa %s13, 0
    %15 = vsyncpa [#allocation6], 0
    %s16 = scalar_lea.sflag [#allocation6], 1
    %17 = vsyncpa %s16, 0
    %18 = vsyncpa [#allocation4], 0
    %s19 = scalar_lea.sflag [#allocation4], 1
    %20 = vsyncpa %s19, 0
    loop: start=0, step=1, limit=6
    $region2: #{tpu_custom_call.1} parent=1 // loop_pre_header
      _
    $region3: #{tpu_custom_call.1} parent=1 // loop_header
      %s22 = sphi 0, %s26
      %p23 = scmp.ge.s32.totalorder %s22, 6
      %s29 = sphi 0, %s41
      %s30 = sphi 0, %s37
      %s31 = sphi 0, %s29
      %s32 = sphi 0, %s30
      %s33 = sphi 0, %s31
      %s34 = sphi 0, %s32
      %s46 = sphi 0, %s48
      %s49 = sphi 0, %s46
      %s50 = sphi 0, %s49
      %s66 = sphi 0, %s50
      %s74 = sphi 0, %s76
      %s77 = sphi 0, %s74
      %s78 = sphi 0, %s77
      %s94 = sphi 0, %s78
      %s98 = sphi 0, %s98
      %s100 = sphi 0, %s98
      %s101 = sphi 0, %s100
      %s115 = sphi 0, %s101
      %s119 = sphi 0, %s119
      %s121 = sphi 0, %s119
      %s122 = sphi 0, %s121
      %s136 = sphi 0, %s122
      %s140 = sphi 0, %s140
      %s142 = sphi 0, %s140
      %s143 = sphi 0, %s142
      %s157 = sphi 0, %s143
      %s161 = sphi 0, %s161
      %s163 = sphi 0, %s161
      %s164 = sphi 0, %s163
      %s178 = sphi 0, %s164
      %s182 = sphi 0, %s182
      %s184 = sphi 0, %s182
      %s185 = sphi 0, %s184
      %s199 = sphi 0, %s185
      %s207 = sphi 0, %s209
      %s210 = sphi 0, %s207
      %s211 = sphi 0, %s210
      %s227 = sphi 0, %s211
    $region4: #{tpu_custom_call.1} parent=1 // loop_header_branch
      %25 = sbr.rel (%p23) target = $region8
    $region5: #{tpu_custom_call.1} parent=1 // loop_body
      %s27 = ssub.s32 %s22, 1
      %s28 = ssub.s32 %s22, 2
      %s35 = sadd.s32 1, %s30
      %p36 = scmp.ge.s32.totalorder %s35, 2
      %s37 = scalar_select %p36, 0, %s35
      %s38 = sadd.s32 1, %s29
      %s39 = scalar_select %p36, %s38, %s29
      %p40 = scmp.ge.s32.totalorder %s39, 2
      %s41 = scalar_select %p40, 0, %s39
      %s42 = ssub.s32 %s29, %s41
      %s43 = ssub.s32 %s30, %s37
      %s44 = sor.u32 %s42, %s43
      %p45 = scmp.eq.s32.totalorder %s44, 0
      %s47 = sadd.s32 %s46, 1
      %s48 = scalar_select %p45, %s46, %s47
      %p51 = pneg %p45
      %p52 = scmp.eq.s32.totalorder %s22, 3
      %p53 = por %p51, %p52
      %p54 = scmp.ne.s32.totalorder %s46, %s49
      %p55 = scmp.eq.s32.totalorder %s22, 0
      %p56 = por %p54, %p55
      %p57 = scmp.ne.s32.totalorder %s46, %s49
      %p58 = scmp.eq.s32.totalorder %s27, 3
      %p59 = por %p57, %p58
      %p60 = scmp.ne.s32.totalorder %s49, %s50
      %p61 = scmp.eq.s32.totalorder %s27, 0
      %p62 = por %p60, %p61
      %p63 = scmp.ne.s32.totalorder %s49, %s50
      %p64 = scmp.eq.s32.totalorder %s28, 3
      %p65 = por %p63, %p64
      %p67 = scmp.ne.s32.totalorder %s50, %s66
      %p68 = scmp.eq.s32.totalorder %s28, 0
      %p69 = por %p67, %p68
      %s70 = ssub.s32 %s29, %s41
      %s71 = ssub.s32 %s30, %s37
      %s72 = sor.u32 %s70, %s71
      %p73 = scmp.eq.s32.totalorder %s72, 0
      %s75 = sadd.s32 %s74, 1
      %s76 = scalar_select %p73, %s74, %s75
      %p79 = pneg %p73
      %p80 = scmp.eq.s32.totalorder %s22, 3
      %p81 = por %p79, %p80
      %p82 = scmp.ne.s32.totalorder %s74, %s77
      %p83 = scmp.eq.s32.totalorder %s22, 0
      %p84 = por %p82, %p83
      %p85 = scmp.ne.s32.totalorder %s74, %s77
      %p86 = scmp.eq.s32.totalorder %s27, 3
      %p87 = por %p85, %p86
      %p88 = scmp.ne.s32.totalorder %s77, %s78
      %p89 = scmp.eq.s32.totalorder %s27, 0
      %p90 = por %p88, %p89
      %p91 = scmp.ne.s32.totalorder %s77, %s78
      %p92 = scmp.eq.s32.totalorder %s28, 3
      %p93 = por %p91, %p92
      %p95 = scmp.ne.s32.totalorder %s78, %s94
      %p96 = scmp.eq.s32.totalorder %s28, 0
      %p97 = por %p95, %p96
      %s99 = sadd.s32 %s98, 1
      %p102 = scmp.eq.s32.totalorder %s22, 3
      %p103 = scmp.ne.s32.totalorder %s98, %s100
      %p104 = scmp.eq.s32.totalorder %s22, 0
      %p105 = por %p103, %p104
      %p106 = scmp.ne.s32.totalorder %s98, %s100
      %p107 = scmp.eq.s32.totalorder %s27, 3
      %p108 = por %p106, %p107
      %p109 = scmp.ne.s32.totalorder %s100, %s101
      %p110 = scmp.eq.s32.totalorder %s27, 0
      %p111 = por %p109, %p110
      %p112 = scmp.ne.s32.totalorder %s100, %s101
      %p113 = scmp.eq.s32.totalorder %s28, 3
      %p114 = por %p112, %p113
      %p116 = scmp.ne.s32.totalorder %s101, %s115
      %p117 = scmp.eq.s32.totalorder %s28, 0
      %p118 = por %p116, %p117
      %s120 = sadd.s32 %s119, 1
      %p123 = scmp.eq.s32.totalorder %s22, 3
      %p124 = scmp.ne.s32.totalorder %s119, %s121
      %p125 = scmp.eq.s32.totalorder %s22, 0
      %p126 = por %p124, %p125
      %p127 = scmp.ne.s32.totalorder %s119, %s121
      %p128 = scmp.eq.s32.totalorder %s27, 3
      %p129 = por %p127, %p128
      %p130 = scmp.ne.s32.totalorder %s121, %s122
      %p131 = scmp.eq.s32.totalorder %s27, 0
      %p132 = por %p130, %p131
      %p133 = scmp.ne.s32.totalorder %s121, %s122
      %p134 = scmp.eq.s32.totalorder %s28, 3
      %p135 = por %p133, %p134
      %p137 = scmp.ne.s32.totalorder %s122, %s136
      %p138 = scmp.eq.s32.totalorder %s28, 0
      %p139 = por %p137, %p138
      %s141 = sadd.s32 %s140, 1
      %p144 = scmp.eq.s32.totalorder %s22, 3
      %p145 = scmp.ne.s32.totalorder %s140, %s142
      %p146 = scmp.eq.s32.totalorder %s22, 0
      %p147 = por %p145, %p146
      %p148 = scmp.ne.s32.totalorder %s140, %s142
      %p149 = scmp.eq.s32.totalorder %s27, 3
      %p150 = por %p148, %p149
      %p151 = scmp.ne.s32.totalorder %s142, %s143
      %p152 = scmp.eq.s32.totalorder %s27, 0
      %p153 = por %p151, %p152
      %p154 = scmp.ne.s32.totalorder %s142, %s143
      %p155 = scmp.eq.s32.totalorder %s28, 3
      %p156 = por %p154, %p155
      %p158 = scmp.ne.s32.totalorder %s143, %s157
      %p159 = scmp.eq.s32.totalorder %s28, 0
      %p160 = por %p158, %p159
      %s162 = sadd.s32 %s161, 1
      %p165 = scmp.eq.s32.totalorder %s22, 3
      %p166 = scmp.ne.s32.totalorder %s161, %s163
      %p167 = scmp.eq.s32.totalorder %s22, 0
      %p168 = por %p166, %p167
      %p169 = scmp.ne.s32.totalorder %s161, %s163
      %p170 = scmp.eq.s32.totalorder %s27, 3
      %p171 = por %p169, %p170
      %p172 = scmp.ne.s32.totalorder %s163, %s164
      %p173 = scmp.eq.s32.totalorder %s27, 0
      %p174 = por %p172, %p173
      %p175 = scmp.ne.s32.totalorder %s163, %s164
      %p176 = scmp.eq.s32.totalorder %s28, 3
      %p177 = por %p175, %p176
      %p179 = scmp.ne.s32.totalorder %s164, %s178
      %p180 = scmp.eq.s32.totalorder %s28, 0
      %p181 = por %p179, %p180
      %s183 = sadd.s32 %s182, 1
      %p186 = scmp.eq.s32.totalorder %s22, 3
      %p187 = scmp.ne.s32.totalorder %s182, %s184
      %p188 = scmp.eq.s32.totalorder %s22, 0
      %p189 = por %p187, %p188
      %p190 = scmp.ne.s32.totalorder %s182, %s184
      %p191 = scmp.eq.s32.totalorder %s27, 3
      %p192 = por %p190, %p191
      %p193 = scmp.ne.s32.totalorder %s184, %s185
      %p194 = scmp.eq.s32.totalorder %s27, 0
      %p195 = por %p193, %p194
      %p196 = scmp.ne.s32.totalorder %s184, %s185
      %p197 = scmp.eq.s32.totalorder %s28, 3
      %p198 = por %p196, %p197
      %p200 = scmp.ne.s32.totalorder %s185, %s199
      %p201 = scmp.eq.s32.totalorder %s28, 0
      %p202 = por %p200, %p201
      %s203 = ssub.s32 %s29, %s41
      %s204 = ssub.s32 %s30, %s37
      %s205 = sor.u32 %s203, %s204
      %p206 = scmp.eq.s32.totalorder %s205, 0
      %s208 = sadd.s32 %s207, 1
      %s209 = scalar_select %p206, %s207, %s208
      %p212 = pneg %p206
      %p213 = scmp.eq.s32.totalorder %s22, 3
      %p214 = por %p212, %p213
      %p215 = scmp.ne.s32.totalorder %s207, %s210
      %p216 = scmp.eq.s32.totalorder %s22, 0
      %p217 = por %p215, %p216
      %p218 = scmp.ne.s32.totalorder %s207, %s210
      %p219 = scmp.eq.s32.totalorder %s27, 3
      %p220 = por %p218, %p219
      %p221 = scmp.ne.s32.totalorder %s210, %s211
      %p222 = scmp.eq.s32.totalorder %s27, 0
      %p223 = por %p221, %p222
      %p224 = scmp.ne.s32.totalorder %s210, %s211
      %p225 = scmp.eq.s32.totalorder %s28, 3
      %p226 = por %p224, %p225
      %p228 = scmp.ne.s32.totalorder %s211, %s227
      %p229 = scmp.eq.s32.totalorder %s28, 0
      %p230 = por %p228, %p229
      %p231 = scmp.le.s32.totalorder 1, %s22
      %p232 = scmp.lt.s32.totalorder %s22, 5
      %p233 = pnand %p231, %p232
      %p234 = pneg %p233
      // Predicated region
      $region9: #{tpu_custom_call.1} parent=5 // pred_check
        _
      $region10: #{tpu_custom_call.1} parent=5 // pred_check_branch
        %236 = sbr.rel (%p233) target = $region12
      $region11: #{tpu_custom_call.1} parent=5 // pred_region
        %s237 = ssub.s32 %s22, 1
        // Predicated region
        $region13: #{tpu_custom_call.1} parent=11 // pred_check
          %p238 = pneg %p111
        $region14: #{tpu_custom_call.1} parent=11 // pred_check_branch
          %240 = sbr.rel (%p238) target = $region16
        $region15: #{tpu_custom_call.1} parent=11 // pred_region
          _
        $region16: #{tpu_custom_call.1} parent=11 // pred_fallthru
          _
        // Predicated region
        $region17: #{tpu_custom_call.1} parent=11 // pred_check
          %p241 = pneg %p132
        $region18: #{tpu_custom_call.1} parent=11 // pred_check_branch
          %243 = sbr.rel (%p241) target = $region20
        $region19: #{tpu_custom_call.1} parent=11 // pred_region
          _
        $region20: #{tpu_custom_call.1} parent=11 // pred_fallthru
          _
        // Predicated region
        $region21: #{tpu_custom_call.1} parent=11 // pred_check
          %p244 = pneg %p153
        $region22: #{tpu_custom_call.1} parent=11 // pred_check_branch
          %246 = sbr.rel (%p244) target = $region24
        $region23: #{tpu_custom_call.1} parent=11 // pred_region
          _
        $region24: #{tpu_custom_call.1} parent=11 // pred_fallthru
          _
        // Predicated region
        $region25: #{tpu_custom_call.1} parent=11 // pred_check
          %p247 = pneg %p174
        $region26: #{tpu_custom_call.1} parent=11 // pred_check_branch
          %249 = sbr.rel (%p247) target = $region28
        $region27: #{tpu_custom_call.1} parent=11 // pred_region
          _
        $region28: #{tpu_custom_call.1} parent=11 // pred_fallthru
          _
        // Predicated region
        $region29: #{tpu_custom_call.1} parent=11 // pred_check
          %p250 = pneg %p195
        $region30: #{tpu_custom_call.1} parent=11 // pred_check_branch
          %252 = sbr.rel (%p250) target = $region32
        $region31: #{tpu_custom_call.1} parent=11 // pred_region
          _
        $region32: #{tpu_custom_call.1} parent=11 // pred_fallthru
          _
      $region12: #{tpu_custom_call.1} parent=5 // pred_fallthru
        _
      %p253 = scmp.lt.s32.totalorder %s22, 4
      // Predicated region
      $region33: #{tpu_custom_call.1} parent=5 // pred_check
        %p254 = pneg %p253
      $region34: #{tpu_custom_call.1} parent=5 // pred_check_branch
        %256 = sbr.rel (%p254) target = $region36
      $region35: #{tpu_custom_call.1} parent=5 // pred_region
        // Predicated region
        $region37: #{tpu_custom_call.1} parent=35 // pred_check
          %p257 = pneg %p56
        $region38: #{tpu_custom_call.1} parent=35 // pred_check_branch
          %259 = sbr.rel (%p257) target = $region40
        $region39: #{tpu_custom_call.1} parent=35 // pred_region
          %s260 = sand.u32 %s46, 1
          %s261 = scalar_lea.sflag [#allocation3], %s260
          %s262 = sand.u32 %s46, 1
          %s263 = smul.addr %s262, 4
          %s264 = scalar_lea.vmem [#allocation2], %s263
          %s266 = ssub.s32 64, 64
          %267 = vsyncadd %s261, %s266
          %s268 = smul.addr %s29, 2
          %s269 = sadd.s32 %s30, %s268
          %s270 = smul.addr %s269, 64
          %s271 = scalar_lea.hbm %s0, %s270
          %s273 = sshll.u32 %s264, 4
          %s274 = int_to_ptr.vmem [resolvable:$true] %s273
          %276 = dma.hbm_to_vmem [thread:$0]  %s271, 64, %s274, %s261
        $region40: #{tpu_custom_call.1} parent=35 // pred_fallthru
          _
        // Predicated region
        $region41: #{tpu_custom_call.1} parent=35 // pred_check
          %p277 = pneg %p84
        $region42: #{tpu_custom_call.1} parent=35 // pred_check_branch
          %279 = sbr.rel (%p277) target = $region44
        $region43: #{tpu_custom_call.1} parent=35 // pred_region
          %s280 = sand.u32 %s74, 1
          %s281 = scalar_lea.sflag [#allocation6], %s280
          %s282 = sand.u32 %s74, 1
          %s283 = smul.addr %s282, 4
          %s284 = scalar_lea.vmem [#allocation5], %s283
          %s286 = ssub.s32 64, 64
          %287 = vsyncadd %s281, %s286
          %s288 = smul.addr %s29, 2
          %s289 = sadd.s32 %s30, %s288
          %s290 = smul.addr %s289, 64
          %s291 = scalar_lea.hbm %s1, %s290
          %s293 = sshll.u32 %s284, 4
          %s294 = int_to_ptr.vmem [resolvable:$true] %s293
          %296 = dma.hbm_to_vmem [thread:$0]  %s291, 64, %s294, %s281
        $region44: #{tpu_custom_call.1} parent=35 // pred_fallthru
          _
      $region36: #{tpu_custom_call.1} parent=5 // pred_fallthru
        _
      %p297 = scmp.le.s32.totalorder 1, %s22
      %p298 = scmp.lt.s32.totalorder %s22, 5
      %p299 = pnand %p297, %p298
      %p300 = pneg %p299
      // Predicated region
      $region45: #{tpu_custom_call.1} parent=5 // pred_check
        _
      $region46: #{tpu_custom_call.1} parent=5 // pred_check_branch
        %302 = sbr.rel (%p299) target = $region48
      $region47: #{tpu_custom_call.1} parent=5 // pred_region
        %s303 = ssub.s32 %s22, 1
        %s304 = sand.u32 %s49, 1
        %s305 = scalar_lea.sflag [#allocation3], %s304
        %s306 = sand.u32 %s49, 1
        %s307 = smul.addr %s306, 4
        %s308 = scalar_lea.vmem [#allocation2], %s307
        // Predicated region
        $region49: #{tpu_custom_call.1} parent=47 // pred_check
          %p309 = pneg %p62
        $region50: #{tpu_custom_call.1} parent=47 // pred_check_branch
          %311 = sbr.rel (%p309) target = $region52
        $region51: #{tpu_custom_call.1} parent=47 // pred_region
          %312 = dma.done %s305, 64
        $region52: #{tpu_custom_call.1} parent=47 // pred_fallthru
          _
        %s313 = sand.u32 %s77, 1
        %s314 = scalar_lea.sflag [#allocation6], %s313
        %s315 = sand.u32 %s77, 1
        %s316 = smul.addr %s315, 4
        %s317 = scalar_lea.vmem [#allocation5], %s316
        // Predicated region
        $region53: #{tpu_custom_call.1} parent=47 // pred_check
          %p318 = pneg %p90
        $region54: #{tpu_custom_call.1} parent=47 // pred_check_branch
          %320 = sbr.rel (%p318) target = $region56
        $region55: #{tpu_custom_call.1} parent=47 // pred_region
          %321 = dma.done %s314, 64
        $region56: #{tpu_custom_call.1} parent=47 // pred_fallthru
          _
        %s322 = sand.u32 %s49, 1
        %s323 = scalar_lea.sflag [#allocation3], %s322
        %s324 = sand.u32 %s49, 1
        %s325 = smul.addr %s324, 4
        %s326 = scalar_lea.vmem [#allocation2], %s325
        %p327 = pneg %p62
        %p328 = pneg %p59
        %s329 = sand.u32 %s77, 1
        %s330 = scalar_lea.sflag [#allocation6], %s329
        %s331 = sand.u32 %s77, 1
        %s332 = smul.addr %s331, 4
        %s333 = scalar_lea.vmem [#allocation5], %s332
        %p334 = pneg %p90
        %p335 = pneg %p87
        %p336 = pneg %p111
        %p337 = pneg %p108
        %p338 = pneg %p132
        %p339 = pneg %p129
        %p340 = pneg %p153
        %p341 = pneg %p150
        %p342 = pneg %p174
        %p343 = pneg %p171
        %p344 = pneg %p195
        %p345 = pneg %p192
        %p346 = pneg %p223
        %p347 = pneg %p220
        %s348 = sand.u32 %s210, 1
        %s349 = scalar_lea.sflag [#allocation4], %s348
        %s350 = sand.u32 %s210, 1
        %s351 = smul.addr %s350, 4
        %s352 = scalar_lea.vmem [#allocation7], %s351
        %v353 = vld [vmem:[%s308] sm:$0xf]
        %v354 = vld [vmem:[%s317] sm:$0xf]
        %v355 = vld [vmem:[%s2] sm:$0xf]
        %v356 = vld [vmem:[%s3] sm:$0xf]
        %vm357 = vcmask 31744
        %v359 = vsel %vm357, %v356, 0
        %vm361 = vcmask 1043456
        %v363 = vsel %vm361, %v354, 0
        %365 = vmatprep.subr.mxu0 0.0
        %v366 = vand.u32 %v363, 4294901760
        %367 = vmatpush1.msra.mxu0 %v366
        %368 = vmatprep.subr.mxu0 0.0
        %369 = vmatpush1.msra.mxu0 0.0
        %370 = vmatprep.subr.mxu0 0.0
        %371 = vmatpush1.msra.mxu0 0.0
        %372 = vmatprep.subr.mxu0 0.0
        %373 = vmatpush1.msra.mxu0 0.0
        %374 = vmatprep.subr.mxu0 0.0
        %375 = vmatpush1.msra.mxu0 0.0
        %376 = vmatprep.subr.mxu0 0.0
        %377 = vmatpush1.msra.mxu0 0.0
        %378 = vmatprep.subr.mxu0 0.0
        %379 = vmatpush1.msra.mxu0 0.0
        %380 = vmatprep.subr.mxu0 0.0
        %381 = vmatpush1.msra.mxu0 0.0
        %382 = vmatprep.subr.mxu0 0.0
        %383 = vmatpush1.msra.mxu0 0.0
        %384 = vmatprep.subr.mxu0 0.0
        %385 = vmatpush1.msra.mxu0 0.0
        %386 = vmatprep.subr.mxu0 0.0
        %387 = vmatpush1.msra.mxu0 0.0
        %388 = vmatprep.subr.mxu0 0.0
        %389 = vmatpush1.msra.mxu0 0.0
        %390 = vmatprep.subr.mxu0 0.0
        %391 = vmatpush1.msra.mxu0 0.0
        %392 = vmatprep.subr.mxu0 0.0
        %393 = vmatpush1.msra.mxu0 0.0
        %394 = vmatprep.subr.mxu0 0.0
        %395 = vmatpush1.msra.mxu0 0.0
        %396 = vmatprep.subr.mxu0 0.0
        %397 = vmatpush1.msra.mxu0 0.0
        %398 = vmatprep.subr.mxu0 0.0
        %399 = vmatpush1.msra.mxu0 0.0
        %400 = vmatprep.subr.mxu0 0.0
        %401 = vmatpush1.msra.mxu0 0.0
        %402 = vmatprep.subr.mxu0 0.0
        %403 = vmatpush1.msra.mxu0 0.0
        %404 = vmatprep.subr.mxu0 0.0
        %405 = vmatpush1.msra.mxu0 0.0
        %406 = vmatprep.subr.mxu0 0.0
        %407 = vmatpush1.msra.mxu0 0.0
        %408 = vmatprep.subr.mxu0 0.0
        %409 = vmatpush1.msra.mxu0 0.0
        %410 = vmatprep.subr.mxu0 0.0
        %411 = vmatpush1.msra.mxu0 0.0
        %412 = vmatprep.subr.mxu0 0.0
        %413 = vmatpush1.msra.mxu0 0.0
        %414 = vmatprep.subr.mxu0 0.0
        %415 = vmatpush1.msra.mxu0 0.0
        %416 = vmatprep.subr.mxu0 0.0
        %417 = vmatpush1.msra.mxu0 0.0
        %418 = vmatprep.subr.mxu0 0.0
        %419 = vmatpush1.msra.mxu0 0.0
        %420 = vmatprep.subr.mxu0 0.0
        %421 = vmatpush1.msra.mxu0 0.0
        %422 = vmatprep.subr.mxu0 0.0
        %423 = vmatpush1.msra.mxu0 0.0
        %424 = vmatprep.subr.mxu0 0.0
        %425 = vmatpush1.msra.mxu0 0.0
        %426 = vmatprep.subr.mxu0 0.0
        %427 = vmatpush1.msra.mxu0 0.0
        %428 = vmatprep.subr.mxu0 0.0
        %429 = vmatpush1.msra.mxu0 0.0
        %430 = vmatprep.mubr.f32.mxu0 0.0
        %v431 = vand.u32 %v359, 4294901760
        %v432 = vsub.f32 %v359, %v431
        %v433 = vand.u32 %v432, 4294901760
        %v434 = vsub.f32 %v432, %v433
        %v435 = vand.u32 %v434, 4294901760
        %436 = vmatmul.mubr.f32.gmra.mrb[0].mxu0 %v435
        %v437 = vpop.f32.mrb[0].mxu0
        %v438 = vadd.f32 0.0, %v437
        %v439 = vpop.f32.mrb[0].mxu0
        %440 = vdwg.mxu0
        %441 = vmatprep.subr.mxu0 0.0
        %v442 = vand.u32 %v363, 4294901760
        %v443 = vsub.f32 %v363, %v442
        %v444 = vand.u32 %v443, 4294901760
        %v445 = vsub.f32 %v443, %v444
        %v446 = vand.u32 %v445, 4294901760
        %447 = vmatpush1.msra.mxu0 %v446
        %448 = vmatprep.subr.mxu0 0.0
        %449 = vmatpush1.msra.mxu0 0.0
        %450 = vmatprep.subr.mxu0 0.0
        %451 = vmatpush1.msra.mxu0 0.0
        %452 = vmatprep.subr.mxu0 0.0
        %453 = vmatpush1.msra.mxu0 0.0
        %454 = vmatprep.subr.mxu0 0.0
        %455 = vmatpush1.msra.mxu0 0.0
        %456 = vmatprep.subr.mxu0 0.0
        %457 = vmatpush1.msra.mxu0 0.0
        %458 = vmatprep.subr.mxu0 0.0
        %459 = vmatpush1.msra.mxu0 0.0
        %460 = vmatprep.subr.mxu0 0.0
        %461 = vmatpush1.msra.mxu0 0.0
        %462 = vmatprep.subr.mxu0 0.0
        %463 = vmatpush1.msra.mxu0 0.0
        %464 = vmatprep.subr.mxu0 0.0
        %465 = vmatpush1.msra.mxu0 0.0
        %466 = vmatprep.subr.mxu0 0.0
        %467 = vmatpush1.msra.mxu0 0.0
        %468 = vmatprep.subr.mxu0 0.0
        %469 = vmatpush1.msra.mxu0 0.0
        %470 = vmatprep.subr.mxu0 0.0
        %471 = vmatpush1.msra.mxu0 0.0
        %472 = vmatprep.subr.mxu0 0.0
        %473 = vmatpush1.msra.mxu0 0.0
        %474 = vmatprep.subr.mxu0 0.0
        %475 = vmatpush1.msra.mxu0 0.0
        %476 = vmatprep.subr.mxu0 0.0
        %477 = vmatpush1.msra.mxu0 0.0
        %478 = vmatprep.subr.mxu0 0.0
        %479 = vmatpush1.msra.mxu0 0.0
        %480 = vmatprep.subr.mxu0 0.0
        %481 = vmatpush1.msra.mxu0 0.0
        %482 = vmatprep.subr.mxu0 0.0
        %483 = vmatpush1.msra.mxu0 0.0
        %484 = vmatprep.subr.mxu0 0.0
        %485 = vmatpush1.msra.mxu0 0.0
        %486 = vmatprep.subr.mxu0 0.0
        %487 = vmatpush1.msra.mxu0 0.0
        %488 = vmatprep.subr.mxu0 0.0
        %489 = vmatpush1.msra.mxu0 0.0
        %490 = vmatprep.subr.mxu0 0.0
        %491 = vmatpush1.msra.mxu0 0.0
        %492 = vmatprep.subr.mxu0 0.0
        %493 = vmatpush1.msra.mxu0 0.0
        %494 = vmatprep.subr.mxu0 0.0
        %495 = vmatpush1.msra.mxu0 0.0
        %496 = vmatprep.subr.mxu0 0.0
        %497 = vmatpush1.msra.mxu0 0.0
        %498 = vmatprep.subr.mxu0 0.0
        %499 = vmatpush1.msra.mxu0 0.0
        %500 = vmatprep.subr.mxu0 0.0
        %501 = vmatpush1.msra.mxu0 0.0
        %502 = vmatprep.subr.mxu0 0.0
        %503 = vmatpush1.msra.mxu0 0.0
        %504 = vmatprep.subr.mxu0 0.0
        %505 = vmatpush1.msra.mxu0 0.0
        %506 = vmatprep.subr.mxu0 0.0
        %507 = vmatpush1.msra.mxu0 0.0
        %508 = vmatprep.subr.mxu0 0.0
        %509 = vmatpush1.msra.mxu0 0.0
        %510 = vmatprep.mubr.f32.mxu0 0.0
        %v511 = vand.u32 %v359, 4294901760
        %512 = vmatmul.mubr.f32.gmra.mrb[0].mxu0 %v511
        %v513 = vpop.f32.mrb[0].mxu0
        %v514 = vadd.f32 %v438, %v513
        %v515 = vpop.f32.mrb[0].mxu0
        %516 = vdwg.mxu0
        %517 = vmatprep.subr.mxu0 0.0
        %v518 = vand.u32 %v363, 4294901760
        %v519 = vsub.f32 %v363, %v518
        %520 = vmatpush1.msra.mxu0 %v519
        %521 = vmatprep.subr.mxu0 0.0
        %522 = vmatpush1.msra.mxu0 0.0
        %523 = vmatprep.subr.mxu0 0.0
        %524 = vmatpush1.msra.mxu0 0.0
        %525 = vmatprep.subr.mxu0 0.0
        %526 = vmatpush1.msra.mxu0 0.0
        %527 = vmatprep.subr.mxu0 0.0
        %528 = vmatpush1.msra.mxu0 0.0
        %529 = vmatprep.subr.mxu0 0.0
        %530 = vmatpush1.msra.mxu0 0.0
        %531 = vmatprep.subr.mxu0 0.0
        %532 = vmatpush1.msra.mxu0 0.0
        %533 = vmatprep.subr.mxu0 0.0
        %534 = vmatpush1.msra.mxu0 0.0
        %535 = vmatprep.subr.mxu0 0.0
        %536 = vmatpush1.msra.mxu0 0.0
        %537 = vmatprep.subr.mxu0 0.0
        %538 = vmatpush1.msra.mxu0 0.0
        %539 = vmatprep.subr.mxu0 0.0
        %540 = vmatpush1.msra.mxu0 0.0
        %541 = vmatprep.subr.mxu0 0.0
        %542 = vmatpush1.msra.mxu0 0.0
        %543 = vmatprep.subr.mxu0 0.0
        %544 = vmatpush1.msra.mxu0 0.0
        %545 = vmatprep.subr.mxu0 0.0
        %546 = vmatpush1.msra.mxu0 0.0
        %547 = vmatprep.subr.mxu0 0.0
        %548 = vmatpush1.msra.mxu0 0.0
        %549 = vmatprep.subr.mxu0 0.0
        %550 = vmatpush1.msra.mxu0 0.0
        %551 = vmatprep.subr.mxu0 0.0
        %552 = vmatpush1.msra.mxu0 0.0
        %553 = vmatprep.subr.mxu0 0.0
        %554 = vmatpush1.msra.mxu0 0.0
        %555 = vmatprep.subr.mxu0 0.0
        %556 = vmatpush1.msra.mxu0 0.0
        %557 = vmatprep.subr.mxu0 0.0
        %558 = vmatpush1.msra.mxu0 0.0
        %559 = vmatprep.subr.mxu0 0.0
        %560 = vmatpush1.msra.mxu0 0.0
        %561 = vmatprep.subr.mxu0 0.0
        %562 = vmatpush1.msra.mxu0 0.0
        %563 = vmatprep.subr.mxu0 0.0
        %564 = vmatpush1.msra.mxu0 0.0
        %565 = vmatprep.subr.mxu0 0.0
        %566 = vmatpush1.msra.mxu0 0.0
        %567 = vmatprep.subr.mxu0 0.0
        %568 = vmatpush1.msra.mxu0 0.0
        %569 = vmatprep.subr.mxu0 0.0
        %570 = vmatpush1.msra.mxu0 0.0
        %571 = vmatprep.subr.mxu0 0.0
        %572 = vmatpush1.msra.mxu0 0.0
        %573 = vmatprep.subr.mxu0 0.0
        %574 = vmatpush1.msra.mxu0 0.0
        %575 = vmatprep.subr.mxu0 0.0
        %576 = vmatpush1.msra.mxu0 0.0
        %577 = vmatprep.subr.mxu0 0.0
        %578 = vmatpush1.msra.mxu0 0.0
        %579 = vmatprep.subr.mxu0 0.0
        %580 = vmatpush1.msra.mxu0 0.0
        %581 = vmatprep.subr.mxu0 0.0
        %582 = vmatpush1.msra.mxu0 0.0
        %583 = vmatprep.mubr.f32.mxu0 0.0
        %v584 = vand.u32 %v359, 4294901760
        %v585 = vsub.f32 %v359, %v584
        %586 = vmatmul.mubr.f32.gmra.mrb[0].mxu0 %v585
        %v587 = vpop.f32.mrb[0].mxu0
        %v588 = vadd.f32 %v514, %v587
        %v589 = vpop.f32.mrb[0].mxu0
        %590 = vdwg.mxu0
        %591 = vmatprep.subr.mxu0 0.0
        %v592 = vand.u32 %v363, 4294901760
        %593 = vmatpush1.msra.mxu0 %v592
        %594 = vmatprep.subr.mxu0 0.0
        %595 = vmatpush1.msra.mxu0 0.0
        %596 = vmatprep.subr.mxu0 0.0
        %597 = vmatpush1.msra.mxu0 0.0
        %598 = vmatprep.subr.mxu0 0.0
        %599 = vmatpush1.msra.mxu0 0.0
        %600 = vmatprep.subr.mxu0 0.0
        %601 = vmatpush1.msra.mxu0 0.0
        %602 = vmatprep.subr.mxu0 0.0
        %603 = vmatpush1.msra.mxu0 0.0
        %604 = vmatprep.subr.mxu0 0.0
        %605 = vmatpush1.msra.mxu0 0.0
        %606 = vmatprep.subr.mxu0 0.0
        %607 = vmatpush1.msra.mxu0 0.0
        %608 = vmatprep.subr.mxu0 0.0
        %609 = vmatpush1.msra.mxu0 0.0
        %610 = vmatprep.subr.mxu0 0.0
        %611 = vmatpush1.msra.mxu0 0.0
        %612 = vmatprep.subr.mxu0 0.0
        %613 = vmatpush1.msra.mxu0 0.0
        %614 = vmatprep.subr.mxu0 0.0
        %615 = vmatpush1.msra.mxu0 0.0
        %616 = vmatprep.subr.mxu0 0.0
        %617 = vmatpush1.msra.mxu0 0.0
        %618 = vmatprep.subr.mxu0 0.0
        %619 = vmatpush1.msra.mxu0 0.0
        %620 = vmatprep.subr.mxu0 0.0
        %621 = vmatpush1.msra.mxu0 0.0
        %622 = vmatprep.subr.mxu0 0.0
        %623 = vmatpush1.msra.mxu0 0.0
        %624 = vmatprep.subr.mxu0 0.0
        %625 = vmatpush1.msra.mxu0 0.0
        %626 = vmatprep.subr.mxu0 0.0
        %627 = vmatpush1.msra.mxu0 0.0
        %628 = vmatprep.subr.mxu0 0.0
        %629 = vmatpush1.msra.mxu0 0.0
        %630 = vmatprep.subr.mxu0 0.0
        %631 = vmatpush1.msra.mxu0 0.0
        %632 = vmatprep.subr.mxu0 0.0
        %633 = vmatpush1.msra.mxu0 0.0
        %634 = vmatprep.subr.mxu0 0.0
        %635 = vmatpush1.msra.mxu0 0.0
        %636 = vmatprep.subr.mxu0 0.0
        %637 = vmatpush1.msra.mxu0 0.0
        %638 = vmatprep.subr.mxu0 0.0
        %639 = vmatpush1.msra.mxu0 0.0
        %640 = vmatprep.subr.mxu0 0.0
        %641 = vmatpush1.msra.mxu0 0.0
        %642 = vmatprep.subr.mxu0 0.0
        %643 = vmatpush1.msra.mxu0 0.0
        %644 = vmatprep.subr.mxu0 0.0
        %645 = vmatpush1.msra.mxu0 0.0
        %646 = vmatprep.subr.mxu0 0.0
        %647 = vmatpush1.msra.mxu0 0.0
        %648 = vmatprep.subr.mxu0 0.0
        %649 = vmatpush1.msra.mxu0 0.0
        %650 = vmatprep.subr.mxu0 0.0
        %651 = vmatpush1.msra.mxu0 0.0
        %652 = vmatprep.subr.mxu0 0.0
        %653 = vmatpush1.msra.mxu0 0.0
        %654 = vmatprep.subr.mxu0 0.0
        %655 = vmatpush1.msra.mxu0 0.0
        %656 = vmatprep.mubr.f32.mxu0 0.0
        %v657 = vand.u32 %v359, 4294901760
        %v658 = vsub.f32 %v359, %v657
        %v659 = vand.u32 %v658, 4294901760
        %660 = vmatmul.mubr.f32.gmra.mrb[0].mxu0 %v659
        %v661 = vpop.f32.mrb[0].mxu0
        %v662 = vadd.f32 %v588, %v661
        %v663 = vpop.f32.mrb[0].mxu0
        %664 = vdwg.mxu0
        %665 = vmatprep.subr.mxu0 0.0
        %v666 = vand.u32 %v363, 4294901760
        %v667 = vsub.f32 %v363, %v666
        %v668 = vand.u32 %v667, 4294901760
        %669 = vmatpush1.msra.mxu0 %v668
        %670 = vmatprep.subr.mxu0 0.0
        %671 = vmatpush1.msra.mxu0 0.0
        %672 = vmatprep.subr.mxu0 0.0
        %673 = vmatpush1.msra.mxu0 0.0
        %674 = vmatprep.subr.mxu0 0.0
        %675 = vmatpush1.msra.mxu0 0.0
        %676 = vmatprep.subr.mxu0 0.0
        %677 = vmatpush1.msra.mxu0 0.0
        %678 = vmatprep.subr.mxu0 0.0
        %679 = vmatpush1.msra.mxu0 0.0
        %680 = vmatprep.subr.mxu0 0.0
        %681 = vmatpush1.msra.mxu0 0.0
        %682 = vmatprep.subr.mxu0 0.0
        %683 = vmatpush1.msra.mxu0 0.0
        %684 = vmatprep.subr.mxu0 0.0
        %685 = vmatpush1.msra.mxu0 0.0
        %686 = vmatprep.subr.mxu0 0.0
        %687 = vmatpush1.msra.mxu0 0.0
        %688 = vmatprep.subr.mxu0 0.0
        %689 = vmatpush1.msra.mxu0 0.0
        %690 = vmatprep.subr.mxu0 0.0
        %691 = vmatpush1.msra.mxu0 0.0
        %692 = vmatprep.subr.mxu0 0.0
        %693 = vmatpush1.msra.mxu0 0.0
        %694 = vmatprep.subr.mxu0 0.0
        %695 = vmatpush1.msra.mxu0 0.0
        %696 = vmatprep.subr.mxu0 0.0
        %697 = vmatpush1.msra.mxu0 0.0
        %698 = vmatprep.subr.mxu0 0.0
        %699 = vmatpush1.msra.mxu0 0.0
        %700 = vmatprep.subr.mxu0 0.0
        %701 = vmatpush1.msra.mxu0 0.0
        %702 = vmatprep.subr.mxu0 0.0
        %703 = vmatpush1.msra.mxu0 0.0
        %704 = vmatprep.subr.mxu0 0.0
        %705 = vmatpush1.msra.mxu0 0.0
        %706 = vmatprep.subr.mxu0 0.0
        %707 = vmatpush1.msra.mxu0 0.0
        %708 = vmatprep.subr.mxu0 0.0
        %709 = vmatpush1.msra.mxu0 0.0
        %710 = vmatprep.subr.mxu0 0.0
        %711 = vmatpush1.msra.mxu0 0.0
        %712 = vmatprep.subr.mxu0 0.0
        %713 = vmatpush1.msra.mxu0 0.0
        %714 = vmatprep.subr.mxu0 0.0
        %715 = vmatpush1.msra.mxu0 0.0
        %716 = vmatprep.subr.mxu0 0.0
        %717 = vmatpush1.msra.mxu0 0.0
        %718 = vmatprep.subr.mxu0 0.0
        %719 = vmatpush1.msra.mxu0 0.0
        %720 = vmatprep.subr.mxu0 0.0
        %721 = vmatpush1.msra.mxu0 0.0
        %722 = vmatprep.subr.mxu0 0.0
        %723 = vmatpush1.msra.mxu0 0.0
        %724 = vmatprep.subr.mxu0 0.0
        %725 = vmatpush1.msra.mxu0 0.0
        %726 = vmatprep.subr.mxu0 0.0
        %727 = vmatpush1.msra.mxu0 0.0
        %728 = vmatprep.subr.mxu0 0.0
        %729 = vmatpush1.msra.mxu0 0.0
        %730 = vmatprep.subr.mxu0 0.0
        %731 = vmatpush1.msra.mxu0 0.0
        %732 = vmatprep.mubr.f32.mxu0 0.0
        %v733 = vand.u32 %v359, 4294901760
        %734 = vmatmul.mubr.f32.gmra.mrb[0].mxu0 %v733
        %v735 = vpop.f32.mrb[0].mxu0
        %v736 = vadd.f32 %v662, %v735
        %v737 = vpop.f32.mrb[0].mxu0
        %738 = vdwg.mxu0
        %739 = vmatprep.subr.mxu0 0.0
        %v740 = vand.u32 %v363, 4294901760
        %741 = vmatpush1.msra.mxu0 %v740
        %742 = vmatprep.subr.mxu0 0.0
        %743 = vmatpush1.msra.mxu0 0.0
        %744 = vmatprep.subr.mxu0 0.0
        %745 = vmatpush1.msra.mxu0 0.0
        %746 = vmatprep.subr.mxu0 0.0
        %747 = vmatpush1.msra.mxu0 0.0
        %748 = vmatprep.subr.mxu0 0.0
        %749 = vmatpush1.msra.mxu0 0.0
        %750 = vmatprep.subr.mxu0 0.0
        %751 = vmatpush1.msra.mxu0 0.0
        %752 = vmatprep.subr.mxu0 0.0
        %753 = vmatpush1.msra.mxu0 0.0
        %754 = vmatprep.subr.mxu0 0.0
        %755 = vmatpush1.msra.mxu0 0.0
        %756 = vmatprep.subr.mxu0 0.0
        %757 = vmatpush1.msra.mxu0 0.0
        %758 = vmatprep.subr.mxu0 0.0
        %759 = vmatpush1.msra.mxu0 0.0
        %760 = vmatprep.subr.mxu0 0.0
        %761 = vmatpush1.msra.mxu0 0.0
        %762 = vmatprep.subr.mxu0 0.0
        %763 = vmatpush1.msra.mxu0 0.0
        %764 = vmatprep.subr.mxu0 0.0
        %765 = vmatpush1.msra.mxu0 0.0
        %766 = vmatprep.subr.mxu0 0.0
        %767 = vmatpush1.msra.mxu0 0.0
        %768 = vmatprep.subr.mxu0 0.0
        %769 = vmatpush1.msra.mxu0 0.0
        %770 = vmatprep.subr.mxu0 0.0
        %771 = vmatpush1.msra.mxu0 0.0
        %772 = vmatprep.subr.mxu0 0.0
        %773 = vmatpush1.msra.mxu0 0.0
        %774 = vmatprep.subr.mxu0 0.0
        %775 = vmatpush1.msra.mxu0 0.0
        %776 = vmatprep.subr.mxu0 0.0
        %777 = vmatpush1.msra.mxu0 0.0
        %778 = vmatprep.subr.mxu0 0.0
        %779 = vmatpush1.msra.mxu0 0.0
        %780 = vmatprep.subr.mxu0 0.0
        %781 = vmatpush1.msra.mxu0 0.0
        %782 = vmatprep.subr.mxu0 0.0
        %783 = vmatpush1.msra.mxu0 0.0
        %784 = vmatprep.subr.mxu0 0.0
        %785 = vmatpush1.msra.mxu0 0.0
        %786 = vmatprep.subr.mxu0 0.0
        %787 = vmatpush1.msra.mxu0 0.0
        %788 = vmatprep.subr.mxu0 0.0
        %789 = vmatpush1.msra.mxu0 0.0
        %790 = vmatprep.subr.mxu0 0.0
        %791 = vmatpush1.msra.mxu0 0.0
        %792 = vmatprep.subr.mxu0 0.0
        %793 = vmatpush1.msra.mxu0 0.0
        %794 = vmatprep.subr.mxu0 0.0
        %795 = vmatpush1.msra.mxu0 0.0
        %796 = vmatprep.subr.mxu0 0.0
        %797 = vmatpush1.msra.mxu0 0.0
        %798 = vmatprep.subr.mxu0 0.0
        %799 = vmatpush1.msra.mxu0 0.0
        %800 = vmatprep.subr.mxu0 0.0
        %801 = vmatpush1.msra.mxu0 0.0
        %802 = vmatprep.subr.mxu0 0.0
        %803 = vmatpush1.msra.mxu0 0.0
        %804 = vmatprep.mubr.f32.mxu0 0.0
        %v805 = vand.u32 %v359, 4294901760
        %806 = vmatmul.mubr.f32.gmra.mrb[0].mxu0 %v805
        %v807 = vpop.f32.mrb[0].mxu0
        %v808 = vadd.f32 %v736, %v807
        %v809 = vpop.f32.mrb[0].mxu0
        %810 = vdwg.mxu0
        %v812 = vsel %vm357, %v355, 0
        %v815 = vsel %vm361, %v353, 0
        %817 = vmatprep.subr.mxu0 0.0
        %v818 = vand.u32 %v815, 4294901760
        %819 = vmatpush1.msra.mxu0 %v818
        %820 = vmatprep.subr.mxu0 0.0
        %821 = vmatpush1.msra.mxu0 0.0
        %822 = vmatprep.subr.mxu0 0.0
        %823 = vmatpush1.msra.mxu0 0.0
        %824 = vmatprep.subr.mxu0 0.0
        %825 = vmatpush1.msra.mxu0 0.0
        %826 = vmatprep.subr.mxu0 0.0
        %827 = vmatpush1.msra.mxu0 0.0
        %828 = vmatprep.subr.mxu0 0.0
        %829 = vmatpush1.msra.mxu0 0.0
        %830 = vmatprep.subr.mxu0 0.0
        %831 = vmatpush1.msra.mxu0 0.0
        %832 = vmatprep.subr.mxu0 0.0
        %833 = vmatpush1.msra.mxu0 0.0
        %834 = vmatprep.subr.mxu0 0.0
        %835 = vmatpush1.msra.mxu0 0.0
        %836 = vmatprep.subr.mxu0 0.0
        %837 = vmatpush1.msra.mxu0 0.0
        %838 = vmatprep.subr.mxu0 0.0
        %839 = vmatpush1.msra.mxu0 0.0
        %840 = vmatprep.subr.mxu0 0.0
        %841 = vmatpush1.msra.mxu0 0.0
        %842 = vmatprep.subr.mxu0 0.0
        %843 = vmatpush1.msra.mxu0 0.0
        %844 = vmatprep.subr.mxu0 0.0
        %845 = vmatpush1.msra.mxu0 0.0
        %846 = vmatprep.subr.mxu0 0.0
        %847 = vmatpush1.msra.mxu0 0.0
        %848 = vmatprep.subr.mxu0 0.0
        %849 = vmatpush1.msra.mxu0 0.0
        %850 = vmatprep.subr.mxu0 0.0
        %851 = vmatpush1.msra.mxu0 0.0
        %852 = vmatprep.subr.mxu0 0.0
        %853 = vmatpush1.msra.mxu0 0.0
        %854 = vmatprep.subr.mxu0 0.0
        %855 = vmatpush1.msra.mxu0 0.0
        %856 = vmatprep.subr.mxu0 0.0
        %857 = vmatpush1.msra.mxu0 0.0
        %858 = vmatprep.subr.mxu0 0.0
        %859 = vmatpush1.msra.mxu0 0.0
        %860 = vmatprep.subr.mxu0 0.0
        %861 = vmatpush1.msra.mxu0 0.0
        %862 = vmatprep.subr.mxu0 0.0
        %863 = vmatpush1.msra.mxu0 0.0
        %864 = vmatprep.subr.mxu0 0.0
        %865 = vmatpush1.msra.mxu0 0.0
        %866 = vmatprep.subr.mxu0 0.0
        %867 = vmatpush1.msra.mxu0 0.0
        %868 = vmatprep.subr.mxu0 0.0
        %869 = vmatpush1.msra.mxu0 0.0
        %870 = vmatprep.subr.mxu0 0.0
        %871 = vmatpush1.msra.mxu0 0.0
        %872 = vmatprep.subr.mxu0 0.0
        %873 = vmatpush1.msra.mxu0 0.0
        %874 = vmatprep.subr.mxu0 0.0
        %875 = vmatpush1.msra.mxu0 0.0
        %876 = vmatprep.subr.mxu0 0.0
        %877 = vmatpush1.msra.mxu0 0.0
        %878 = vmatprep.subr.mxu0 0.0
        %879 = vmatpush1.msra.mxu0 0.0
        %880 = vmatprep.subr.mxu0 0.0
        %881 = vmatpush1.msra.mxu0 0.0
        %882 = vmatprep.mubr.f32.mxu0 0.0
        %v883 = vand.u32 %v812, 4294901760
        %v884 = vsub.f32 %v812, %v883
        %v885 = vand.u32 %v884, 4294901760
        %v886 = vsub.f32 %v884, %v885
        %v887 = vand.u32 %v886, 4294901760
        %888 = vmatmul.mubr.f32.gmra.mrb[0].mxu0 %v887
        %v889 = vpop.f32.mrb[0].mxu0
        %v890 = vadd.f32 %v808, %v889
        %v891 = vpop.f32.mrb[0].mxu0
        %892 = vdwg.mxu0
        %893 = vmatprep.subr.mxu0 0.0
        %v894 = vand.u32 %v815, 4294901760
        %v895 = vsub.f32 %v815, %v894
        %v896 = vand.u32 %v895, 4294901760
        %v897 = vsub.f32 %v895, %v896
        %v898 = vand.u32 %v897, 4294901760
        %899 = vmatpush1.msra.mxu0 %v898
        %900 = vmatprep.subr.mxu0 0.0
        %901 = vmatpush1.msra.mxu0 0.0
        %902 = vmatprep.subr.mxu0 0.0
        %903 = vmatpush1.msra.mxu0 0.0
        %904 = vmatprep.subr.mxu0 0.0
        %905 = vmatpush1.msra.mxu0 0.0
        %906 = vmatprep.subr.mxu0 0.0
        %907 = vmatpush1.msra.mxu0 0.0
        %908 = vmatprep.subr.mxu0 0.0
        %909 = vmatpush1.msra.mxu0 0.0
        %910 = vmatprep.subr.mxu0 0.0
        %911 = vmatpush1.msra.mxu0 0.0
        %912 = vmatprep.subr.mxu0 0.0
        %913 = vmatpush1.msra.mxu0 0.0
        %914 = vmatprep.subr.mxu0 0.0
        %915 = vmatpush1.msra.mxu0 0.0
        %916 = vmatprep.subr.mxu0 0.0
        %917 = vmatpush1.msra.mxu0 0.0
        %918 = vmatprep.subr.mxu0 0.0
        %919 = vmatpush1.msra.mxu0 0.0
        %920 = vmatprep.subr.mxu0 0.0
        %921 = vmatpush1.msra.mxu0 0.0
        %922 = vmatprep.subr.mxu0 0.0
        %923 = vmatpush1.msra.mxu0 0.0
        %924 = vmatprep.subr.mxu0 0.0
        %925 = vmatpush1.msra.mxu0 0.0
        %926 = vmatprep.subr.mxu0 0.0
        %927 = vmatpush1.msra.mxu0 0.0
        %928 = vmatprep.subr.mxu0 0.0
        %929 = vmatpush1.msra.mxu0 0.0
        %930 = vmatprep.subr.mxu0 0.0
        %931 = vmatpush1.msra.mxu0 0.0
        %932 = vmatprep.subr.mxu0 0.0
        %933 = vmatpush1.msra.mxu0 0.0
        %934 = vmatprep.subr.mxu0 0.0
        %935 = vmatpush1.msra.mxu0 0.0
        %936 = vmatprep.subr.mxu0 0.0
        %937 = vmatpush1.msra.mxu0 0.0
        %938 = vmatprep.subr.mxu0 0.0
        %939 = vmatpush1.msra.mxu0 0.0
        %940 = vmatprep.subr.mxu0 0.0
        %941 = vmatpush1.msra.mxu0 0.0
        %942 = vmatprep.subr.mxu0 0.0
        %943 = vmatpush1.msra.mxu0 0.0
        %944 = vmatprep.subr.mxu0 0.0
        %945 = vmatpush1.msra.mxu0 0.0
        %946 = vmatprep.subr.mxu0 0.0
        %947 = vmatpush1.msra.mxu0 0.0
        %948 = vmatprep.subr.mxu0 0.0
        %949 = vmatpush1.msra.mxu0 0.0
        %950 = vmatprep.subr.mxu0 0.0
        %951 = vmatpush1.msra.mxu0 0.0
        %952 = vmatprep.subr.mxu0 0.0
        %953 = vmatpush1.msra.mxu0 0.0
        %954 = vmatprep.subr.mxu0 0.0
        %955 = vmatpush1.msra.mxu0 0.0
        %956 = vmatprep.subr.mxu0 0.0
        %957 = vmatpush1.msra.mxu0 0.0
        %958 = vmatprep.subr.mxu0 0.0
        %959 = vmatpush1.msra.mxu0 0.0
        %960 = vmatprep.subr.mxu0 0.0
        %961 = vmatpush1.msra.mxu0 0.0
        %962 = vmatprep.mubr.f32.mxu0 0.0
        %v963 = vand.u32 %v812, 4294901760
        %964 = vmatmul.mubr.f32.gmra.mrb[0].mxu0 %v963
        %v965 = vpop.f32.mrb[0].mxu0
        %v966 = vadd.f32 %v890, %v965
        %v967 = vpop.f32.mrb[0].mxu0
        %968 = vdwg.mxu0
        %969 = vmatprep.subr.mxu0 0.0
        %v970 = vand.u32 %v815, 4294901760
        %v971 = vsub.f32 %v815, %v970
        %972 = vmatpush1.msra.mxu0 %v971
        %973 = vmatprep.subr.mxu0 0.0
        %974 = vmatpush1.msra.mxu0 0.0
        %975 = vmatprep.subr.mxu0 0.0
        %976 = vmatpush1.msra.mxu0 0.0
        %977 = vmatprep.subr.mxu0 0.0
        %978 = vmatpush1.msra.mxu0 0.0
        %979 = vmatprep.subr.mxu0 0.0
        %980 = vmatpush1.msra.mxu0 0.0
        %981 = vmatprep.subr.mxu0 0.0
        %982 = vmatpush1.msra.mxu0 0.0
        %983 = vmatprep.subr.mxu0 0.0
        %984 = vmatpush1.msra.mxu0 0.0
        %985 = vmatprep.subr.mxu0 0.0
        %986 = vmatpush1.msra.mxu0 0.0
        %987 = vmatprep.subr.mxu0 0.0
        %988 = vmatpush1.msra.mxu0 0.0
        %989 = vmatprep.subr.mxu0 0.0
        %990 = vmatpush1.msra.mxu0 0.0
        %991 = vmatprep.subr.mxu0 0.0
        %992 = vmatpush1.msra.mxu0 0.0
        %993 = vmatprep.subr.mxu0 0.0
        %994 = vmatpush1.msra.mxu0 0.0
        %995 = vmatprep.subr.mxu0 0.0
        %996 = vmatpush1.msra.mxu0 0.0
        %997 = vmatprep.subr.mxu0 0.0
        %998 = vmatpush1.msra.mxu0 0.0
        %999 = vmatprep.subr.mxu0 0.0
        %1000 = vmatpush1.msra.mxu0 0.0
        %1001 = vmatprep.subr.mxu0 0.0
        %1002 = vmatpush1.msra.mxu0 0.0
        %1003 = vmatprep.subr.mxu0 0.0
        %1004 = vmatpush1.msra.mxu0 0.0
        %1005 = vmatprep.subr.mxu0 0.0
        %1006 = vmatpush1.msra.mxu0 0.0
        %1007 = vmatprep.subr.mxu0 0.0
        %1008 = vmatpush1.msra.mxu0 0.0
        %1009 = vmatprep.subr.mxu0 0.0
        %1010 = vmatpush1.msra.mxu0 0.0
        %1011 = vmatprep.subr.mxu0 0.0
        %1012 = vmatpush1.msra.mxu0 0.0
        %1013 = vmatprep.subr.mxu0 0.0
        %1014 = vmatpush1.msra.mxu0 0.0
        %1015 = vmatprep.subr.mxu0 0.0
        %1016 = vmatpush1.msra.mxu0 0.0
        %1017 = vmatprep.subr.mxu0 0.0
        %1018 = vmatpush1.msra.mxu0 0.0
        %1019 = vmatprep.subr.mxu0 0.0
        %1020 = vmatpush1.msra.mxu0 0.0
        %1021 = vmatprep.subr.mxu0 0.0
        %1022 = vmatpush1.msra.mxu0 0.0
        %1023 = vmatprep.subr.mxu0 0.0
        %1024 = vmatpush1.msra.mxu0 0.0
        %1025 = vmatprep.subr.mxu0 0.0
        %1026 = vmatpush1.msra.mxu0 0.0
        %1027 = vmatprep.subr.mxu0 0.0
        %1028 = vmatpush1.msra.mxu0 0.0
        %1029 = vmatprep.subr.mxu0 0.0
        %1030 = vmatpush1.msra.mxu0 0.0
        %1031 = vmatprep.subr.mxu0 0.0
        %1032 = vmatpush1.msra.mxu0 0.0
        %1033 = vmatprep.subr.mxu0 0.0
        %1034 = vmatpush1.msra.mxu0 0.0
        %1035 = vmatprep.mubr.f32.mxu0 0.0
        %v1036 = vand.u32 %v812, 4294901760
        %v1037 = vsub.f32 %v812, %v1036
        %1038 = vmatmul.mubr.f32.gmra.mrb[0].mxu0 %v1037
        %v1039 = vpop.f32.mrb[0].mxu0
        %v1040 = vadd.f32 %v966, %v1039
        %v1041 = vpop.f32.mrb[0].mxu0
        %1042 = vdwg.mxu0
        %1043 = vmatprep.subr.mxu0 0.0
        %v1044 = vand.u32 %v815, 4294901760
        %1045 = vmatpush1.msra.mxu0 %v1044
        %1046 = vmatprep.subr.mxu0 0.0
        %1047 = vmatpush1.msra.mxu0 0.0
        %1048 = vmatprep.subr.mxu0 0.0
        %1049 = vmatpush1.msra.mxu0 0.0
        %1050 = vmatprep.subr.mxu0 0.0
        %1051 = vmatpush1.msra.mxu0 0.0
        %1052 = vmatprep.subr.mxu0 0.0
        %1053 = vmatpush1.msra.mxu0 0.0
        %1054 = vmatprep.subr.mxu0 0.0
        %1055 = vmatpush1.msra.mxu0 0.0
        %1056 = vmatprep.subr.mxu0 0.0
        %1057 = vmatpush1.msra.mxu0 0.0
        %1058 = vmatprep.subr.mxu0 0.0
        %1059 = vmatpush1.msra.mxu0 0.0
        %1060 = vmatprep.subr.mxu0 0.0
        %1061 = vmatpush1.msra.mxu0 0.0
        %1062 = vmatprep.subr.mxu0 0.0
        %1063 = vmatpush1.msra.mxu0 0.0
        %1064 = vmatprep.subr.mxu0 0.0
        %1065 = vmatpush1.msra.mxu0 0.0
        %1066 = vmatprep.subr.mxu0 0.0
        %1067 = vmatpush1.msra.mxu0 0.0
        %1068 = vmatprep.subr.mxu0 0.0
        %1069 = vmatpush1.msra.mxu0 0.0
        %1070 = vmatprep.subr.mxu0 0.0
        %1071 = vmatpush1.msra.mxu0 0.0
        %1072 = vmatprep.subr.mxu0 0.0
        %1073 = vmatpush1.msra.mxu0 0.0
        %1074 = vmatprep.subr.mxu0 0.0
        %1075 = vmatpush1.msra.mxu0 0.0
        %1076 = vmatprep.subr.mxu0 0.0
        %1077 = vmatpush1.msra.mxu0 0.0
        %1078 = vmatprep.subr.mxu0 0.0
        %1079 = vmatpush1.msra.mxu0 0.0
        %1080 = vmatprep.subr.mxu0 0.0
        %1081 = vmatpush1.msra.mxu0 0.0
        %1082 = vmatprep.subr.mxu0 0.0
        %1083 = vmatpush1.msra.mxu0 0.0
        %1084 = vmatprep.subr.mxu0 0.0
        %1085 = vmatpush1.msra.mxu0 0.0
        %1086 = vmatprep.subr.mxu0 0.0
        %1087 = vmatpush1.msra.mxu0 0.0
        %1088 = vmatprep.subr.mxu0 0.0
        %1089 = vmatpush1.msra.mxu0 0.0
        %1090 = vmatprep.subr.mxu0 0.0
        %1091 = vmatpush1.msra.mxu0 0.0
        %1092 = vmatprep.subr.mxu0 0.0
        %1093 = vmatpush1.msra.mxu0 0.0
        %1094 = vmatprep.subr.mxu0 0.0
        %1095 = vmatpush1.msra.mxu0 0.0
        %1096 = vmatprep.subr.mxu0 0.0
        %1097 = vmatpush1.msra.mxu0 0.0
        %1098 = vmatprep.subr.mxu0 0.0
        %1099 = vmatpush1.msra.mxu0 0.0
        %1100 = vmatprep.subr.mxu0 0.0
        %1101 = vmatpush1.msra.mxu0 0.0
        %1102 = vmatprep.subr.mxu0 0.0
        %1103 = vmatpush1.msra.mxu0 0.0
        %1104 = vmatprep.subr.mxu0 0.0
        %1105 = vmatpush1.msra.mxu0 0.0
        %1106 = vmatprep.subr.mxu0 0.0
        %1107 = vmatpush1.msra.mxu0 0.0
        %1108 = vmatprep.mubr.f32.mxu0 0.0
        %v1109 = vand.u32 %v812, 4294901760
        %v1110 = vsub.f32 %v812, %v1109
        %v1111 = vand.u32 %v1110, 4294901760
        %1112 = vmatmul.mubr.f32.gmra.mrb[0].mxu0 %v1111
        %v1113 = vpop.f32.mrb[0].mxu0
        %v1114 = vadd.f32 %v1040, %v1113
        %v1115 = vpop.f32.mrb[0].mxu0
        %1116 = vdwg.mxu0
        %1117 = vmatprep.subr.mxu0 0.0
        %v1118 = vand.u32 %v815, 4294901760
        %v1119 = vsub.f32 %v815, %v1118
        %v1120 = vand.u32 %v1119, 4294901760
        %1121 = vmatpush1.msra.mxu0 %v1120
        %1122 = vmatprep.subr.mxu0 0.0
        %1123 = vmatpush1.msra.mxu0 0.0
        %1124 = vmatprep.subr.mxu0 0.0
        %1125 = vmatpush1.msra.mxu0 0.0
        %1126 = vmatprep.subr.mxu0 0.0
        %1127 = vmatpush1.msra.mxu0 0.0
        %1128 = vmatprep.subr.mxu0 0.0
        %1129 = vmatpush1.msra.mxu0 0.0
        %1130 = vmatprep.subr.mxu0 0.0
        %1131 = vmatpush1.msra.mxu0 0.0
        %1132 = vmatprep.subr.mxu0 0.0
        %1133 = vmatpush1.msra.mxu0 0.0
        %1134 = vmatprep.subr.mxu0 0.0
        %1135 = vmatpush1.msra.mxu0 0.0
        %1136 = vmatprep.subr.mxu0 0.0
        %1137 = vmatpush1.msra.mxu0 0.0
        %1138 = vmatprep.subr.mxu0 0.0
        %1139 = vmatpush1.msra.mxu0 0.0
        %1140 = vmatprep.subr.mxu0 0.0
        %1141 = vmatpush1.msra.mxu0 0.0
        %1142 = vmatprep.subr.mxu0 0.0
        %1143 = vmatpush1.msra.mxu0 0.0
        %1144 = vmatprep.subr.mxu0 0.0
        %1145 = vmatpush1.msra.mxu0 0.0
        %1146 = vmatprep.subr.mxu0 0.0
        %1147 = vmatpush1.msra.mxu0 0.0
        %1148 = vmatprep.subr.mxu0 0.0
        %1149 = vmatpush1.msra.mxu0 0.0
        %1150 = vmatprep.subr.mxu0 0.0
        %1151 = vmatpush1.msra.mxu0 0.0
        %1152 = vmatprep.subr.mxu0 0.0
        %1153 = vmatpush1.msra.mxu0 0.0
        %1154 = vmatprep.subr.mxu0 0.0
        %1155 = vmatpush1.msra.mxu0 0.0
        %1156 = vmatprep.subr.mxu0 0.0
        %1157 = vmatpush1.msra.mxu0 0.0
        %1158 = vmatprep.subr.mxu0 0.0
        %1159 = vmatpush1.msra.mxu0 0.0
        %1160 = vmatprep.subr.mxu0 0.0
        %1161 = vmatpush1.msra.mxu0 0.0
        %1162 = vmatprep.subr.mxu0 0.0
        %1163 = vmatpush1.msra.mxu0 0.0
        %1164 = vmatprep.subr.mxu0 0.0
        %1165 = vmatpush1.msra.mxu0 0.0
        %1166 = vmatprep.subr.mxu0 0.0
        %1167 = vmatpush1.msra.mxu0 0.0
        %1168 = vmatprep.subr.mxu0 0.0
        %1169 = vmatpush1.msra.mxu0 0.0
        %1170 = vmatprep.subr.mxu0 0.0
        %1171 = vmatpush1.msra.mxu0 0.0
        %1172 = vmatprep.subr.mxu0 0.0
        %1173 = vmatpush1.msra.mxu0 0.0
        %1174 = vmatprep.subr.mxu0 0.0
        %1175 = vmatpush1.msra.mxu0 0.0
        %1176 = vmatprep.subr.mxu0 0.0
        %1177 = vmatpush1.msra.mxu0 0.0
        %1178 = vmatprep.subr.mxu0 0.0
        %1179 = vmatpush1.msra.mxu0 0.0
        %1180 = vmatprep.subr.mxu0 0.0
        %1181 = vmatpush1.msra.mxu0 0.0
        %1182 = vmatprep.subr.mxu0 0.0
        %1183 = vmatpush1.msra.mxu0 0.0
        %1184 = vmatprep.mubr.f32.mxu0 0.0
        %v1185 = vand.u32 %v812, 4294901760
        %1186 = vmatmul.mubr.f32.gmra.mrb[0].mxu0 %v1185
        %v1187 = vpop.f32.mrb[0].mxu0
        %v1188 = vadd.f32 %v1114, %v1187
        %v1189 = vpop.f32.mrb[0].mxu0
        %1190 = vdwg.mxu0
        %1191 = vmatprep.subr.mxu0 0.0
        %v1192 = vand.u32 %v815, 4294901760
        %1193 = vmatpush1.msra.mxu0 %v1192
        %1194 = vmatprep.subr.mxu0 0.0
        %1195 = vmatpush1.msra.mxu0 0.0
        %1196 = vmatprep.subr.mxu0 0.0
        %1197 = vmatpush1.msra.mxu0 0.0
        %1198 = vmatprep.subr.mxu0 0.0
        %1199 = vmatpush1.msra.mxu0 0.0
        %1200 = vmatprep.subr.mxu0 0.0
        %1201 = vmatpush1.msra.mxu0 0.0
        %1202 = vmatprep.subr.mxu0 0.0
        %1203 = vmatpush1.msra.mxu0 0.0
        %1204 = vmatprep.subr.mxu0 0.0
        %1205 = vmatpush1.msra.mxu0 0.0
        %1206 = vmatprep.subr.mxu0 0.0
        %1207 = vmatpush1.msra.mxu0 0.0
        %1208 = vmatprep.subr.mxu0 0.0
        %1209 = vmatpush1.msra.mxu0 0.0
        %1210 = vmatprep.subr.mxu0 0.0
        %1211 = vmatpush1.msra.mxu0 0.0
        %1212 = vmatprep.subr.mxu0 0.0
        %1213 = vmatpush1.msra.mxu0 0.0
        %1214 = vmatprep.subr.mxu0 0.0
        %1215 = vmatpush1.msra.mxu0 0.0
        %1216 = vmatprep.subr.mxu0 0.0
        %1217 = vmatpush1.msra.mxu0 0.0
        %1218 = vmatprep.subr.mxu0 0.0
        %1219 = vmatpush1.msra.mxu0 0.0
        %1220 = vmatprep.subr.mxu0 0.0
        %1221 = vmatpush1.msra.mxu0 0.0
        %1222 = vmatprep.subr.mxu0 0.0
        %1223 = vmatpush1.msra.mxu0 0.0
        %1224 = vmatprep.subr.mxu0 0.0
        %1225 = vmatpush1.msra.mxu0 0.0
        %1226 = vmatprep.subr.mxu0 0.0
        %1227 = vmatpush1.msra.mxu0 0.0
        %1228 = vmatprep.subr.mxu0 0.0
        %1229 = vmatpush1.msra.mxu0 0.0
        %1230 = vmatprep.subr.mxu0 0.0
        %1231 = vmatpush1.msra.mxu0 0.0
        %1232 = vmatprep.subr.mxu0 0.0
        %1233 = vmatpush1.msra.mxu0 0.0
        %1234 = vmatprep.subr.mxu0 0.0
        %1235 = vmatpush1.msra.mxu0 0.0
        %1236 = vmatprep.subr.mxu0 0.0
        %1237 = vmatpush1.msra.mxu0 0.0
        %1238 = vmatprep.subr.mxu0 0.0
        %1239 = vmatpush1.msra.mxu0 0.0
        %1240 = vmatprep.subr.mxu0 0.0
        %1241 = vmatpush1.msra.mxu0 0.0
        %1242 = vmatprep.subr.mxu0 0.0
        %1243 = vmatpush1.msra.mxu0 0.0
        %1244 = vmatprep.subr.mxu0 0.0
        %1245 = vmatpush1.msra.mxu0 0.0
        %1246 = vmatprep.subr.mxu0 0.0
        %1247 = vmatpush1.msra.mxu0 0.0
        %1248 = vmatprep.subr.mxu0 0.0
        %1249 = vmatpush1.msra.mxu0 0.0
        %1250 = vmatprep.subr.mxu0 0.0
        %1251 = vmatpush1.msra.mxu0 0.0
        %1252 = vmatprep.subr.mxu0 0.0
        %1253 = vmatpush1.msra.mxu0 0.0
        %1254 = vmatprep.subr.mxu0 0.0
        %1255 = vmatpush1.msra.mxu0 0.0
        %1256 = vmatprep.mubr.f32.mxu0 0.0
        %v1257 = vand.u32 %v812, 4294901760
        %1258 = vmatmul.mubr.f32.gmra.mrb[0].mxu0 %v1257
        %v1259 = vpop.f32.mrb[0].mxu0
        %v1260 = vadd.f32 %v1188, %v1259
        %v1261 = vpop.f32.mrb[0].mxu0
        %1262 = vdwg.mxu0
        %v1263 = vld [vmem:[%s5] sm:$0xf]
        %1265 = vset.pattern.permute.xlu0 0
        %1266 = vperm.xlu0 %1265, %v1263
        %v1267 = vpop.permute.xlu0 %1266
        %v1269 = vadd.f32 %v1260, %v1267
        %v1270 = vmax.f32 %v1269, 0.0
        %v1271 = vld [vmem:[%s4] sm:$0xf]
        %v1272 = vld [vmem:[%s6] sm:$0xf]
        %1274 = vset.pattern.permute.xlu0 0
        %1275 = vperm.xlu0 %1274, %v1272
        %v1276 = vpop.permute.xlu0 %1275
        %v1279 = vsel %vm357, %v1271, 0
        %v1282 = vsel %vm361, %v1270, 0
        %1284 = vmatprep.subr.mxu0 0.0
        %v1285 = vand.u32 %v1282, 4294901760
        %1286 = vmatpush1.msra.mxu0 %v1285
        %1287 = vmatprep.subr.mxu0 0.0
        %1288 = vmatpush1.msra.mxu0 0.0
        %1289 = vmatprep.subr.mxu0 0.0
        %1290 = vmatpush1.msra.mxu0 0.0
        %1291 = vmatprep.subr.mxu0 0.0
        %1292 = vmatpush1.msra.mxu0 0.0
        %1293 = vmatprep.subr.mxu0 0.0
        %1294 = vmatpush1.msra.mxu0 0.0
        %1295 = vmatprep.subr.mxu0 0.0
        %1296 = vmatpush1.msra.mxu0 0.0
        %1297 = vmatprep.subr.mxu0 0.0
        %1298 = vmatpush1.msra.mxu0 0.0
        %1299 = vmatprep.subr.mxu0 0.0
        %1300 = vmatpush1.msra.mxu0 0.0
        %1301 = vmatprep.subr.mxu0 0.0
        %1302 = vmatpush1.msra.mxu0 0.0
        %1303 = vmatprep.subr.mxu0 0.0
        %1304 = vmatpush1.msra.mxu0 0.0
        %1305 = vmatprep.subr.mxu0 0.0
        %1306 = vmatpush1.msra.mxu0 0.0
        %1307 = vmatprep.subr.mxu0 0.0
        %1308 = vmatpush1.msra.mxu0 0.0
        %1309 = vmatprep.subr.mxu0 0.0
        %1310 = vmatpush1.msra.mxu0 0.0
        %1311 = vmatprep.subr.mxu0 0.0
        %1312 = vmatpush1.msra.mxu0 0.0
        %1313 = vmatprep.subr.mxu0 0.0
        %1314 = vmatpush1.msra.mxu0 0.0
        %1315 = vmatprep.subr.mxu0 0.0
        %1316 = vmatpush1.msra.mxu0 0.0
        %1317 = vmatprep.subr.mxu0 0.0
        %1318 = vmatpush1.msra.mxu0 0.0
        %1319 = vmatprep.subr.mxu0 0.0
        %1320 = vmatpush1.msra.mxu0 0.0
        %1321 = vmatprep.subr.mxu0 0.0
        %1322 = vmatpush1.msra.mxu0 0.0
        %1323 = vmatprep.subr.mxu0 0.0
        %1324 = vmatpush1.msra.mxu0 0.0
        %1325 = vmatprep.subr.mxu0 0.0
        %1326 = vmatpush1.msra.mxu0 0.0
        %1327 = vmatprep.subr.mxu0 0.0
        %1328 = vmatpush1.msra.mxu0 0.0
        %1329 = vmatprep.subr.mxu0 0.0
        %1330 = vmatpush1.msra.mxu0 0.0
        %1331 = vmatprep.subr.mxu0 0.0
        %1332 = vmatpush1.msra.mxu0 0.0
        %1333 = vmatprep.subr.mxu0 0.0
        %1334 = vmatpush1.msra.mxu0 0.0
        %1335 = vmatprep.subr.mxu0 0.0
        %1336 = vmatpush1.msra.mxu0 0.0
        %1337 = vmatprep.subr.mxu0 0.0
        %1338 = vmatpush1.msra.mxu0 0.0
        %1339 = vmatprep.subr.mxu0 0.0
        %1340 = vmatpush1.msra.mxu0 0.0
        %1341 = vmatprep.subr.mxu0 0.0
        %1342 = vmatpush1.msra.mxu0 0.0
        %1343 = vmatprep.subr.mxu0 0.0
        %1344 = vmatpush1.msra.mxu0 0.0
        %1345 = vmatprep.subr.mxu0 0.0
        %1346 = vmatpush1.msra.mxu0 0.0
        %1347 = vmatprep.subr.mxu0 0.0
        %1348 = vmatpush1.msra.mxu0 0.0
        %1349 = vmatprep.mubr.f32.mxu0 0.0
        %v1350 = vand.u32 %v1279, 4294901760
        %v1351 = vsub.f32 %v1279, %v1350
        %v1352 = vand.u32 %v1351, 4294901760
        %v1353 = vsub.f32 %v1351, %v1352
        %v1354 = vand.u32 %v1353, 4294901760
        %1355 = vmatmul.mubr.f32.gmra.mrb[0].mxu0 %v1354
        %v1356 = vpop.f32.mrb[0].mxu0
        %v1357 = vadd.f32 %v1276, %v1356
        %v1358 = vpop.f32.mrb[0].mxu0
        %1359 = vdwg.mxu0
        %1360 = vmatprep.subr.mxu0 0.0
        %v1361 = vand.u32 %v1282, 4294901760
        %v1362 = vsub.f32 %v1282, %v1361
        %v1363 = vand.u32 %v1362, 4294901760
        %v1364 = vsub.f32 %v1362, %v1363
        %v1365 = vand.u32 %v1364, 4294901760
        %1366 = vmatpush1.msra.mxu0 %v1365
        %1367 = vmatprep.subr.mxu0 0.0
        %1368 = vmatpush1.msra.mxu0 0.0
        %1369 = vmatprep.subr.mxu0 0.0
        %1370 = vmatpush1.msra.mxu0 0.0
        %1371 = vmatprep.subr.mxu0 0.0
        %1372 = vmatpush1.msra.mxu0 0.0
        %1373 = vmatprep.subr.mxu0 0.0
        %1374 = vmatpush1.msra.mxu0 0.0
        %1375 = vmatprep.subr.mxu0 0.0
        %1376 = vmatpush1.msra.mxu0 0.0
        %1377 = vmatprep.subr.mxu0 0.0
        %1378 = vmatpush1.msra.mxu0 0.0
        %1379 = vmatprep.subr.mxu0 0.0
        %1380 = vmatpush1.msra.mxu0 0.0
        %1381 = vmatprep.subr.mxu0 0.0
        %1382 = vmatpush1.msra.mxu0 0.0
        %1383 = vmatprep.subr.mxu0 0.0
        %1384 = vmatpush1.msra.mxu0 0.0
        %1385 = vmatprep.subr.mxu0 0.0
        %1386 = vmatpush1.msra.mxu0 0.0
        %1387 = vmatprep.subr.mxu0 0.0
        %1388 = vmatpush1.msra.mxu0 0.0
        %1389 = vmatprep.subr.mxu0 0.0
        %1390 = vmatpush1.msra.mxu0 0.0
        %1391 = vmatprep.subr.mxu0 0.0
        %1392 = vmatpush1.msra.mxu0 0.0
        %1393 = vmatprep.subr.mxu0 0.0
        %1394 = vmatpush1.msra.mxu0 0.0
        %1395 = vmatprep.subr.mxu0 0.0
        %1396 = vmatpush1.msra.mxu0 0.0
        %1397 = vmatprep.subr.mxu0 0.0
        %1398 = vmatpush1.msra.mxu0 0.0
        %1399 = vmatprep.subr.mxu0 0.0
        %1400 = vmatpush1.msra.mxu0 0.0
        %1401 = vmatprep.subr.mxu0 0.0
        %1402 = vmatpush1.msra.mxu0 0.0
        %1403 = vmatprep.subr.mxu0 0.0
        %1404 = vmatpush1.msra.mxu0 0.0
        %1405 = vmatprep.subr.mxu0 0.0
        %1406 = vmatpush1.msra.mxu0 0.0
        %1407 = vmatprep.subr.mxu0 0.0
        %1408 = vmatpush1.msra.mxu0 0.0
        %1409 = vmatprep.subr.mxu0 0.0
        %1410 = vmatpush1.msra.mxu0 0.0
        %1411 = vmatprep.subr.mxu0 0.0
        %1412 = vmatpush1.msra.mxu0 0.0
        %1413 = vmatprep.subr.mxu0 0.0
        %1414 = vmatpush1.msra.mxu0 0.0
        %1415 = vmatprep.subr.mxu0 0.0
        %1416 = vmatpush1.msra.mxu0 0.0
        %1417 = vmatprep.subr.mxu0 0.0
        %1418 = vmatpush1.msra.mxu0 0.0
        %1419 = vmatprep.subr.mxu0 0.0
        %1420 = vmatpush1.msra.mxu0 0.0
        %1421 = vmatprep.subr.mxu0 0.0
        %1422 = vmatpush1.msra.mxu0 0.0
        %1423 = vmatprep.subr.mxu0 0.0
        %1424 = vmatpush1.msra.mxu0 0.0
        %1425 = vmatprep.subr.mxu0 0.0
        %1426 = vmatpush1.msra.mxu0 0.0
        %1427 = vmatprep.subr.mxu0 0.0
        %1428 = vmatpush1.msra.mxu0 0.0
        %1429 = vmatprep.mubr.f32.mxu0 0.0
        %v1430 = vand.u32 %v1279, 4294901760
        %1431 = vmatmul.mubr.f32.gmra.mrb[0].mxu0 %v1430
        %v1432 = vpop.f32.mrb[0].mxu0
        %v1433 = vadd.f32 %v1357, %v1432
        %v1434 = vpop.f32.mrb[0].mxu0
        %1435 = vdwg.mxu0
        %1436 = vmatprep.subr.mxu0 0.0
        %v1437 = vand.u32 %v1282, 4294901760
        %v1438 = vsub.f32 %v1282, %v1437
        %1439 = vmatpush1.msra.mxu0 %v1438
        %1440 = vmatprep.subr.mxu0 0.0
        %1441 = vmatpush1.msra.mxu0 0.0
        %1442 = vmatprep.subr.mxu0 0.0
        %1443 = vmatpush1.msra.mxu0 0.0
        %1444 = vmatprep.subr.mxu0 0.0
        %1445 = vmatpush1.msra.mxu0 0.0
        %1446 = vmatprep.subr.mxu0 0.0
        %1447 = vmatpush1.msra.mxu0 0.0
        %1448 = vmatprep.subr.mxu0 0.0
        %1449 = vmatpush1.msra.mxu0 0.0
        %1450 = vmatprep.subr.mxu0 0.0
        %1451 = vmatpush1.msra.mxu0 0.0
        %1452 = vmatprep.subr.mxu0 0.0
        %1453 = vmatpush1.msra.mxu0 0.0
        %1454 = vmatprep.subr.mxu0 0.0
        %1455 = vmatpush1.msra.mxu0 0.0
        %1456 = vmatprep.subr.mxu0 0.0
        %1457 = vmatpush1.msra.mxu0 0.0
        %1458 = vmatprep.subr.mxu0 0.0
        %1459 = vmatpush1.msra.mxu0 0.0
        %1460 = vmatprep.subr.mxu0 0.0
        %1461 = vmatpush1.msra.mxu0 0.0
        %1462 = vmatprep.subr.mxu0 0.0
        %1463 = vmatpush1.msra.mxu0 0.0
        %1464 = vmatprep.subr.mxu0 0.0
        %1465 = vmatpush1.msra.mxu0 0.0
        %1466 = vmatprep.subr.mxu0 0.0
        %1467 = vmatpush1.msra.mxu0 0.0
        %1468 = vmatprep.subr.mxu0 0.0
        %1469 = vmatpush1.msra.mxu0 0.0
        %1470 = vmatprep.subr.mxu0 0.0
        %1471 = vmatpush1.msra.mxu0 0.0
        %1472 = vmatprep.subr.mxu0 0.0
        %1473 = vmatpush1.msra.mxu0 0.0
        %1474 = vmatprep.subr.mxu0 0.0
        %1475 = vmatpush1.msra.mxu0 0.0
        %1476 = vmatprep.subr.mxu0 0.0
        %1477 = vmatpush1.msra.mxu0 0.0
        %1478 = vmatprep.subr.mxu0 0.0
        %1479 = vmatpush1.msra.mxu0 0.0
        %1480 = vmatprep.subr.mxu0 0.0
        %1481 = vmatpush1.msra.mxu0 0.0
        %1482 = vmatprep.subr.mxu0 0.0
        %1483 = vmatpush1.msra.mxu0 0.0
        %1484 = vmatprep.subr.mxu0 0.0
        %1485 = vmatpush1.msra.mxu0 0.0
        %1486 = vmatprep.subr.mxu0 0.0
        %1487 = vmatpush1.msra.mxu0 0.0
        %1488 = vmatprep.subr.mxu0 0.0
        %1489 = vmatpush1.msra.mxu0 0.0
        %1490 = vmatprep.subr.mxu0 0.0
        %1491 = vmatpush1.msra.mxu0 0.0
        %1492 = vmatprep.subr.mxu0 0.0
        %1493 = vmatpush1.msra.mxu0 0.0
        %1494 = vmatprep.subr.mxu0 0.0
        %1495 = vmatpush1.msra.mxu0 0.0
        %1496 = vmatprep.subr.mxu0 0.0
        %1497 = vmatpush1.msra.mxu0 0.0
        %1498 = vmatprep.subr.mxu0 0.0
        %1499 = vmatpush1.msra.mxu0 0.0
        %1500 = vmatprep.subr.mxu0 0.0
        %1501 = vmatpush1.msra.mxu0 0.0
        %1502 = vmatprep.mubr.f32.mxu0 0.0
        %v1503 = vand.u32 %v1279, 4294901760
        %v1504 = vsub.f32 %v1279, %v1503
        %1505 = vmatmul.mubr.f32.gmra.mrb[0].mxu0 %v1504
        %v1506 = vpop.f32.mrb[0].mxu0
        %v1507 = vadd.f32 %v1433, %v1506
        %v1508 = vpop.f32.mrb[0].mxu0
        %1509 = vdwg.mxu0
        %1510 = vmatprep.subr.mxu0 0.0
        %v1511 = vand.u32 %v1282, 4294901760
        %1512 = vmatpush1.msra.mxu0 %v1511
        %1513 = vmatprep.subr.mxu0 0.0
        %1514 = vmatpush1.msra.mxu0 0.0
        %1515 = vmatprep.subr.mxu0 0.0
        %1516 = vmatpush1.msra.mxu0 0.0
        %1517 = vmatprep.subr.mxu0 0.0
        %1518 = vmatpush1.msra.mxu0 0.0
        %1519 = vmatprep.subr.mxu0 0.0
        %1520 = vmatpush1.msra.mxu0 0.0
        %1521 = vmatprep.subr.mxu0 0.0
        %1522 = vmatpush1.msra.mxu0 0.0
        %1523 = vmatprep.subr.mxu0 0.0
        %1524 = vmatpush1.msra.mxu0 0.0
        %1525 = vmatprep.subr.mxu0 0.0
        %1526 = vmatpush1.msra.mxu0 0.0
        %1527 = vmatprep.subr.mxu0 0.0
        %1528 = vmatpush1.msra.mxu0 0.0
        %1529 = vmatprep.subr.mxu0 0.0
        %1530 = vmatpush1.msra.mxu0 0.0
        %1531 = vmatprep.subr.mxu0 0.0
        %1532 = vmatpush1.msra.mxu0 0.0
        %1533 = vmatprep.subr.mxu0 0.0
        %1534 = vmatpush1.msra.mxu0 0.0
        %1535 = vmatprep.subr.mxu0 0.0
        %1536 = vmatpush1.msra.mxu0 0.0
        %1537 = vmatprep.subr.mxu0 0.0
        %1538 = vmatpush1.msra.mxu0 0.0
        %1539 = vmatprep.subr.mxu0 0.0
        %1540 = vmatpush1.msra.mxu0 0.0
        %1541 = vmatprep.subr.mxu0 0.0
        %1542 = vmatpush1.msra.mxu0 0.0
        %1543 = vmatprep.subr.mxu0 0.0
        %1544 = vmatpush1.msra.mxu0 0.0
        %1545 = vmatprep.subr.mxu0 0.0
        %1546 = vmatpush1.msra.mxu0 0.0
        %1547 = vmatprep.subr.mxu0 0.0
        %1548 = vmatpush1.msra.mxu0 0.0
        %1549 = vmatprep.subr.mxu0 0.0
        %1550 = vmatpush1.msra.mxu0 0.0
        %1551 = vmatprep.subr.mxu0 0.0
        %1552 = vmatpush1.msra.mxu0 0.0
        %1553 = vmatprep.subr.mxu0 0.0
        %1554 = vmatpush1.msra.mxu0 0.0
        %1555 = vmatprep.subr.mxu0 0.0
        %1556 = vmatpush1.msra.mxu0 0.0
        %1557 = vmatprep.subr.mxu0 0.0
        %1558 = vmatpush1.msra.mxu0 0.0
        %1559 = vmatprep.subr.mxu0 0.0
        %1560 = vmatpush1.msra.mxu0 0.0
        %1561 = vmatprep.subr.mxu0 0.0
        %1562 = vmatpush1.msra.mxu0 0.0
        %1563 = vmatprep.subr.mxu0 0.0
        %1564 = vmatpush1.msra.mxu0 0.0
        %1565 = vmatprep.subr.mxu0 0.0
        %1566 = vmatpush1.msra.mxu0 0.0
        %1567 = vmatprep.subr.mxu0 0.0
        %1568 = vmatpush1.msra.mxu0 0.0
        %1569 = vmatprep.subr.mxu0 0.0
        %1570 = vmatpush1.msra.mxu0 0.0
        %1571 = vmatprep.subr.mxu0 0.0
        %1572 = vmatpush1.msra.mxu0 0.0
        %1573 = vmatprep.subr.mxu0 0.0
        %1574 = vmatpush1.msra.mxu0 0.0
        %1575 = vmatprep.mubr.f32.mxu0 0.0
        %v1576 = vand.u32 %v1279, 4294901760
        %v1577 = vsub.f32 %v1279, %v1576
        %v1578 = vand.u32 %v1577, 4294901760
        %1579 = vmatmul.mubr.f32.gmra.mrb[0].mxu0 %v1578
        %v1580 = vpop.f32.mrb[0].mxu0
        %v1581 = vadd.f32 %v1507, %v1580
        %v1582 = vpop.f32.mrb[0].mxu0
        %1583 = vdwg.mxu0
        %1584 = vmatprep.subr.mxu0 0.0
        %v1585 = vand.u32 %v1282, 4294901760
        %v1586 = vsub.f32 %v1282, %v1585
        %v1587 = vand.u32 %v1586, 4294901760
        %1588 = vmatpush1.msra.mxu0 %v1587
        %1589 = vmatprep.subr.mxu0 0.0
        %1590 = vmatpush1.msra.mxu0 0.0
        %1591 = vmatprep.subr.mxu0 0.0
        %1592 = vmatpush1.msra.mxu0 0.0
        %1593 = vmatprep.subr.mxu0 0.0
        %1594 = vmatpush1.msra.mxu0 0.0
        %1595 = vmatprep.subr.mxu0 0.0
        %1596 = vmatpush1.msra.mxu0 0.0
        %1597 = vmatprep.subr.mxu0 0.0
        %1598 = vmatpush1.msra.mxu0 0.0
        %1599 = vmatprep.subr.mxu0 0.0
        %1600 = vmatpush1.msra.mxu0 0.0
        %1601 = vmatprep.subr.mxu0 0.0
        %1602 = vmatpush1.msra.mxu0 0.0
        %1603 = vmatprep.subr.mxu0 0.0
        %1604 = vmatpush1.msra.mxu0 0.0
        %1605 = vmatprep.subr.mxu0 0.0
        %1606 = vmatpush1.msra.mxu0 0.0
        %1607 = vmatprep.subr.mxu0 0.0
        %1608 = vmatpush1.msra.mxu0 0.0
        %1609 = vmatprep.subr.mxu0 0.0
        %1610 = vmatpush1.msra.mxu0 0.0
        %1611 = vmatprep.subr.mxu0 0.0
        %1612 = vmatpush1.msra.mxu0 0.0
        %1613 = vmatprep.subr.mxu0 0.0
        %1614 = vmatpush1.msra.mxu0 0.0
        %1615 = vmatprep.subr.mxu0 0.0
        %1616 = vmatpush1.msra.mxu0 0.0
        %1617 = vmatprep.subr.mxu0 0.0
        %1618 = vmatpush1.msra.mxu0 0.0
        %1619 = vmatprep.subr.mxu0 0.0
        %1620 = vmatpush1.msra.mxu0 0.0
        %1621 = vmatprep.subr.mxu0 0.0
        %1622 = vmatpush1.msra.mxu0 0.0
        %1623 = vmatprep.subr.mxu0 0.0
        %1624 = vmatpush1.msra.mxu0 0.0
        %1625 = vmatprep.subr.mxu0 0.0
        %1626 = vmatpush1.msra.mxu0 0.0
        %1627 = vmatprep.subr.mxu0 0.0
        %1628 = vmatpush1.msra.mxu0 0.0
        %1629 = vmatprep.subr.mxu0 0.0
        %1630 = vmatpush1.msra.mxu0 0.0
        %1631 = vmatprep.subr.mxu0 0.0
        %1632 = vmatpush1.msra.mxu0 0.0
        %1633 = vmatprep.subr.mxu0 0.0
        %1634 = vmatpush1.msra.mxu0 0.0
        %1635 = vmatprep.subr.mxu0 0.0
        %1636 = vmatpush1.msra.mxu0 0.0
        %1637 = vmatprep.subr.mxu0 0.0
        %1638 = vmatpush1.msra.mxu0 0.0
        %1639 = vmatprep.subr.mxu0 0.0
        %1640 = vmatpush1.msra.mxu0 0.0
        %1641 = vmatprep.subr.mxu0 0.0
        %1642 = vmatpush1.msra.mxu0 0.0
        %1643 = vmatprep.subr.mxu0 0.0
        %1644 = vmatpush1.msra.mxu0 0.0
        %1645 = vmatprep.subr.mxu0 0.0
        %1646 = vmatpush1.msra.mxu0 0.0
        %1647 = vmatprep.subr.mxu0 0.0
        %1648 = vmatpush1.msra.mxu0 0.0
        %1649 = vmatprep.subr.mxu0 0.0
        %1650 = vmatpush1.msra.mxu0 0.0
        %1651 = vmatprep.mubr.f32.mxu0 0.0
        %v1652 = vand.u32 %v1279, 4294901760
        %1653 = vmatmul.mubr.f32.gmra.mrb[0].mxu0 %v1652
        %v1654 = vpop.f32.mrb[0].mxu0
        %v1655 = vadd.f32 %v1581, %v1654
        %v1656 = vpop.f32.mrb[0].mxu0
        %1657 = vdwg.mxu0
        %1658 = vmatprep.subr.mxu0 0.0
        %v1659 = vand.u32 %v1282, 4294901760
        %1660 = vmatpush1.msra.mxu0 %v1659
        %1661 = vmatprep.subr.mxu0 0.0
        %1662 = vmatpush1.msra.mxu0 0.0
        %1663 = vmatprep.subr.mxu0 0.0
        %1664 = vmatpush1.msra.mxu0 0.0
        %1665 = vmatprep.subr.mxu0 0.0
        %1666 = vmatpush1.msra.mxu0 0.0
        %1667 = vmatprep.subr.mxu0 0.0
        %1668 = vmatpush1.msra.mxu0 0.0
        %1669 = vmatprep.subr.mxu0 0.0
        %1670 = vmatpush1.msra.mxu0 0.0
        %1671 = vmatprep.subr.mxu0 0.0
        %1672 = vmatpush1.msra.mxu0 0.0
        %1673 = vmatprep.subr.mxu0 0.0
        %1674 = vmatpush1.msra.mxu0 0.0
        %1675 = vmatprep.subr.mxu0 0.0
        %1676 = vmatpush1.msra.mxu0 0.0
        %1677 = vmatprep.subr.mxu0 0.0
        %1678 = vmatpush1.msra.mxu0 0.0
        %1679 = vmatprep.subr.mxu0 0.0
        %1680 = vmatpush1.msra.mxu0 0.0
        %1681 = vmatprep.subr.mxu0 0.0
        %1682 = vmatpush1.msra.mxu0 0.0
        %1683 = vmatprep.subr.mxu0 0.0
        %1684 = vmatpush1.msra.mxu0 0.0
        %1685 = vmatprep.subr.mxu0 0.0
        %1686 = vmatpush1.msra.mxu0 0.0
        %1687 = vmatprep.subr.mxu0 0.0
        %1688 = vmatpush1.msra.mxu0 0.0
        %1689 = vmatprep.subr.mxu0 0.0
        %1690 = vmatpush1.msra.mxu0 0.0
        %1691 = vmatprep.subr.mxu0 0.0
        %1692 = vmatpush1.msra.mxu0 0.0
        %1693 = vmatprep.subr.mxu0 0.0
        %1694 = vmatpush1.msra.mxu0 0.0
        %1695 = vmatprep.subr.mxu0 0.0
        %1696 = vmatpush1.msra.mxu0 0.0
        %1697 = vmatprep.subr.mxu0 0.0
        %1698 = vmatpush1.msra.mxu0 0.0
        %1699 = vmatprep.subr.mxu0 0.0
        %1700 = vmatpush1.msra.mxu0 0.0
        %1701 = vmatprep.subr.mxu0 0.0
        %1702 = vmatpush1.msra.mxu0 0.0
        %1703 = vmatprep.subr.mxu0 0.0
        %1704 = vmatpush1.msra.mxu0 0.0
        %1705 = vmatprep.subr.mxu0 0.0
        %1706 = vmatpush1.msra.mxu0 0.0
        %1707 = vmatprep.subr.mxu0 0.0
        %1708 = vmatpush1.msra.mxu0 0.0
        %1709 = vmatprep.subr.mxu0 0.0
        %1710 = vmatpush1.msra.mxu0 0.0
        %1711 = vmatprep.subr.mxu0 0.0
        %1712 = vmatpush1.msra.mxu0 0.0
        %1713 = vmatprep.subr.mxu0 0.0
        %1714 = vmatpush1.msra.mxu0 0.0
        %1715 = vmatprep.subr.mxu0 0.0
        %1716 = vmatpush1.msra.mxu0 0.0
        %1717 = vmatprep.subr.mxu0 0.0
        %1718 = vmatpush1.msra.mxu0 0.0
        %1719 = vmatprep.subr.mxu0 0.0
        %1720 = vmatpush1.msra.mxu0 0.0
        %1721 = vmatprep.subr.mxu0 0.0
        %1722 = vmatpush1.msra.mxu0 0.0
        %1723 = vmatprep.mubr.f32.mxu0 0.0
        %v1724 = vand.u32 %v1279, 4294901760
        %1725 = vmatmul.mubr.f32.gmra.mrb[0].mxu0 %v1724
        %v1726 = vpop.f32.mrb[0].mxu0
        %v1727 = vadd.f32 %v1655, %v1726
        %v1728 = vpop.f32.mrb[0].mxu0
        %1729 = vdwg.mxu0
        %v1730 = vmul.f32 %v1727, 0.5
        %v1731 = vtanh.pop %v1730
        %v1732 = vmul.f32 %v1731, 0.5
        %v1733 = vadd.f32 %v1732, 1.5
        %v1734 = vmul.f32 %v353, %v1733
        %1735 = vst [vmem:[%s352] sm:$0xf] %v1734
        %s1736 = sand.u32 %s210, 1
        %s1737 = scalar_lea.sflag [#allocation4], %s1736
        %s1738 = sand.u32 %s210, 1
        %s1739 = smul.addr %s1738, 4
        %s1740 = scalar_lea.vmem [#allocation7], %s1739
        // Predicated region
        $region57: #{tpu_custom_call.1} parent=47 // pred_check
          %p1741 = pneg %p220
        $region58: #{tpu_custom_call.1} parent=47 // pred_check_branch
          %1743 = sbr.rel (%p1741) target = $region60
        $region59: #{tpu_custom_call.1} parent=47 // pred_region
          %s1745 = ssub.s32 64, 64
          %1746 = vsyncadd %s1737, %s1745
          %s1747 = smul.addr %s31, 2
          %s1748 = sadd.s32 %s32, %s1747
          %s1749 = smul.addr %s1748, 64
          %s1750 = scalar_lea.hbm %s7, %s1749
          %s1752 = sshll.u32 %s1740, 4
          %s1753 = int_to_ptr.vmem [resolvable:$true] %s1752
          %1755 = dma.vmem_to_hbm [thread:$0]  %s1753, 64, %s1750, %s1737
        $region60: #{tpu_custom_call.1} parent=47 // pred_fallthru
          _
      $region48: #{tpu_custom_call.1} parent=5 // pred_fallthru
        _
      %p1756 = scmp.le.s32.totalorder 2, %s22
      // Predicated region
      $region61: #{tpu_custom_call.1} parent=5 // pred_check
        %p1757 = pneg %p1756
      $region62: #{tpu_custom_call.1} parent=5 // pred_check_branch
        %1759 = sbr.rel (%p1757) target = $region64
      $region63: #{tpu_custom_call.1} parent=5 // pred_region
        %s1760 = ssub.s32 %s22, 2
        // Predicated region
        $region65: #{tpu_custom_call.1} parent=63 // pred_check
          %p1761 = pneg %p226
        $region66: #{tpu_custom_call.1} parent=63 // pred_check_branch
          %1763 = sbr.rel (%p1761) target = $region68
        $region67: #{tpu_custom_call.1} parent=63 // pred_region
          %s1764 = sand.u32 %s211, 1
          %s1765 = scalar_lea.sflag [#allocation4], %s1764
          %s1766 = sand.u32 %s211, 1
          %s1767 = smul.addr %s1766, 4
          %s1768 = scalar_lea.vmem [#allocation7], %s1767
          %1769 = dma.done %s1765, 64
        $region68: #{tpu_custom_call.1} parent=63 // pred_fallthru
          _
      $region64: #{tpu_custom_call.1} parent=5 // pred_fallthru
        _
    $region6: #{tpu_custom_call.1} parent=1 // loop_footer
      %s26 = sadd.s32 1, %s22
    $region7: #{tpu_custom_call.1} parent=1 // loop_footer_branch
      %21 = sbr.rel target = $region3
    $region8: #{tpu_custom_call.1} parent=1 // loop_exit
      _
    %1770 = vsyncpa [#allocation3], 1
    %s1771 = scalar_lea.sflag [#allocation3], 1
    %1772 = vsyncpa %s1771, 1
    %1773 = vsyncpa [#allocation6], 1
    %s1774 = scalar_lea.sflag [#allocation6], 1
    %1775 = vsyncpa %s1774, 1
    %1776 = vsyncpa [#allocation4], 1
    %s1777 = scalar_lea.sflag [#allocation4], 1
    %1778 = vsyncpa %s1777, 1

</llo_original>
